<compile_context>
chip_gen: v6e
topology: v6e:2x2x1
jax: 0.10.0
libtpu: 0.0.40
codegen_flags: <defaults>
</compile_context>

<pallas_src>
import functools

import jax
import jax.numpy as jnp
from jax.experimental import pallas as pl
from jax.experimental.pallas import tpu as pltpu

# ---- model hyperparameters (small, consistent with the module) -------------
LATENT_DIM = 32
IMG_SHAPE = (1, 16, 16)          # (C, H, W)
IMG_FLAT = 1 * 16 * 16           # 256
BN_BATCH = 8                     # per-forward batch; BN stats over this
N_BATCHES = 4                    # independent forwards per pallas_call (grid)
BN_EPS = 0.8
LRELU_SLOPE = 0.2

D1, D2, D3, D4 = 128, 256, 512, 1024

# Packed per-feature vector layout: name -> (offset, size). All offsets are
# multiples of 128, so static slices stay lane-aligned.
_VEC_LAYOUT = {}
_off = 0
for _name, _size in (("b1", D1), ("g2", D2), ("be2", D2),
                     ("g3", D3), ("be3", D3), ("g4", D4), ("be4", D4),
                     ("b5", IMG_FLAT)):
    _VEC_LAYOUT[_name] = (_off, _size)
    _off += _size
VEC_TOTAL = _off  # 3968


def _leaky_relu(x):
    return jnp.where(x > 0, x, LRELU_SLOPE * x)


def _batchnorm(x, gamma, beta, inv_b):
    # Single-pass training-mode BatchNorm1d: batch mean, biased batch variance,
    # eps = 0.8 (second positional arg of nn.BatchNorm1d). NOTE: the
    # E[x^2]-E[x]^2 form is only numerically safe because eps is large.
    s = jnp.sum(x, axis=0, keepdims=True)
    sq = jnp.sum(x * x, axis=0, keepdims=True)
    mean = s * inv_b
    var = sq * inv_b - mean * mean
    return gamma * (x - mean) * jax.lax.rsqrt(var + BN_EPS) + beta


def _dot_bf16(x_f32, w_ref):
    # bf16 MXU inputs, f32 accumulate; elementwise math stays f32 outside.
    return jnp.dot(x_f32.astype(jnp.bfloat16), w_ref[...],
                   preferred_element_type=jnp.float32)


def generator_kernel(z_ref,
                     w1_ref, w2_ref, w3_ref, w4_ref, w5_ref,
                     vec_ref,
                     out_ref, *, batch):
    inv_b = jnp.float32(1.0 / batch)

    def vec(name):
        off, size = _VEC_LAYOUT[name]
        return vec_ref[:, off:off + size]           # (1, size) f32, static slice

    z = z_ref[...]                                  # (B, LATENT) f32

    # block(latent_dim, 128, normalize=False)
    h = _leaky_relu(_dot_bf16(z, w1_ref) + vec("b1"))

    # block(128, 256)  -- Linear bias cancels against BN mean subtraction
    h = _dot_bf16(h, w2_ref)
    h = _leaky_relu(_batchnorm(h, vec("g2"), vec("be2"), inv_b))

    # block(256, 512)
    h = _dot_bf16(h, w3_ref)
    h = _leaky_relu(_batchnorm(h, vec("g3"), vec("be3"), inv_b))

    # block(512, 1024)
    h = _dot_bf16(h, w4_ref)
    h = _leaky_relu(_batchnorm(h, vec("g4"), vec("be4"), inv_b))

    # Linear(1024, prod(img_shape)) + Tanh
    out_ref[...] = jnp.tanh(_dot_bf16(h, w5_ref) + vec("b5"))


def generator_forward_batched(z_batches, params):
    """z_batches: (N, B, LATENT) f32 -> (N, B, C, H, W) f32.

    Each index n along the leading axis is one independent PyTorch-style
    forward() call (its own full-batch BN statistics).  One grid step per n;
    weights stay resident in VMEM across all steps.
    """
    weights_bf16, vec_packed = params
    N, B, L = z_batches.shape
    assert L == LATENT_DIM

    flops = 2 * N * B * (LATENT_DIM * D1 + D1 * D2 + D2 * D3 + D3 * D4
                         + D4 * IMG_FLAT)
    # Weights/vec are DMA'd once (constant index_map), z/out once per step.
    bytes_accessed = (sum(int(w.size) * w.dtype.itemsize for w in weights_bf16)
                      + int(vec_packed.size) * 4
                      + int(z_batches.size) * 4
                      + N * B * IMG_FLAT * 4)
    transcendentals = N * B * IMG_FLAT + N * (D2 + D3 + D4)   # tanh + rsqrt

    # z / out tiled along the grid (leading dim squeezed); weights + packed
    # vec get constant index_maps -> resident in VMEM, no per-step re-DMA.
    z_spec = pl.BlockSpec((None, B, LATENT_DIM), lambda n: (n, 0, 0))
    w_specs = [pl.BlockSpec(w.shape, lambda n: (0, 0)) for w in weights_bf16]
    vec_spec = pl.BlockSpec(vec_packed.shape, lambda n: (0, 0))
    out_spec = pl.BlockSpec((None, B, IMG_FLAT), lambda n: (n, 0, 0))

    flat_out = pl.pallas_call(
        functools.partial(generator_kernel, batch=B),
        grid=(N,),
        out_shape=jax.ShapeDtypeStruct((N, B, IMG_FLAT), jnp.float32),
        in_specs=[z_spec, *w_specs, vec_spec],
        out_specs=out_spec,
        cost_estimate=pl.CostEstimate(flops=flops,
                                      transcendentals=transcendentals,
                                      bytes_accessed=bytes_accessed),
        compiler_params=pltpu.CompilerParams(
            dimension_semantics=("parallel",),     # both TCs on v7x
            vmem_limit_bytes=16 * 1024 * 1024),
    )(z_batches, *weights_bf16, vec_packed)

    # img.view(img.shape[0], *img_shape), per batch
    return flat_out.reshape(N, B, *IMG_SHAPE)


def generator_forward(z, params):
    """Exact module semantics: z (B, LATENT) f32 -> img (B, C, H, W) f32."""
    return generator_forward_batched(z[None], params)[0]


# ---- deterministic parameter initialization (PyTorch Linear default) --------
def _linear_init(key, fan_in, fan_out):
    kw, kb = jax.random.split(key)
    bound = 1.0 / jnp.sqrt(jnp.float32(fan_in))
    w = jax.random.uniform(kw, (fan_in, fan_out), jnp.float32, -bound, bound)
    b = jax.random.uniform(kb, (fan_out,), jnp.float32, -bound, bound)
    return w, b


def make_params(key):
    dims = [(LATENT_DIM, D1), (D1, D2), (D2, D3), (D3, D4), (D4, IMG_FLAT)]
    keys = jax.random.split(key, len(dims))
    ws, bs = [], []
    for k, (fi, fo) in zip(keys, dims):
        w, b = _linear_init(k, fi, fo)
        ws.append(w)
        bs.append(b)

    # Weights shipped as bf16 (f32 accumulation happens inside the kernel).
    weights_bf16 = tuple(w.astype(jnp.bfloat16) for w in ws)

    # Biases of the BatchNorm'd layers (b2, b3, b4) cancel exactly against the
    # batch-mean subtraction, so they are dropped.
    b1, b5 = bs[0], bs[4]
    # BatchNorm affine params at init: gamma=1, beta=0 (kept learnable inputs).
    g2, be2 = jnp.ones((D2,), jnp.float32), jnp.zeros((D2,), jnp.float32)
    g3, be3 = jnp.ones((D3,), jnp.float32), jnp.zeros((D3,), jnp.float32)
    g4, be4 = jnp.ones((D4,), jnp.float32), jnp.zeros((D4,), jnp.float32)

    vec_packed = jnp.concatenate(
        [b1, g2, be2, g3, be3, g4, be4, b5]).reshape(1, VEC_TOTAL)
    return weights_bf16, vec_packed


# ---- pure-JAX reference (same bf16 weights upcast to f32, f32 activations) --
def generator_reference(z, params):
    weights_bf16, vec_packed = params
    ws = [w.astype(jnp.float32) for w in weights_bf16]
    vec = vec_packed[0]

    def get(name):
        off, size = _VEC_LAYOUT[name]
        return vec[off:off + size]

    def bn(x, g, b):
        m = jnp.mean(x, axis=0, keepdims=True)
        v = jnp.mean((x - m) ** 2, axis=0, keepdims=True)
        return g * (x - m) * jax.lax.rsqrt(v + BN_EPS) + b

    h = _leaky_relu(z @ ws[0] + get("b1"))
    h = _leaky_relu(bn(h @ ws[1], get("g2"), get("be2")))
    h = _leaky_relu(bn(h @ ws[2], get("g3"), get("be3")))
    h = _leaky_relu(bn(h @ ws[3], get("g4"), get("be4")))
    out = jnp.tanh(h @ ws[4] + get("b5"))
    return out.reshape(z.shape[0], *IMG_SHAPE)


if __name__ == "__main__":
    key = jax.random.PRNGKey(0)
    k_params, k_z = jax.random.split(key)
    params = make_params(k_params)
    z_batches = jax.random.normal(
        k_z, (N_BATCHES, BN_BATCH, LATENT_DIM), jnp.float32)

    img = generator_forward_batched(z_batches, params)
    img = jax.block_until_ready(img)

    assert img.shape == (N_BATCHES, BN_BATCH, *IMG_SHAPE), img.shape
    assert img.dtype == jnp.float32
    assert bool(jnp.all(jnp.isfinite(img)))
    assert bool(jnp.all(jnp.abs(img) <= 1.0))

    # Loose check vs. f32 reference (kernel additionally rounds activations to
    # bf16 at the matmul boundary, so only a coarse tolerance applies).
    ref = jnp.stack([generator_reference(z_batches[n], params)
                     for n in range(N_BATCHES)])
    max_err = float(jnp.max(jnp.abs(img - ref)))
    assert max_err < 0.15, f"max abs err vs reference too large: {max_err}"

    print("KERNEL_OK")
</pallas_src>

<mosaic_0001>
module attributes {stable_mosaic.version = 11 : i64} {
  func.func @generator_kernel(%arg0: i32, %arg1: memref<1x8x32xf32, #tpu.memory_space<vmem>>, %arg2: memref<32x128xbf16, #tpu.memory_space<vmem>>, %arg3: memref<128x256xbf16, #tpu.memory_space<vmem>>, %arg4: memref<256x512xbf16, #tpu.memory_space<vmem>>, %arg5: memref<512x1024xbf16, #tpu.memory_space<vmem>>, %arg6: memref<1024x256xbf16, #tpu.memory_space<vmem>>, %arg7: memref<1x3968xf32, #tpu.memory_space<vmem>>, %arg8: memref<1x8x256xf32, #tpu.memory_space<vmem>>) attributes {dimension_semantics = [#tpu.dimension_semantics<parallel>], iteration_bounds = array<i64: 4>, scalar_prefetch = 0 : i64, scratch_operands = 0 : i64, tpu.core_type = #tpu.core_type<tc>, window_params = [{transform_indices = @transform_0, window_bounds = array<i64: 1, 8, 32>}, {pipeline_mode = #tpu.pipeline_mode<synchronous>, transform_indices = @transform_1, window_bounds = array<i64: 32, 128>}, {pipeline_mode = #tpu.pipeline_mode<synchronous>, transform_indices = @transform_2, window_bounds = array<i64: 128, 256>}, {pipeline_mode = #tpu.pipeline_mode<synchronous>, transform_indices = @transform_3, window_bounds = array<i64: 256, 512>}, {pipeline_mode = #tpu.pipeline_mode<synchronous>, transform_indices = @transform_4, window_bounds = array<i64: 512, 1024>}, {pipeline_mode = #tpu.pipeline_mode<synchronous>, transform_indices = @transform_5, window_bounds = array<i64: 1024, 256>}, {pipeline_mode = #tpu.pipeline_mode<synchronous>, transform_indices = @transform_6, window_bounds = array<i64: 1, 3968>}, {transform_indices = @transform_7, window_bounds = array<i64: 1, 8, 256>}]} {
    %c0 = arith.constant 0 : index
    %c0_0 = arith.constant 0 : index
    %c0_1 = arith.constant 0 : index
    %0 = vector.load %arg1[%c0, %c0_0, %c0_1] : memref<1x8x32xf32, #tpu.memory_space<vmem>>, vector<1x8x32xf32>
    %1 = vector.shape_cast %0 : vector<1x8x32xf32> to vector<8x32xf32>
    %2 = arith.truncf %1 : vector<8x32xf32> to vector<8x32xbf16>
    %c0_2 = arith.constant 0 : index
    %c0_3 = arith.constant 0 : index
    %3 = vector.load %arg2[%c0_2, %c0_3] : memref<32x128xbf16, #tpu.memory_space<vmem>>, vector<32x128xbf16>
    %cst = arith.constant dense<0.000000e+00> : vector<8x128xf32>
    %4 = tpu.matmul %2, %3, %cst {dimension_numbers = #tpu.dot_dimension_numbers<[1], [0], [0], [1], [0, 0, 1, 1], [], []>} : vector<8x32xbf16>, vector<32x128xbf16>, vector<8x128xf32> -> vector<8x128xf32>
    %c0_4 = arith.constant 0 : index
    %c0_5 = arith.constant 0 : index
    %5 = vector.load %arg7[%c0_4, %c0_5] : memref<1x3968xf32, #tpu.memory_space<vmem>>, vector<1x128xf32>
    %6 = vector.broadcast %5 : vector<1x128xf32> to vector<8x128xf32>
    %7 = arith.addf %4, %6 : vector<8x128xf32>
    %cst_6 = arith.constant 0.000000e+00 : f32
    %8 = vector.broadcast %cst_6 : f32 to vector<8x128xf32>
    %9 = arith.cmpf ogt, %7, %8 : vector<8x128xf32>
    %cst_7 = arith.constant 2.000000e-01 : f32
    %10 = vector.broadcast %cst_7 : f32 to vector<8x128xf32>
    %11 = arith.mulf %10, %7 : vector<8x128xf32>
    %12 = arith.select %9, %7, %11 : vector<8x128xi1>, vector<8x128xf32>
    %13 = arith.truncf %12 : vector<8x128xf32> to vector<8x128xbf16>
    %c0_8 = arith.constant 0 : index
    %c0_9 = arith.constant 0 : index
    %14 = vector.load %arg3[%c0_8, %c0_9] : memref<128x256xbf16, #tpu.memory_space<vmem>>, vector<128x256xbf16>
    %cst_10 = arith.constant dense<0.000000e+00> : vector<8x256xf32>
    %15 = tpu.matmul %13, %14, %cst_10 {dimension_numbers = #tpu.dot_dimension_numbers<[1], [0], [0], [1], [0, 0, 1, 1], [], []>} : vector<8x128xbf16>, vector<128x256xbf16>, vector<8x256xf32> -> vector<8x256xf32>
    %c0_11 = arith.constant 0 : index
    %c128 = arith.constant 128 : index
    %16 = vector.load %arg7[%c0_11, %c128] : memref<1x3968xf32, #tpu.memory_space<vmem>>, vector<1x256xf32>
    %c0_12 = arith.constant 0 : index
    %c384 = arith.constant 384 : index
    %17 = vector.load %arg7[%c0_12, %c384] : memref<1x3968xf32, #tpu.memory_space<vmem>>, vector<1x256xf32>
    %cst_13 = arith.constant dense<0.000000e+00> : vector<256xf32>
    %18 = vector.multi_reduction <add>, %15, %cst_13 [0] : vector<8x256xf32> to vector<256xf32>
    %19 = vector.shape_cast %18 : vector<256xf32> to vector<1x256xf32>
    %20 = arith.mulf %15, %15 : vector<8x256xf32>
    %cst_14 = arith.constant dense<0.000000e+00> : vector<256xf32>
    %21 = vector.multi_reduction <add>, %20, %cst_14 [0] : vector<8x256xf32> to vector<256xf32>
    %22 = vector.shape_cast %21 : vector<256xf32> to vector<1x256xf32>
    %cst_15 = arith.constant 1.250000e-01 : f32
    %23 = vector.broadcast %cst_15 : f32 to vector<1x256xf32>
    %24 = arith.mulf %19, %23 : vector<1x256xf32>
    %cst_16 = arith.constant 1.250000e-01 : f32
    %25 = vector.broadcast %cst_16 : f32 to vector<1x256xf32>
    %26 = arith.mulf %22, %25 : vector<1x256xf32>
    %27 = arith.mulf %24, %24 : vector<1x256xf32>
    %28 = arith.subf %26, %27 : vector<1x256xf32>
    %29 = vector.broadcast %24 : vector<1x256xf32> to vector<8x256xf32>
    %30 = arith.subf %15, %29 : vector<8x256xf32>
    %31 = vector.broadcast %16 : vector<1x256xf32> to vector<8x256xf32>
    %32 = arith.mulf %31, %30 : vector<8x256xf32>
    %cst_17 = arith.constant 8.000000e-01 : f32
    %33 = vector.broadcast %cst_17 : f32 to vector<1x256xf32>
    %34 = arith.addf %28, %33 : vector<1x256xf32>
    %35 = math.rsqrt %34 : vector<1x256xf32>
    %36 = vector.broadcast %35 : vector<1x256xf32> to vector<8x256xf32>
    %37 = arith.mulf %32, %36 : vector<8x256xf32>
    %38 = vector.broadcast %17 : vector<1x256xf32> to vector<8x256xf32>
    %39 = arith.addf %37, %38 : vector<8x256xf32>
    %cst_18 = arith.constant 0.000000e+00 : f32
    %40 = vector.broadcast %cst_18 : f32 to vector<8x256xf32>
    %41 = arith.cmpf ogt, %39, %40 : vector<8x256xf32>
    %cst_19 = arith.constant 2.000000e-01 : f32
    %42 = vector.broadcast %cst_19 : f32 to vector<8x256xf32>
    %43 = arith.mulf %42, %39 : vector<8x256xf32>
    %44 = arith.select %41, %39, %43 : vector<8x256xi1>, vector<8x256xf32>
    %45 = arith.truncf %44 : vector<8x256xf32> to vector<8x256xbf16>
    %c0_20 = arith.constant 0 : index
    %c0_21 = arith.constant 0 : index
    %46 = vector.load %arg4[%c0_20, %c0_21] : memref<256x512xbf16, #tpu.memory_space<vmem>>, vector<256x512xbf16>
    %cst_22 = arith.constant dense<0.000000e+00> : vector<8x512xf32>
    %47 = tpu.matmul %45, %46, %cst_22 {dimension_numbers = #tpu.dot_dimension_numbers<[1], [0], [0], [1], [0, 0, 1, 1], [], []>} : vector<8x256xbf16>, vector<256x512xbf16>, vector<8x512xf32> -> vector<8x512xf32>
    %c0_23 = arith.constant 0 : index
    %c640 = arith.constant 640 : index
    %48 = vector.load %arg7[%c0_23, %c640] : memref<1x3968xf32, #tpu.memory_space<vmem>>, vector<1x512xf32>
    %c0_24 = arith.constant 0 : index
    %c1152 = arith.constant 1152 : index
    %49 = vector.load %arg7[%c0_24, %c1152] : memref<1x3968xf32, #tpu.memory_space<vmem>>, vector<1x512xf32>
    %cst_25 = arith.constant dense<0.000000e+00> : vector<512xf32>
    %50 = vector.multi_reduction <add>, %47, %cst_25 [0] : vector<8x512xf32> to vector<512xf32>
    %51 = vector.shape_cast %50 : vector<512xf32> to vector<1x512xf32>
    %52 = arith.mulf %47, %47 : vector<8x512xf32>
    %cst_26 = arith.constant dense<0.000000e+00> : vector<512xf32>
    %53 = vector.multi_reduction <add>, %52, %cst_26 [0] : vector<8x512xf32> to vector<512xf32>
    %54 = vector.shape_cast %53 : vector<512xf32> to vector<1x512xf32>
    %cst_27 = arith.constant 1.250000e-01 : f32
    %55 = vector.broadcast %cst_27 : f32 to vector<1x512xf32>
    %56 = arith.mulf %51, %55 : vector<1x512xf32>
    %cst_28 = arith.constant 1.250000e-01 : f32
    %57 = vector.broadcast %cst_28 : f32 to vector<1x512xf32>
    %58 = arith.mulf %54, %57 : vector<1x512xf32>
    %59 = arith.mulf %56, %56 : vector<1x512xf32>
    %60 = arith.subf %58, %59 : vector<1x512xf32>
    %61 = vector.broadcast %56 : vector<1x512xf32> to vector<8x512xf32>
    %62 = arith.subf %47, %61 : vector<8x512xf32>
    %63 = vector.broadcast %48 : vector<1x512xf32> to vector<8x512xf32>
    %64 = arith.mulf %63, %62 : vector<8x512xf32>
    %cst_29 = arith.constant 8.000000e-01 : f32
    %65 = vector.broadcast %cst_29 : f32 to vector<1x512xf32>
    %66 = arith.addf %60, %65 : vector<1x512xf32>
    %67 = math.rsqrt %66 : vector<1x512xf32>
    %68 = vector.broadcast %67 : vector<1x512xf32> to vector<8x512xf32>
    %69 = arith.mulf %64, %68 : vector<8x512xf32>
    %70 = vector.broadcast %49 : vector<1x512xf32> to vector<8x512xf32>
    %71 = arith.addf %69, %70 : vector<8x512xf32>
    %cst_30 = arith.constant 0.000000e+00 : f32
    %72 = vector.broadcast %cst_30 : f32 to vector<8x512xf32>
    %73 = arith.cmpf ogt, %71, %72 : vector<8x512xf32>
    %cst_31 = arith.constant 2.000000e-01 : f32
    %74 = vector.broadcast %cst_31 : f32 to vector<8x512xf32>
    %75 = arith.mulf %74, %71 : vector<8x512xf32>
    %76 = arith.select %73, %71, %75 : vector<8x512xi1>, vector<8x512xf32>
    %77 = arith.truncf %76 : vector<8x512xf32> to vector<8x512xbf16>
    %c0_32 = arith.constant 0 : index
    %c0_33 = arith.constant 0 : index
    %78 = vector.load %arg5[%c0_32, %c0_33] : memref<512x1024xbf16, #tpu.memory_space<vmem>>, vector<512x1024xbf16>
    %cst_34 = arith.constant dense<0.000000e+00> : vector<8x1024xf32>
    %79 = tpu.matmul %77, %78, %cst_34 {dimension_numbers = #tpu.dot_dimension_numbers<[1], [0], [0], [1], [0, 0, 1, 1], [], []>} : vector<8x512xbf16>, vector<512x1024xbf16>, vector<8x1024xf32> -> vector<8x1024xf32>
    %c0_35 = arith.constant 0 : index
    %c1664 = arith.constant 1664 : index
    %80 = vector.load %arg7[%c0_35, %c1664] : memref<1x3968xf32, #tpu.memory_space<vmem>>, vector<1x1024xf32>
    %c0_36 = arith.constant 0 : index
    %c2688 = arith.constant 2688 : index
    %81 = vector.load %arg7[%c0_36, %c2688] : memref<1x3968xf32, #tpu.memory_space<vmem>>, vector<1x1024xf32>
    %cst_37 = arith.constant dense<0.000000e+00> : vector<1024xf32>
    %82 = vector.multi_reduction <add>, %79, %cst_37 [0] : vector<8x1024xf32> to vector<1024xf32>
    %83 = vector.shape_cast %82 : vector<1024xf32> to vector<1x1024xf32>
    %84 = arith.mulf %79, %79 : vector<8x1024xf32>
    %cst_38 = arith.constant dense<0.000000e+00> : vector<1024xf32>
    %85 = vector.multi_reduction <add>, %84, %cst_38 [0] : vector<8x1024xf32> to vector<1024xf32>
    %86 = vector.shape_cast %85 : vector<1024xf32> to vector<1x1024xf32>
    %cst_39 = arith.constant 1.250000e-01 : f32
    %87 = vector.broadcast %cst_39 : f32 to vector<1x1024xf32>
    %88 = arith.mulf %83, %87 : vector<1x1024xf32>
    %cst_40 = arith.constant 1.250000e-01 : f32
    %89 = vector.broadcast %cst_40 : f32 to vector<1x1024xf32>
    %90 = arith.mulf %86, %89 : vector<1x1024xf32>
    %91 = arith.mulf %88, %88 : vector<1x1024xf32>
    %92 = arith.subf %90, %91 : vector<1x1024xf32>
    %93 = vector.broadcast %88 : vector<1x1024xf32> to vector<8x1024xf32>
    %94 = arith.subf %79, %93 : vector<8x1024xf32>
    %95 = vector.broadcast %80 : vector<1x1024xf32> to vector<8x1024xf32>
    %96 = arith.mulf %95, %94 : vector<8x1024xf32>
    %cst_41 = arith.constant 8.000000e-01 : f32
    %97 = vector.broadcast %cst_41 : f32 to vector<1x1024xf32>
    %98 = arith.addf %92, %97 : vector<1x1024xf32>
    %99 = math.rsqrt %98 : vector<1x1024xf32>
    %100 = vector.broadcast %99 : vector<1x1024xf32> to vector<8x1024xf32>
    %101 = arith.mulf %96, %100 : vector<8x1024xf32>
    %102 = vector.broadcast %81 : vector<1x1024xf32> to vector<8x1024xf32>
    %103 = arith.addf %101, %102 : vector<8x1024xf32>
    %cst_42 = arith.constant 0.000000e+00 : f32
    %104 = vector.broadcast %cst_42 : f32 to vector<8x1024xf32>
    %105 = arith.cmpf ogt, %103, %104 : vector<8x1024xf32>
    %cst_43 = arith.constant 2.000000e-01 : f32
    %106 = vector.broadcast %cst_43 : f32 to vector<8x1024xf32>
    %107 = arith.mulf %106, %103 : vector<8x1024xf32>
    %108 = arith.select %105, %103, %107 : vector<8x1024xi1>, vector<8x1024xf32>
    %109 = arith.truncf %108 : vector<8x1024xf32> to vector<8x1024xbf16>
    %c0_44 = arith.constant 0 : index
    %c0_45 = arith.constant 0 : index
    %110 = vector.load %arg6[%c0_44, %c0_45] : memref<1024x256xbf16, #tpu.memory_space<vmem>>, vector<1024x256xbf16>
    %cst_46 = arith.constant dense<0.000000e+00> : vector<8x256xf32>
    %111 = tpu.matmul %109, %110, %cst_46 {dimension_numbers = #tpu.dot_dimension_numbers<[1], [0], [0], [1], [0, 0, 1, 1], [], []>} : vector<8x1024xbf16>, vector<1024x256xbf16>, vector<8x256xf32> -> vector<8x256xf32>
    %c0_47 = arith.constant 0 : index
    %c3712 = arith.constant 3712 : index
    %112 = vector.load %arg7[%c0_47, %c3712] : memref<1x3968xf32, #tpu.memory_space<vmem>>, vector<1x256xf32>
    %113 = vector.broadcast %112 : vector<1x256xf32> to vector<8x256xf32>
    %114 = arith.addf %111, %113 : vector<8x256xf32>
    %115 = math.tanh %114 : vector<8x256xf32>
    %c0_48 = arith.constant 0 : index
    %c0_49 = arith.constant 0 : index
    %c0_50 = arith.constant 0 : index
    %116 = vector.load %arg8[%c0_48, %c0_49, %c0_50] : memref<1x8x256xf32, #tpu.memory_space<vmem>>, vector<1x8x256xf32>
    %117 = vector.shape_cast %116 : vector<1x8x256xf32> to vector<8x256xf32>
    %118 = vector.shape_cast %115 : vector<8x256xf32> to vector<1x8x256xf32>
    tpu.vector_store %arg8[%c0_48, %c0_49, %c0_50], %118 {strides = array<i32>} : memref<1x8x256xf32, #tpu.memory_space<vmem>>, vector<1x8x256xf32>,
    return
  }
  func.func @transform_0(%arg0: i32) -> (i32, i32, i32) {
    %c0_i32 = arith.constant 0 : i32
    %c0_i32_0 = arith.constant 0 : i32
    %c0_i32_1 = arith.constant 0 : i32
    return %arg0, %c0_i32, %c0_i32_0 : i32, i32, i32
  }
  func.func @transform_1(%arg0: i32) -> (i32, i32) {
    %c0_i32 = arith.constant 0 : i32
    %c0_i32_0 = arith.constant 0 : i32
    %c0_i32_1 = arith.constant 0 : i32
    return %c0_i32, %c0_i32_0 : i32, i32
  }
  func.func @transform_2(%arg0: i32) -> (i32, i32) {
    %c0_i32 = arith.constant 0 : i32
    %c0_i32_0 = arith.constant 0 : i32
    %c0_i32_1 = arith.constant 0 : i32
    return %c0_i32, %c0_i32_0 : i32, i32
  }
  func.func @transform_3(%arg0: i32) -> (i32, i32) {
    %c0_i32 = arith.constant 0 : i32
    %c0_i32_0 = arith.constant 0 : i32
    %c0_i32_1 = arith.constant 0 : i32
    return %c0_i32, %c0_i32_0 : i32, i32
  }
  func.func @transform_4(%arg0: i32) -> (i32, i32) {
    %c0_i32 = arith.constant 0 : i32
    %c0_i32_0 = arith.constant 0 : i32
    %c0_i32_1 = arith.constant 0 : i32
    return %c0_i32, %c0_i32_0 : i32, i32
  }
  func.func @transform_5(%arg0: i32) -> (i32, i32) {
    %c0_i32 = arith.constant 0 : i32
    %c0_i32_0 = arith.constant 0 : i32
    %c0_i32_1 = arith.constant 0 : i32
    return %c0_i32, %c0_i32_0 : i32, i32
  }
  func.func @transform_6(%arg0: i32) -> (i32, i32) {
    %c0_i32 = arith.constant 0 : i32
    %c0_i32_0 = arith.constant 0 : i32
    %c0_i32_1 = arith.constant 0 : i32
    return %c0_i32, %c0_i32_0 : i32, i32
  }
  func.func @transform_7(%arg0: i32) -> (i32, i32, i32) {
    %c0_i32 = arith.constant 0 : i32
    %c0_i32_0 = arith.constant 0 : i32
    %c0_i32_1 = arith.constant 0 : i32
    return %arg0, %c0_i32, %c0_i32_0 : i32, i32, i32
  }
}

</mosaic_0001>

<llo_original>
// kernel: tpu_custom_call.1
$region0: #{tpu_custom_call.1}
  #allocation0 [shape = 'u32[]', space=smem, size = 0x4, offset = 0x4, fixed_abs, tag = 'smem constant byte address 0x4 - core index']
  #allocation1 [shape = 'u32[144,128]{1,0:T(1,128)}', space=vmem, size = 0x12000, scoped, tag = 'internal scratch']
  %s0 = inlined_call_operand.hbm [shape: f32[4,8,32], index: 0, kind: input, shape index: {}]
  %s1 = inlined_call_operand.hbm [shape: bf16[32,128], index: 1, kind: input, shape index: {}]
  %s2 = inlined_call_operand.hbm [shape: bf16[128,256], index: 2, kind: input, shape index: {}]
  %s3 = inlined_call_operand.hbm [shape: bf16[256,512], index: 3, kind: input, shape index: {}]
  %s4 = inlined_call_operand.hbm [shape: bf16[512,1024], index: 4, kind: input, shape index: {}]
  %s5 = inlined_call_operand.hbm [shape: bf16[1024,256], index: 5, kind: input, shape index: {}]
  %s6 = inlined_call_operand.hbm [shape: f32[1,3968], index: 6, kind: input, shape index: {}]
  %s7 = inlined_call_operand.hbm [shape: f32[4,8,256], index: 7, kind: output, shape index: {}]
  %s8 = sld [smem:[#allocation0]]
  $region89: #{tpu_custom_call.1} parent=0
    _
  %s10 = ssub.s32 1, %s8
  %s11 = scalar_select 0, %s10, %s8
  $region1: #{tpu_custom_call.1} parent=0
    #allocation2 [shape = 'u8[8192]{0}', space=vmem, size = 0x2000, scoped, tag = 'input window, operand 0']
    #allocation3 [shape = 's32[2]{0}', space=sflag, size = 0x8, scoped, tag = 'scoped memory for tpu_custom_call.1']
    #allocation4 [shape = 's32[2]{0}', space=sflag, size = 0x8, scoped, tag = 'scoped memory for tpu_custom_call.1']
    #allocation5 [shape = 'u8[8192]{0}', space=vmem, size = 0x2000, scoped, tag = 'input window, operand 1, single buffered']
    #allocation6 [shape = 's32[1]{0}', space=sflag, size = 0x4, scoped, tag = 'scoped memory for tpu_custom_call.1']
    #allocation7 [shape = 'u8[65536]{0}', space=vmem, size = 0x10000, scoped, tag = 'input window, operand 2, single buffered']
    #allocation8 [shape = 'u8[262144]{0}', space=vmem, size = 0x40000, scoped, tag = 'input window, operand 3, single buffered']
    #allocation9 [shape = 's32[1]{0}', space=sflag, size = 0x4, scoped, tag = 'scoped memory for tpu_custom_call.1']
    #allocation10 [shape = 'u8[1048576]{0}', space=vmem, size = 0x100000, scoped, tag = 'input window, operand 4, single buffered']
    #allocation11 [shape = 'u8[524288]{0}', space=vmem, size = 0x80000, scoped, tag = 'input window, operand 5, single buffered']
    #allocation12 [shape = 's32[1]{0}', space=sflag, size = 0x4, scoped, tag = 'scoped memory for tpu_custom_call.1']
    #allocation13 [shape = 'u8[15872]{0}', space=vmem, size = 0x4000, scoped, tag = 'input window, operand 6, single buffered']
    #allocation14 [shape = 'u8[16384]{0}', space=vmem, size = 0x4000, scoped, tag = 'output window, operand 0']
    %12 = vsyncpa [#allocation3], 0
    %s13 = scalar_lea.sflag [#allocation3], 1
    %14 = vsyncpa %s13, 0
    %15 = vsyncpa [#allocation6], 0
    %16 = vsyncpa [#allocation9], 0
    %17 = vsyncpa [#allocation12], 0
    %18 = vsyncpa [#allocation4], 0
    %s19 = scalar_lea.sflag [#allocation4], 1
    %20 = vsyncpa %s19, 0
    loop: start=0, step=1, limit=6
    $region2: #{tpu_custom_call.1} parent=1 // loop_pre_header
      _
    $region3: #{tpu_custom_call.1} parent=1 // loop_header
      %s22 = sphi 0, %s26
      %p23 = scmp.ge.s32.totalorder %s22, 6
      %s32 = sphi 0, %s34
      %s35 = sphi 0, %s32
      %s36 = sphi 0, %s35
      %s52 = sphi 0, %s36
      %s56 = sphi 0, %s56
      %s58 = sphi 0, %s56
      %s59 = sphi 0, %s58
      %s73 = sphi 0, %s59
      %s77 = sphi 0, %s77
      %s79 = sphi 0, %s77
      %s80 = sphi 0, %s79
      %s94 = sphi 0, %s80
      %s98 = sphi 0, %s98
      %s100 = sphi 0, %s98
      %s101 = sphi 0, %s100
      %s115 = sphi 0, %s101
      %s119 = sphi 0, %s119
      %s121 = sphi 0, %s119
      %s122 = sphi 0, %s121
      %s136 = sphi 0, %s122
      %s140 = sphi 0, %s140
      %s142 = sphi 0, %s140
      %s143 = sphi 0, %s142
      %s157 = sphi 0, %s143
      %s161 = sphi 0, %s161
      %s163 = sphi 0, %s161
      %s164 = sphi 0, %s163
      %s178 = sphi 0, %s164
      %s184 = sphi 0, %s186
      %s187 = sphi 0, %s184
      %s188 = sphi 0, %s187
      %s204 = sphi 0, %s188
    $region4: #{tpu_custom_call.1} parent=1 // loop_header_branch
      %25 = sbr.rel (%p23) target = $region8
    $region5: #{tpu_custom_call.1} parent=1 // loop_body
      %s27 = ssub.s32 %s22, 1
      %s28 = ssub.s32 %s22, 2
      %s29 = sadd.s32 %s22, 1
      %s30 = ssub.s32 %s22, %s29
      %p31 = scmp.eq.s32.totalorder %s30, 0
      %s33 = sadd.s32 %s32, 1
      %s34 = scalar_select %p31, %s32, %s33
      %p37 = pneg %p31
      %p38 = scmp.eq.s32.totalorder %s22, 3
      %p39 = por %p37, %p38
      %p40 = scmp.ne.s32.totalorder %s32, %s35
      %p41 = scmp.eq.s32.totalorder %s22, 0
      %p42 = por %p40, %p41
      %p43 = scmp.ne.s32.totalorder %s32, %s35
      %p44 = scmp.eq.s32.totalorder %s27, 3
      %p45 = por %p43, %p44
      %p46 = scmp.ne.s32.totalorder %s35, %s36
      %p47 = scmp.eq.s32.totalorder %s27, 0
      %p48 = por %p46, %p47
      %p49 = scmp.ne.s32.totalorder %s35, %s36
      %p50 = scmp.eq.s32.totalorder %s28, 3
      %p51 = por %p49, %p50
      %p53 = scmp.ne.s32.totalorder %s36, %s52
      %p54 = scmp.eq.s32.totalorder %s28, 0
      %p55 = por %p53, %p54
      %s57 = sadd.s32 %s56, 1
      %p60 = scmp.eq.s32.totalorder %s22, 3
      %p61 = scmp.ne.s32.totalorder %s56, %s58
      %p62 = scmp.eq.s32.totalorder %s22, 0
      %p63 = por %p61, %p62
      %p64 = scmp.ne.s32.totalorder %s56, %s58
      %p65 = scmp.eq.s32.totalorder %s27, 3
      %p66 = por %p64, %p65
      %p67 = scmp.ne.s32.totalorder %s58, %s59
      %p68 = scmp.eq.s32.totalorder %s27, 0
      %p69 = por %p67, %p68
      %p70 = scmp.ne.s32.totalorder %s58, %s59
      %p71 = scmp.eq.s32.totalorder %s28, 3
      %p72 = por %p70, %p71
      %p74 = scmp.ne.s32.totalorder %s59, %s73
      %p75 = scmp.eq.s32.totalorder %s28, 0
      %p76 = por %p74, %p75
      %s78 = sadd.s32 %s77, 1
      %p81 = scmp.eq.s32.totalorder %s22, 3
      %p82 = scmp.ne.s32.totalorder %s77, %s79
      %p83 = scmp.eq.s32.totalorder %s22, 0
      %p84 = por %p82, %p83
      %p85 = scmp.ne.s32.totalorder %s77, %s79
      %p86 = scmp.eq.s32.totalorder %s27, 3
      %p87 = por %p85, %p86
      %p88 = scmp.ne.s32.totalorder %s79, %s80
      %p89 = scmp.eq.s32.totalorder %s27, 0
      %p90 = por %p88, %p89
      %p91 = scmp.ne.s32.totalorder %s79, %s80
      %p92 = scmp.eq.s32.totalorder %s28, 3
      %p93 = por %p91, %p92
      %p95 = scmp.ne.s32.totalorder %s80, %s94
      %p96 = scmp.eq.s32.totalorder %s28, 0
      %p97 = por %p95, %p96
      %s99 = sadd.s32 %s98, 1
      %p102 = scmp.eq.s32.totalorder %s22, 3
      %p103 = scmp.ne.s32.totalorder %s98, %s100
      %p104 = scmp.eq.s32.totalorder %s22, 0
      %p105 = por %p103, %p104
      %p106 = scmp.ne.s32.totalorder %s98, %s100
      %p107 = scmp.eq.s32.totalorder %s27, 3
      %p108 = por %p106, %p107
      %p109 = scmp.ne.s32.totalorder %s100, %s101
      %p110 = scmp.eq.s32.totalorder %s27, 0
      %p111 = por %p109, %p110
      %p112 = scmp.ne.s32.totalorder %s100, %s101
      %p113 = scmp.eq.s32.totalorder %s28, 3
      %p114 = por %p112, %p113
      %p116 = scmp.ne.s32.totalorder %s101, %s115
      %p117 = scmp.eq.s32.totalorder %s28, 0
      %p118 = por %p116, %p117
      %s120 = sadd.s32 %s119, 1
      %p123 = scmp.eq.s32.totalorder %s22, 3
      %p124 = scmp.ne.s32.totalorder %s119, %s121
      %p125 = scmp.eq.s32.totalorder %s22, 0
      %p126 = por %p124, %p125
      %p127 = scmp.ne.s32.totalorder %s119, %s121
      %p128 = scmp.eq.s32.totalorder %s27, 3
      %p129 = por %p127, %p128
      %p130 = scmp.ne.s32.totalorder %s121, %s122
      %p131 = scmp.eq.s32.totalorder %s27, 0
      %p132 = por %p130, %p131
      %p133 = scmp.ne.s32.totalorder %s121, %s122
      %p134 = scmp.eq.s32.totalorder %s28, 3
      %p135 = por %p133, %p134
      %p137 = scmp.ne.s32.totalorder %s122, %s136
      %p138 = scmp.eq.s32.totalorder %s28, 0
      %p139 = por %p137, %p138
      %s141 = sadd.s32 %s140, 1
      %p144 = scmp.eq.s32.totalorder %s22, 3
      %p145 = scmp.ne.s32.totalorder %s140, %s142
      %p146 = scmp.eq.s32.totalorder %s22, 0
      %p147 = por %p145, %p146
      %p148 = scmp.ne.s32.totalorder %s140, %s142
      %p149 = scmp.eq.s32.totalorder %s27, 3
      %p150 = por %p148, %p149
      %p151 = scmp.ne.s32.totalorder %s142, %s143
      %p152 = scmp.eq.s32.totalorder %s27, 0
      %p153 = por %p151, %p152
      %p154 = scmp.ne.s32.totalorder %s142, %s143
      %p155 = scmp.eq.s32.totalorder %s28, 3
      %p156 = por %p154, %p155
      %p158 = scmp.ne.s32.totalorder %s143, %s157
      %p159 = scmp.eq.s32.totalorder %s28, 0
      %p160 = por %p158, %p159
      %s162 = sadd.s32 %s161, 1
      %p165 = scmp.eq.s32.totalorder %s22, 3
      %p166 = scmp.ne.s32.totalorder %s161, %s163
      %p167 = scmp.eq.s32.totalorder %s22, 0
      %p168 = por %p166, %p167
      %p169 = scmp.ne.s32.totalorder %s161, %s163
      %p170 = scmp.eq.s32.totalorder %s27, 3
      %p171 = por %p169, %p170
      %p172 = scmp.ne.s32.totalorder %s163, %s164
      %p173 = scmp.eq.s32.totalorder %s27, 0
      %p174 = por %p172, %p173
      %p175 = scmp.ne.s32.totalorder %s163, %s164
      %p176 = scmp.eq.s32.totalorder %s28, 3
      %p177 = por %p175, %p176
      %p179 = scmp.ne.s32.totalorder %s164, %s178
      %p180 = scmp.eq.s32.totalorder %s28, 0
      %p181 = por %p179, %p180
      %s182 = ssub.s32 %s22, %s29
      %p183 = scmp.eq.s32.totalorder %s182, 0
      %s185 = sadd.s32 %s184, 1
      %s186 = scalar_select %p183, %s184, %s185
      %p189 = pneg %p183
      %p190 = scmp.eq.s32.totalorder %s22, 3
      %p191 = por %p189, %p190
      %p192 = scmp.ne.s32.totalorder %s184, %s187
      %p193 = scmp.eq.s32.totalorder %s22, 0
      %p194 = por %p192, %p193
      %p195 = scmp.ne.s32.totalorder %s184, %s187
      %p196 = scmp.eq.s32.totalorder %s27, 3
      %p197 = por %p195, %p196
      %p198 = scmp.ne.s32.totalorder %s187, %s188
      %p199 = scmp.eq.s32.totalorder %s27, 0
      %p200 = por %p198, %p199
      %p201 = scmp.ne.s32.totalorder %s187, %s188
      %p202 = scmp.eq.s32.totalorder %s28, 3
      %p203 = por %p201, %p202
      %p205 = scmp.ne.s32.totalorder %s188, %s204
      %p206 = scmp.eq.s32.totalorder %s28, 0
      %p207 = por %p205, %p206
      %p208 = scmp.le.s32.totalorder 1, %s22
      %p209 = scmp.lt.s32.totalorder %s22, 5
      %p210 = pnand %p208, %p209
      %p211 = pneg %p210
      // Predicated region
      $region9: #{tpu_custom_call.1} parent=5 // pred_check
        _
      $region10: #{tpu_custom_call.1} parent=5 // pred_check_branch
        %213 = sbr.rel (%p210) target = $region12
      $region11: #{tpu_custom_call.1} parent=5 // pred_region
        %s214 = ssub.s32 %s22, 1
        // Predicated region
        $region13: #{tpu_custom_call.1} parent=11 // pred_check
          %p215 = pneg %p69
        $region14: #{tpu_custom_call.1} parent=11 // pred_check_branch
          %217 = sbr.rel (%p215) target = $region16
        $region15: #{tpu_custom_call.1} parent=11 // pred_region
          %s219 = ssub.s32 256, 256
          %220 = vsyncadd [#allocation6], %s219
          %s221 = sshll.u32 [#allocation5], 4
          %s222 = int_to_ptr.vmem [resolvable:$true] %s221
          %227 = dma.hbm_to_vmem [thread:$0]  %s1, 256, %s222, [#allocation6], 64, 64, 4
        $region16: #{tpu_custom_call.1} parent=11 // pred_fallthru
          _
        // Predicated region
        $region17: #{tpu_custom_call.1} parent=11 // pred_check
          %p228 = pneg %p90
        $region18: #{tpu_custom_call.1} parent=11 // pred_check_branch
          %230 = sbr.rel (%p228) target = $region20
        $region19: #{tpu_custom_call.1} parent=11 // pred_region
          %s232 = ssub.s32 2048, 2048
          %233 = vsyncadd [#allocation6], %s232
          %s234 = sshll.u32 [#allocation7], 4
          %s235 = int_to_ptr.vmem [resolvable:$true] %s234
          %240 = dma.hbm_to_vmem [thread:$0]  %s2, 2048, %s235, [#allocation6], 128, 128, 8
        $region20: #{tpu_custom_call.1} parent=11 // pred_fallthru
          _
        // Predicated region
        $region21: #{tpu_custom_call.1} parent=11 // pred_check
          %p241 = pneg %p111
        $region22: #{tpu_custom_call.1} parent=11 // pred_check_branch
          %243 = sbr.rel (%p241) target = $region24
        $region23: #{tpu_custom_call.1} parent=11 // pred_region
          %s245 = ssub.s32 8192, 8192
          %246 = vsyncadd [#allocation9], %s245
          %s247 = sshll.u32 [#allocation8], 4
          %s248 = int_to_ptr.vmem [resolvable:$true] %s247
          %253 = dma.hbm_to_vmem [thread:$0]  %s3, 8192, %s248, [#allocation9], 256, 256, 16
        $region24: #{tpu_custom_call.1} parent=11 // pred_fallthru
          _
        // Predicated region
        $region25: #{tpu_custom_call.1} parent=11 // pred_check
          %p254 = pneg %p132
        $region26: #{tpu_custom_call.1} parent=11 // pred_check_branch
          %256 = sbr.rel (%p254) target = $region28
        $region27: #{tpu_custom_call.1} parent=11 // pred_region
          %s258 = ssub.s32 32768, 32768
          %259 = vsyncadd [#allocation9], %s258
          %s260 = sshll.u32 [#allocation10], 4
          %s261 = int_to_ptr.vmem [resolvable:$true] %s260
          %266 = dma.hbm_to_vmem [thread:$0]  %s4, 32768, %s261, [#allocation9], 512, 512, 32
        $region28: #{tpu_custom_call.1} parent=11 // pred_fallthru
          _
        // Predicated region
        $region29: #{tpu_custom_call.1} parent=11 // pred_check
          %p267 = pneg %p153
        $region30: #{tpu_custom_call.1} parent=11 // pred_check_branch
          %269 = sbr.rel (%p267) target = $region32
        $region31: #{tpu_custom_call.1} parent=11 // pred_region
          %s271 = ssub.s32 16384, 16384
          %272 = vsyncadd [#allocation12], %s271
          %s273 = sshll.u32 [#allocation11], 4
          %s274 = int_to_ptr.vmem [resolvable:$true] %s273
          %279 = dma.hbm_to_vmem [thread:$0]  %s5, 16384, %s274, [#allocation12], 128, 128, 8
        $region32: #{tpu_custom_call.1} parent=11 // pred_fallthru
          _
        // Predicated region
        $region33: #{tpu_custom_call.1} parent=11 // pred_check
          %p280 = pneg %p174
        $region34: #{tpu_custom_call.1} parent=11 // pred_check_branch
          %282 = sbr.rel (%p280) target = $region36
        $region35: #{tpu_custom_call.1} parent=11 // pred_region
          %s284 = ssub.s32 496, 496
          %285 = vsyncadd [#allocation12], %s284
          %s287 = sshll.u32 [#allocation13], 4
          %s288 = int_to_ptr.vmem [resolvable:$true] %s287
          %290 = dma.hbm_to_vmem [thread:$0]  %s6, 496, %s288, [#allocation12]
        $region36: #{tpu_custom_call.1} parent=11 // pred_fallthru
          _
      $region12: #{tpu_custom_call.1} parent=5 // pred_fallthru
        _
      %p291 = scmp.lt.s32.totalorder %s22, 4
      // Predicated region
      $region37: #{tpu_custom_call.1} parent=5 // pred_check
        %p292 = pneg %p291
      $region38: #{tpu_custom_call.1} parent=5 // pred_check_branch
        %294 = sbr.rel (%p292) target = $region40
      $region39: #{tpu_custom_call.1} parent=5 // pred_region
        // Predicated region
        $region41: #{tpu_custom_call.1} parent=39 // pred_check
          %p295 = pneg %p42
        $region42: #{tpu_custom_call.1} parent=39 // pred_check_branch
          %297 = sbr.rel (%p295) target = $region44
        $region43: #{tpu_custom_call.1} parent=39 // pred_region
          %s298 = sand.u32 %s32, 1
          %s299 = scalar_lea.sflag [#allocation3], %s298
          %s300 = sand.u32 %s32, 1
          %s301 = smul.addr %s300, 8
          %s302 = scalar_lea.vmem [#allocation2], %s301
          %s304 = ssub.s32 128, 128
          %305 = vsyncadd %s299, %s304
          %s306 = smul.addr %s22, 128
          %s307 = scalar_lea.hbm %s0, %s306
          %s309 = sshll.u32 %s302, 4
          %s310 = int_to_ptr.vmem [resolvable:$true] %s309
          %312 = dma.hbm_to_vmem [thread:$0]  %s307, 128, %s310, %s299
        $region44: #{tpu_custom_call.1} parent=39 // pred_fallthru
          _
      $region40: #{tpu_custom_call.1} parent=5 // pred_fallthru
        _
      %p313 = scmp.le.s32.totalorder 1, %s22
      %p314 = scmp.lt.s32.totalorder %s22, 5
      %p315 = pnand %p313, %p314
      %p316 = pneg %p315
      // Predicated region
      $region45: #{tpu_custom_call.1} parent=5 // pred_check
        _
      $region46: #{tpu_custom_call.1} parent=5 // pred_check_branch
        %318 = sbr.rel (%p315) target = $region48
      $region47: #{tpu_custom_call.1} parent=5 // pred_region
        %s319 = ssub.s32 %s22, 1
        %s320 = sand.u32 %s35, 1
        %s321 = scalar_lea.sflag [#allocation3], %s320
        %s322 = sand.u32 %s35, 1
        %s323 = smul.addr %s322, 8
        %s324 = scalar_lea.vmem [#allocation2], %s323
        // Predicated region
        $region49: #{tpu_custom_call.1} parent=47 // pred_check
          %p325 = pneg %p48
        $region50: #{tpu_custom_call.1} parent=47 // pred_check_branch
          %327 = sbr.rel (%p325) target = $region52
        $region51: #{tpu_custom_call.1} parent=47 // pred_region
          %328 = dma.done %s321, 128
        $region52: #{tpu_custom_call.1} parent=47 // pred_fallthru
          _
        // Predicated region
        $region53: #{tpu_custom_call.1} parent=47 // pred_check
          %p329 = pneg %p69
        $region54: #{tpu_custom_call.1} parent=47 // pred_check_branch
          %331 = sbr.rel (%p329) target = $region56
        $region55: #{tpu_custom_call.1} parent=47 // pred_region
          %332 = dma.done [#allocation6], 256
        $region56: #{tpu_custom_call.1} parent=47 // pred_fallthru
          _
        // Predicated region
        $region57: #{tpu_custom_call.1} parent=47 // pred_check
          %p333 = pneg %p90
        $region58: #{tpu_custom_call.1} parent=47 // pred_check_branch
          %335 = sbr.rel (%p333) target = $region60
        $region59: #{tpu_custom_call.1} parent=47 // pred_region
          %336 = dma.done [#allocation6], 2048
        $region60: #{tpu_custom_call.1} parent=47 // pred_fallthru
          _
        // Predicated region
        $region61: #{tpu_custom_call.1} parent=47 // pred_check
          %p337 = pneg %p111
        $region62: #{tpu_custom_call.1} parent=47 // pred_check_branch
          %339 = sbr.rel (%p337) target = $region64
        $region63: #{tpu_custom_call.1} parent=47 // pred_region
          %340 = dma.done [#allocation9], 8192
        $region64: #{tpu_custom_call.1} parent=47 // pred_fallthru
          _
        // Predicated region
        $region65: #{tpu_custom_call.1} parent=47 // pred_check
          %p341 = pneg %p132
        $region66: #{tpu_custom_call.1} parent=47 // pred_check_branch
          %343 = sbr.rel (%p341) target = $region68
        $region67: #{tpu_custom_call.1} parent=47 // pred_region
          %344 = dma.done [#allocation9], 32768
        $region68: #{tpu_custom_call.1} parent=47 // pred_fallthru
          _
        // Predicated region
        $region69: #{tpu_custom_call.1} parent=47 // pred_check
          %p345 = pneg %p153
        $region70: #{tpu_custom_call.1} parent=47 // pred_check_branch
          %347 = sbr.rel (%p345) target = $region72
        $region71: #{tpu_custom_call.1} parent=47 // pred_region
          %348 = dma.done [#allocation12], 16384
        $region72: #{tpu_custom_call.1} parent=47 // pred_fallthru
          _
        // Predicated region
        $region73: #{tpu_custom_call.1} parent=47 // pred_check
          %p349 = pneg %p174
        $region74: #{tpu_custom_call.1} parent=47 // pred_check_branch
          %351 = sbr.rel (%p349) target = $region76
        $region75: #{tpu_custom_call.1} parent=47 // pred_region
          %352 = dma.done [#allocation12], 496
        $region76: #{tpu_custom_call.1} parent=47 // pred_fallthru
          _
        %s353 = sand.u32 %s35, 1
        %s354 = scalar_lea.sflag [#allocation3], %s353
        %s355 = sand.u32 %s35, 1
        %s356 = smul.addr %s355, 8
        %s357 = scalar_lea.vmem [#allocation2], %s356
        %p358 = pneg %p48
        %p359 = pneg %p45
        %p360 = pneg %p69
        %p361 = pneg %p66
        %p362 = pneg %p90
        %p363 = pneg %p87
        %p364 = pneg %p111
        %p365 = pneg %p108
        %p366 = pneg %p132
        %p367 = pneg %p129
        %p368 = pneg %p153
        %p369 = pneg %p150
        %p370 = pneg %p174
        %p371 = pneg %p171
        %p372 = pneg %p200
        %p373 = pneg %p197
        %s374 = sand.u32 %s187, 1
        %s375 = scalar_lea.sflag [#allocation4], %s374
        %s376 = sand.u32 %s187, 1
        %s377 = smul.addr %s376, 16
        %s378 = scalar_lea.vmem [#allocation14], %s377
        %v380 = vld [vmem:[%s324] sm:$0xff]
        %v381 = vpack.c.bf16 %v380, %v380
        %v382 = vld [vmem:[#allocation5] sm:$0xf]
        %v383 = vld [vmem:[#allocation5 + $0x4] sm:$0xf]
        %v384 = vld [vmem:[#allocation5 + $0x8] sm:$0xf]
        %v385 = vld [vmem:[#allocation5 + $0xc] sm:$0xf]
        %v386 = vld [vmem:[#allocation13] sm:$0x1]
        %v388 = vlaneseq
        %v389 = vshrl.u32 %v388, 7
        %v390 = vsub.s32 0, %v389
        %v391 = vrot.slane %v386, %v390
        %v397 = vunpack.c.l.b16 %v382
        %v398 = vunpack.c.l.b16 %v383
        %v399 = vunpack.c.l.b16 %v384
        %v400 = vunpack.c.l.b16 %v385
        %v401 = vpack.c.b16 %v398, %v397
        %v402 = vpack.c.b16 %v400, %v399
        %vm405 = vcmask 261120
        %v407 = vsel %vm405, %v381, 0
        %409 = vmatprep.subr.bf16.mxu0 0
        %410 = vmatpush1.bf16.msra.mxu0 0
        %411 = vmatprep.subr.bf16.mxu0 0
        %412 = vmatpush1.bf16.msra.mxu0 0
        %413 = vmatprep.subr.bf16.mxu0 0
        %414 = vmatpush1.bf16.msra.mxu0 0
        %415 = vmatprep.subr.bf16.mxu0 0
        %416 = vmatpush1.bf16.msra.mxu0 0
        %417 = vmatprep.subr.bf16.mxu0 0
        %418 = vmatpush1.bf16.msra.mxu0 0
        %419 = vmatprep.subr.bf16.mxu0 0
        %420 = vmatpush1.bf16.msra.mxu0 0
        %421 = vmatprep.subr.bf16.mxu0 0
        %422 = vmatpush1.bf16.msra.mxu0 %v402
        %423 = vmatprep.subr.bf16.mxu0 0
        %424 = vmatpush1.bf16.msra.mxu0 %v401
        %425 = vmatprep.subr.bf16.mxu0 0
        %426 = vmatpush2.bf16.msra.mxu0 0
        %427 = vmatprep.subr.bf16.mxu0 0
        %428 = vmatpush2.bf16.msra.mxu0 0
        %429 = vmatprep.subr.bf16.mxu0 0
        %430 = vmatpush2.bf16.msra.mxu0 0
        %431 = vmatprep.subr.bf16.mxu0 0
        %432 = vmatpush2.bf16.msra.mxu0 0
        %433 = vmatprep.subr.bf16.mxu0 0
        %434 = vmatpush2.bf16.msra.mxu0 0
        %435 = vmatprep.subr.bf16.mxu0 0
        %436 = vmatpush2.bf16.msra.mxu0 0
        %437 = vmatprep.subr.bf16.mxu0 0
        %438 = vmatpush2.bf16.msra.mxu0 0
        %439 = vmatprep.subr.bf16.mxu0 0
        %440 = vmatpush2.bf16.msra.mxu0 0
        %441 = vmatprep.mubr.bf16.mxu0 0
        %442 = vmatmul.mubr.bf16.gmra.mxu0 %v407
        %v443 = vpop.f32.mrf.mxu0
        %v444 = vadd.f32 %v391, %v443
        %v445 = vpop.f32.mrf.mxu0
        %v446 = vpop.f32.mrf.mxu0
        %v447 = vpop.f32.mrf.mxu0
        %448 = vdwg.mxu0
        %vm449 = vcmp.gt.f32.partialorder %v444, 0.0
        %v450 = vmul.f32 %v444, 0.2
        %v451 = vsel %vm449, %v444, %v450
        %v452 = vpack.c.bf16 %v451, %v451
        %v453 = vld [vmem:[#allocation7] sm:$0xff]
        %v454 = vld [vmem:[#allocation7 + $0x8] sm:$0xff]
        %v455 = vld [vmem:[#allocation7 + $0x10] sm:$0xff]
        %v456 = vld [vmem:[#allocation7 + $0x18] sm:$0xff]
        %v457 = vld [vmem:[#allocation7 + $0x20] sm:$0xff]
        %v458 = vld [vmem:[#allocation7 + $0x28] sm:$0xff]
        %v459 = vld [vmem:[#allocation7 + $0x30] sm:$0xff]
        %v460 = vld [vmem:[#allocation7 + $0x38] sm:$0xff]
        %v461 = vld [vmem:[#allocation7 + $0x40] sm:$0xff]
        %v462 = vld [vmem:[#allocation7 + $0x48] sm:$0xff]
        %v463 = vld [vmem:[#allocation7 + $0x50] sm:$0xff]
        %v464 = vld [vmem:[#allocation7 + $0x58] sm:$0xff]
        %v465 = vld [vmem:[#allocation7 + $0x60] sm:$0xff]
        %v466 = vld [vmem:[#allocation7 + $0x68] sm:$0xff]
        %v467 = vld [vmem:[#allocation7 + $0x70] sm:$0xff]
        %v468 = vld [vmem:[#allocation7 + $0x78] sm:$0xff]
        %v485 = vunpack.c.l.b16 %v453
        %v486 = vunpack.c.h.b16 %v453
        %v487 = vunpack.c.l.b16 %v454
        %v488 = vunpack.c.h.b16 %v454
        %v489 = vunpack.c.l.b16 %v455
        %v490 = vunpack.c.h.b16 %v455
        %v491 = vunpack.c.l.b16 %v456
        %v492 = vunpack.c.h.b16 %v456
        %v493 = vunpack.c.l.b16 %v457
        %v494 = vunpack.c.h.b16 %v457
        %v495 = vunpack.c.l.b16 %v458
        %v496 = vunpack.c.h.b16 %v458
        %v497 = vunpack.c.l.b16 %v459
        %v498 = vunpack.c.h.b16 %v459
        %v499 = vunpack.c.l.b16 %v460
        %v500 = vunpack.c.h.b16 %v460
        %v501 = vunpack.c.l.b16 %v461
        %v502 = vunpack.c.h.b16 %v461
        %v503 = vunpack.c.l.b16 %v462
        %v504 = vunpack.c.h.b16 %v462
        %v505 = vunpack.c.l.b16 %v463
        %v506 = vunpack.c.h.b16 %v463
        %v507 = vunpack.c.l.b16 %v464
        %v508 = vunpack.c.h.b16 %v464
        %v509 = vunpack.c.l.b16 %v465
        %v510 = vunpack.c.h.b16 %v465
        %v511 = vunpack.c.l.b16 %v466
        %v512 = vunpack.c.h.b16 %v466
        %v513 = vunpack.c.l.b16 %v467
        %v514 = vunpack.c.h.b16 %v467
        %v515 = vunpack.c.l.b16 %v468
        %v516 = vunpack.c.h.b16 %v468
        %v517 = vpack.c.b16 %v487, %v485
        %v518 = vpack.c.b16 %v488, %v486
        %v519 = vpack.c.b16 %v491, %v489
        %v520 = vpack.c.b16 %v492, %v490
        %v521 = vpack.c.b16 %v495, %v493
        %v522 = vpack.c.b16 %v496, %v494
        %v523 = vpack.c.b16 %v499, %v497
        %v524 = vpack.c.b16 %v500, %v498
        %v525 = vpack.c.b16 %v503, %v501
        %v526 = vpack.c.b16 %v504, %v502
        %v527 = vpack.c.b16 %v507, %v505
        %v528 = vpack.c.b16 %v508, %v506
        %v529 = vpack.c.b16 %v511, %v509
        %v530 = vpack.c.b16 %v512, %v510
        %v531 = vpack.c.b16 %v515, %v513
        %v532 = vpack.c.b16 %v516, %v514
        %549 = vmatprep.subr.bf16.mxu0 %v532
        %550 = vmatpush1.bf16.msra.mxu0 %v531
        %551 = vmatprep.subr.bf16.mxu0 %v530
        %552 = vmatpush1.bf16.msra.mxu0 %v529
        %553 = vmatprep.subr.bf16.mxu0 %v528
        %554 = vmatpush1.bf16.msra.mxu0 %v527
        %555 = vmatprep.subr.bf16.mxu0 %v526
        %556 = vmatpush1.bf16.msra.mxu0 %v525
        %557 = vmatprep.subr.bf16.mxu0 %v524
        %558 = vmatpush1.bf16.msra.mxu0 %v523
        %559 = vmatprep.subr.bf16.mxu0 %v522
        %560 = vmatpush1.bf16.msra.mxu0 %v521
        %561 = vmatprep.subr.bf16.mxu0 %v520
        %562 = vmatpush1.bf16.msra.mxu0 %v519
        %563 = vmatprep.subr.bf16.mxu0 %v518
        %564 = vmatpush1.bf16.msra.mxu0 %v517
        %565 = vmatprep.subr.bf16.mxu0 0
        %566 = vmatpush2.bf16.msra.mxu0 0
        %567 = vmatprep.subr.bf16.mxu0 0
        %568 = vmatpush2.bf16.msra.mxu0 0
        %569 = vmatprep.subr.bf16.mxu0 0
        %570 = vmatpush2.bf16.msra.mxu0 0
        %571 = vmatprep.subr.bf16.mxu0 0
        %572 = vmatpush2.bf16.msra.mxu0 0
        %573 = vmatprep.subr.bf16.mxu0 0
        %574 = vmatpush2.bf16.msra.mxu0 0
        %575 = vmatprep.subr.bf16.mxu0 0
        %576 = vmatpush2.bf16.msra.mxu0 0
        %577 = vmatprep.subr.bf16.mxu0 0
        %578 = vmatpush2.bf16.msra.mxu0 0
        %579 = vmatprep.subr.bf16.mxu0 0
        %580 = vmatpush2.bf16.msra.mxu0 0
        %581 = vmatprep.mubr.bf16.mxu0 0
        %582 = vmatmul.mubr.bf16.gmra.mxu0 %v452
        %v583 = vpop.f32.mrf.mxu0
        %v584 = vadd.f32 0.0, %v583
        %v585 = vpop.f32.mrf.mxu0
        %v586 = vadd.f32 0.0, %v585
        %v587 = vpop.f32.mrf.mxu0
        %v588 = vpop.f32.mrf.mxu0
        %589 = vdwg.mxu0
        %v590 = vld [vmem:[#allocation13 + $0x1] sm:$0x3]
        %v591 = vld [vmem:[#allocation13 + $0x3] sm:$0x3]
        %v592 = vrot.slane %v584, 4
        %v593 = vadd.f32 %v584, %v592
        %v594 = vrot.slane %v593, 2
        %v595 = vadd.f32 %v593, %v594
        %v596 = vrot.slane %v595, 1
        %v597 = vadd.f32 %v595, %v596
        %v598 = vrot.slane %v586, 4
        %v599 = vadd.f32 %v586, %v598
        %v600 = vrot.slane %v599, 2
        %v601 = vadd.f32 %v599, %v600
        %v602 = vrot.slane %v601, 1
        %v603 = vadd.f32 %v601, %v602
        %v604 = vmul.f32 %v584, %v584
        %v605 = vmul.f32 %v586, %v586
        %v606 = vrot.slane %v604, 4
        %v607 = vadd.f32 %v604, %v606
        %v608 = vrot.slane %v607, 2
        %v609 = vadd.f32 %v607, %v608
        %v610 = vrot.slane %v609, 1
        %v611 = vadd.f32 %v609, %v610
        %v612 = vrot.slane %v605, 4
        %v613 = vadd.f32 %v605, %v612
        %v614 = vrot.slane %v613, 2
        %v615 = vadd.f32 %v613, %v614
        %v616 = vrot.slane %v615, 1
        %v617 = vadd.f32 %v615, %v616
        %v618 = vmul.f32 %v597, 0.125
        %v619 = vmul.f32 %v603, 0.125
        %v620 = vmul.f32 %v611, 0.125
        %v621 = vmul.f32 %v617, 0.125
        %v622 = vmul.f32 %v618, %v618
        %v623 = vmul.f32 %v619, %v619
        %v624 = vsub.f32 %v620, %v622
        %v625 = vsub.f32 %v621, %v623
        %v626 = vsub.f32 %v584, %v618
        %v627 = vsub.f32 %v586, %v619
        %v629 = vlaneseq
        %v630 = vshrl.u32 %v629, 7
        %v631 = vsub.s32 0, %v630
        %v632 = vrot.slane %v590, %v631
        %v633 = vlaneseq
        %v634 = vshrl.u32 %v633, 7
        %v635 = vsub.s32 1, %v634
        %v636 = vrot.slane %v590, %v635
        %v639 = vmul.f32 %v632, %v626
        %v640 = vmul.f32 %v636, %v627
        %v641 = vadd.f32 %v624, 0.8
        %v642 = vadd.f32 %v625, 0.8
        %v643 = vrsqrt.pop %v641
        %v644 = vrsqrt.pop %v642
        %v645 = vmul.f32 %v639, %v643
        %v646 = vmul.f32 %v640, %v644
        %v648 = vlaneseq
        %v649 = vshrl.u32 %v648, 7
        %v650 = vsub.s32 0, %v649
        %v651 = vrot.slane %v591, %v650
        %v652 = vlaneseq
        %v653 = vshrl.u32 %v652, 7
        %v654 = vsub.s32 1, %v653
        %v655 = vrot.slane %v591, %v654
        %v658 = vadd.f32 %v645, %v651
        %v659 = vadd.f32 %v646, %v655
        %vm660 = vcmp.gt.f32.partialorder %v658, 0.0
        %vm661 = vcmp.gt.f32.partialorder %v659, 0.0
        %v662 = vmul.f32 %v658, 0.2
        %v663 = vmul.f32 %v659, 0.2
        %v664 = vsel %vm660, %v658, %v662
        %v665 = vsel %vm661, %v659, %v663
        %v666 = vpack.c.bf16 %v664, %v664
        %v667 = vpack.c.bf16 %v665, %v665
        %v668 = vld [vmem:[#allocation8] sm:$0xff]
        %v669 = vld [vmem:[#allocation8 + $0x8] sm:$0xff]
        %v670 = vld [vmem:[#allocation8 + $0x10] sm:$0xff]
        %v671 = vld [vmem:[#allocation8 + $0x18] sm:$0xff]
        %v672 = vld [vmem:[#allocation8 + $0x20] sm:$0xff]
        %v673 = vld [vmem:[#allocation8 + $0x28] sm:$0xff]
        %v674 = vld [vmem:[#allocation8 + $0x30] sm:$0xff]
        %v675 = vld [vmem:[#allocation8 + $0x38] sm:$0xff]
        %v676 = vld [vmem:[#allocation8 + $0x40] sm:$0xff]
        %v677 = vld [vmem:[#allocation8 + $0x48] sm:$0xff]
        %v678 = vld [vmem:[#allocation8 + $0x50] sm:$0xff]
        %v679 = vld [vmem:[#allocation8 + $0x58] sm:$0xff]
        %v680 = vld [vmem:[#allocation8 + $0x60] sm:$0xff]
        %v681 = vld [vmem:[#allocation8 + $0x68] sm:$0xff]
        %v682 = vld [vmem:[#allocation8 + $0x70] sm:$0xff]
        %v683 = vld [vmem:[#allocation8 + $0x78] sm:$0xff]
        %v684 = vld [vmem:[#allocation8 + $0x80] sm:$0xff]
        %v685 = vld [vmem:[#allocation8 + $0x88] sm:$0xff]
        %v686 = vld [vmem:[#allocation8 + $0x90] sm:$0xff]
        %v687 = vld [vmem:[#allocation8 + $0x98] sm:$0xff]
        %v688 = vld [vmem:[#allocation8 + $0xa0] sm:$0xff]
        %v689 = vld [vmem:[#allocation8 + $0xa8] sm:$0xff]
        %v690 = vld [vmem:[#allocation8 + $0xb0] sm:$0xff]
        %v691 = vld [vmem:[#allocation8 + $0xb8] sm:$0xff]
        %v692 = vld [vmem:[#allocation8 + $0xc0] sm:$0xff]
        %v693 = vld [vmem:[#allocation8 + $0xc8] sm:$0xff]
        %v694 = vld [vmem:[#allocation8 + $0xd0] sm:$0xff]
        %v695 = vld [vmem:[#allocation8 + $0xd8] sm:$0xff]
        %v696 = vld [vmem:[#allocation8 + $0xe0] sm:$0xff]
        %v697 = vld [vmem:[#allocation8 + $0xe8] sm:$0xff]
        %v698 = vld [vmem:[#allocation8 + $0xf0] sm:$0xff]
        %v699 = vld [vmem:[#allocation8 + $0xf8] sm:$0xff]
        %v700 = vld [vmem:[#allocation8 + $0x100] sm:$0xff]
        %v701 = vld [vmem:[#allocation8 + $0x108] sm:$0xff]
        %v702 = vld [vmem:[#allocation8 + $0x110] sm:$0xff]
        %v703 = vld [vmem:[#allocation8 + $0x118] sm:$0xff]
        %v704 = vld [vmem:[#allocation8 + $0x120] sm:$0xff]
        %v705 = vld [vmem:[#allocation8 + $0x128] sm:$0xff]
        %v706 = vld [vmem:[#allocation8 + $0x130] sm:$0xff]
        %v707 = vld [vmem:[#allocation8 + $0x138] sm:$0xff]
        %v708 = vld [vmem:[#allocation8 + $0x140] sm:$0xff]
        %v709 = vld [vmem:[#allocation8 + $0x148] sm:$0xff]
        %v710 = vld [vmem:[#allocation8 + $0x150] sm:$0xff]
        %v711 = vld [vmem:[#allocation8 + $0x158] sm:$0xff]
        %v712 = vld [vmem:[#allocation8 + $0x160] sm:$0xff]
        %v713 = vld [vmem:[#allocation8 + $0x168] sm:$0xff]
        %v714 = vld [vmem:[#allocation8 + $0x170] sm:$0xff]
        %v715 = vld [vmem:[#allocation8 + $0x178] sm:$0xff]
        %v716 = vld [vmem:[#allocation8 + $0x180] sm:$0xff]
        %v717 = vld [vmem:[#allocation8 + $0x188] sm:$0xff]
        %v718 = vld [vmem:[#allocation8 + $0x190] sm:$0xff]
        %v719 = vld [vmem:[#allocation8 + $0x198] sm:$0xff]
        %v720 = vld [vmem:[#allocation8 + $0x1a0] sm:$0xff]
        %v721 = vld [vmem:[#allocation8 + $0x1a8] sm:$0xff]
        %v722 = vld [vmem:[#allocation8 + $0x1b0] sm:$0xff]
        %v723 = vld [vmem:[#allocation8 + $0x1b8] sm:$0xff]
        %v724 = vld [vmem:[#allocation8 + $0x1c0] sm:$0xff]
        %v725 = vld [vmem:[#allocation8 + $0x1c8] sm:$0xff]
        %v726 = vld [vmem:[#allocation8 + $0x1d0] sm:$0xff]
        %v727 = vld [vmem:[#allocation8 + $0x1d8] sm:$0xff]
        %v728 = vld [vmem:[#allocation8 + $0x1e0] sm:$0xff]
        %v729 = vld [vmem:[#allocation8 + $0x1e8] sm:$0xff]
        %v730 = vld [vmem:[#allocation8 + $0x1f0] sm:$0xff]
        %v731 = vld [vmem:[#allocation8 + $0x1f8] sm:$0xff]
        %v796 = vunpack.c.l.b16 %v668
        %v797 = vunpack.c.h.b16 %v668
        %v798 = vunpack.c.l.b16 %v669
        %v799 = vunpack.c.h.b16 %v669
        %v800 = vunpack.c.l.b16 %v670
        %v801 = vunpack.c.h.b16 %v670
        %v802 = vunpack.c.l.b16 %v671
        %v803 = vunpack.c.h.b16 %v671
        %v804 = vunpack.c.l.b16 %v672
        %v805 = vunpack.c.h.b16 %v672
        %v806 = vunpack.c.l.b16 %v673
        %v807 = vunpack.c.h.b16 %v673
        %v808 = vunpack.c.l.b16 %v674
        %v809 = vunpack.c.h.b16 %v674
        %v810 = vunpack.c.l.b16 %v675
        %v811 = vunpack.c.h.b16 %v675
        %v812 = vunpack.c.l.b16 %v676
        %v813 = vunpack.c.h.b16 %v676
        %v814 = vunpack.c.l.b16 %v677
        %v815 = vunpack.c.h.b16 %v677
        %v816 = vunpack.c.l.b16 %v678
        %v817 = vunpack.c.h.b16 %v678
        %v818 = vunpack.c.l.b16 %v679
        %v819 = vunpack.c.h.b16 %v679
        %v820 = vunpack.c.l.b16 %v680
        %v821 = vunpack.c.h.b16 %v680
        %v822 = vunpack.c.l.b16 %v681
        %v823 = vunpack.c.h.b16 %v681
        %v824 = vunpack.c.l.b16 %v682
        %v825 = vunpack.c.h.b16 %v682
        %v826 = vunpack.c.l.b16 %v683
        %v827 = vunpack.c.h.b16 %v683
        %v828 = vunpack.c.l.b16 %v684
        %v829 = vunpack.c.h.b16 %v684
        %v830 = vunpack.c.l.b16 %v685
        %v831 = vunpack.c.h.b16 %v685
        %v832 = vunpack.c.l.b16 %v686
        %v833 = vunpack.c.h.b16 %v686
        %v834 = vunpack.c.l.b16 %v687
        %v835 = vunpack.c.h.b16 %v687
        %v836 = vunpack.c.l.b16 %v688
        %v837 = vunpack.c.h.b16 %v688
        %v838 = vunpack.c.l.b16 %v689
        %v839 = vunpack.c.h.b16 %v689
        %v840 = vunpack.c.l.b16 %v690
        %v841 = vunpack.c.h.b16 %v690
        %v842 = vunpack.c.l.b16 %v691
        %v843 = vunpack.c.h.b16 %v691
        %v844 = vunpack.c.l.b16 %v692
        %v845 = vunpack.c.h.b16 %v692
        %v846 = vunpack.c.l.b16 %v693
        %v847 = vunpack.c.h.b16 %v693
        %v848 = vunpack.c.l.b16 %v694
        %v849 = vunpack.c.h.b16 %v694
        %v850 = vunpack.c.l.b16 %v695
        %v851 = vunpack.c.h.b16 %v695
        %v852 = vunpack.c.l.b16 %v696
        %v853 = vunpack.c.h.b16 %v696
        %v854 = vunpack.c.l.b16 %v697
        %v855 = vunpack.c.h.b16 %v697
        %v856 = vunpack.c.l.b16 %v698
        %v857 = vunpack.c.h.b16 %v698
        %v858 = vunpack.c.l.b16 %v699
        %v859 = vunpack.c.h.b16 %v699
        %v860 = vunpack.c.l.b16 %v700
        %v861 = vunpack.c.h.b16 %v700
        %v862 = vunpack.c.l.b16 %v701
        %v863 = vunpack.c.h.b16 %v701
        %v864 = vunpack.c.l.b16 %v702
        %v865 = vunpack.c.h.b16 %v702
        %v866 = vunpack.c.l.b16 %v703
        %v867 = vunpack.c.h.b16 %v703
        %v868 = vunpack.c.l.b16 %v704
        %v869 = vunpack.c.h.b16 %v704
        %v870 = vunpack.c.l.b16 %v705
        %v871 = vunpack.c.h.b16 %v705
        %v872 = vunpack.c.l.b16 %v706
        %v873 = vunpack.c.h.b16 %v706
        %v874 = vunpack.c.l.b16 %v707
        %v875 = vunpack.c.h.b16 %v707
        %v876 = vunpack.c.l.b16 %v708
        %v877 = vunpack.c.h.b16 %v708
        %v878 = vunpack.c.l.b16 %v709
        %v879 = vunpack.c.h.b16 %v709
        %v880 = vunpack.c.l.b16 %v710
        %v881 = vunpack.c.h.b16 %v710
        %v882 = vunpack.c.l.b16 %v711
        %v883 = vunpack.c.h.b16 %v711
        %v884 = vunpack.c.l.b16 %v712
        %v885 = vunpack.c.h.b16 %v712
        %v886 = vunpack.c.l.b16 %v713
        %v887 = vunpack.c.h.b16 %v713
        %v888 = vunpack.c.l.b16 %v714
        %v889 = vunpack.c.h.b16 %v714
        %v890 = vunpack.c.l.b16 %v715
        %v891 = vunpack.c.h.b16 %v715
        %v892 = vunpack.c.l.b16 %v716
        %v893 = vunpack.c.h.b16 %v716
        %v894 = vunpack.c.l.b16 %v717
        %v895 = vunpack.c.h.b16 %v717
        %v896 = vunpack.c.l.b16 %v718
        %v897 = vunpack.c.h.b16 %v718
        %v898 = vunpack.c.l.b16 %v719
        %v899 = vunpack.c.h.b16 %v719
        %v900 = vunpack.c.l.b16 %v720
        %v901 = vunpack.c.h.b16 %v720
        %v902 = vunpack.c.l.b16 %v721
        %v903 = vunpack.c.h.b16 %v721
        %v904 = vunpack.c.l.b16 %v722
        %v905 = vunpack.c.h.b16 %v722
        %v906 = vunpack.c.l.b16 %v723
        %v907 = vunpack.c.h.b16 %v723
        %v908 = vunpack.c.l.b16 %v724
        %v909 = vunpack.c.h.b16 %v724
        %v910 = vunpack.c.l.b16 %v725
        %v911 = vunpack.c.h.b16 %v725
        %v912 = vunpack.c.l.b16 %v726
        %v913 = vunpack.c.h.b16 %v726
        %v914 = vunpack.c.l.b16 %v727
        %v915 = vunpack.c.h.b16 %v727
        %v916 = vunpack.c.l.b16 %v728
        %v917 = vunpack.c.h.b16 %v728
        %v918 = vunpack.c.l.b16 %v729
        %v919 = vunpack.c.h.b16 %v729
        %v920 = vunpack.c.l.b16 %v730
        %v921 = vunpack.c.h.b16 %v730
        %v922 = vunpack.c.l.b16 %v731
        %v923 = vunpack.c.h.b16 %v731
        %v924 = vpack.c.b16 %v800, %v796
        %v925 = vpack.c.b16 %v801, %v797
        %v926 = vpack.c.b16 %v802, %v798
        %v927 = vpack.c.b16 %v803, %v799
        %v928 = vpack.c.b16 %v808, %v804
        %v929 = vpack.c.b16 %v809, %v805
        %v930 = vpack.c.b16 %v810, %v806
        %v931 = vpack.c.b16 %v811, %v807
        %v932 = vpack.c.b16 %v816, %v812
        %v933 = vpack.c.b16 %v817, %v813
        %v934 = vpack.c.b16 %v818, %v814
        %v935 = vpack.c.b16 %v819, %v815
        %v936 = vpack.c.b16 %v824, %v820
        %v937 = vpack.c.b16 %v825, %v821
        %v938 = vpack.c.b16 %v826, %v822
        %v939 = vpack.c.b16 %v827, %v823
        %v940 = vpack.c.b16 %v832, %v828
        %v941 = vpack.c.b16 %v833, %v829
        %v942 = vpack.c.b16 %v834, %v830
        %v943 = vpack.c.b16 %v835, %v831
        %v944 = vpack.c.b16 %v840, %v836
        %v945 = vpack.c.b16 %v841, %v837
        %v946 = vpack.c.b16 %v842, %v838
        %v947 = vpack.c.b16 %v843, %v839
        %v948 = vpack.c.b16 %v848, %v844
        %v949 = vpack.c.b16 %v849, %v845
        %v950 = vpack.c.b16 %v850, %v846
        %v951 = vpack.c.b16 %v851, %v847
        %v952 = vpack.c.b16 %v856, %v852
        %v953 = vpack.c.b16 %v857, %v853
        %v954 = vpack.c.b16 %v858, %v854
        %v955 = vpack.c.b16 %v859, %v855
        %v956 = vpack.c.b16 %v864, %v860
        %v957 = vpack.c.b16 %v865, %v861
        %v958 = vpack.c.b16 %v866, %v862
        %v959 = vpack.c.b16 %v867, %v863
        %v960 = vpack.c.b16 %v872, %v868
        %v961 = vpack.c.b16 %v873, %v869
        %v962 = vpack.c.b16 %v874, %v870
        %v963 = vpack.c.b16 %v875, %v871
        %v964 = vpack.c.b16 %v880, %v876
        %v965 = vpack.c.b16 %v881, %v877
        %v966 = vpack.c.b16 %v882, %v878
        %v967 = vpack.c.b16 %v883, %v879
        %v968 = vpack.c.b16 %v888, %v884
        %v969 = vpack.c.b16 %v889, %v885
        %v970 = vpack.c.b16 %v890, %v886
        %v971 = vpack.c.b16 %v891, %v887
        %v972 = vpack.c.b16 %v896, %v892
        %v973 = vpack.c.b16 %v897, %v893
        %v974 = vpack.c.b16 %v898, %v894
        %v975 = vpack.c.b16 %v899, %v895
        %v976 = vpack.c.b16 %v904, %v900
        %v977 = vpack.c.b16 %v905, %v901
        %v978 = vpack.c.b16 %v906, %v902
        %v979 = vpack.c.b16 %v907, %v903
        %v980 = vpack.c.b16 %v912, %v908
        %v981 = vpack.c.b16 %v913, %v909
        %v982 = vpack.c.b16 %v914, %v910
        %v983 = vpack.c.b16 %v915, %v911
        %v984 = vpack.c.b16 %v920, %v916
        %v985 = vpack.c.b16 %v921, %v917
        %v986 = vpack.c.b16 %v922, %v918
        %v987 = vpack.c.b16 %v923, %v919
        %1052 = vmatprep.subr.bf16.mxu0 %v953
        %1053 = vmatpush1.bf16.msra.mxu0 %v952
        %1054 = vmatprep.subr.bf16.mxu0 %v949
        %1055 = vmatpush1.bf16.msra.mxu0 %v948
        %1056 = vmatprep.subr.bf16.mxu0 %v945
        %1057 = vmatpush1.bf16.msra.mxu0 %v944
        %1058 = vmatprep.subr.bf16.mxu0 %v941
        %1059 = vmatpush1.bf16.msra.mxu0 %v940
        %1060 = vmatprep.subr.bf16.mxu0 %v937
        %1061 = vmatpush1.bf16.msra.mxu0 %v936
        %1062 = vmatprep.subr.bf16.mxu0 %v933
        %1063 = vmatpush1.bf16.msra.mxu0 %v932
        %1064 = vmatprep.subr.bf16.mxu0 %v929
        %1065 = vmatpush1.bf16.msra.mxu0 %v928
        %1066 = vmatprep.subr.bf16.mxu0 %v925
        %1067 = vmatpush1.bf16.msra.mxu0 %v924
        %1068 = vmatprep.subr.bf16.mxu0 %v985
        %1069 = vmatpush2.bf16.msra.mxu0 %v984
        %1070 = vmatprep.subr.bf16.mxu0 %v981
        %1071 = vmatpush2.bf16.msra.mxu0 %v980
        %1072 = vmatprep.subr.bf16.mxu0 %v977
        %1073 = vmatpush2.bf16.msra.mxu0 %v976
        %1074 = vmatprep.subr.bf16.mxu0 %v973
        %1075 = vmatpush2.bf16.msra.mxu0 %v972
        %1076 = vmatprep.subr.bf16.mxu0 %v969
        %1077 = vmatpush2.bf16.msra.mxu0 %v968
        %1078 = vmatprep.subr.bf16.mxu0 %v965
        %1079 = vmatpush2.bf16.msra.mxu0 %v964
        %1080 = vmatprep.subr.bf16.mxu0 %v961
        %1081 = vmatpush2.bf16.msra.mxu0 %v960
        %1082 = vmatprep.subr.bf16.mxu0 %v957
        %1083 = vmatpush2.bf16.msra.mxu0 %v956
        %1084 = vmatprep.mubr.bf16.mxu0 %v667
        %1085 = vmatmul.mubr.bf16.gmra.mxu0 %v666
        %v1086 = vpop.f32.mrf.mxu0
        %v1087 = vadd.f32 0.0, %v1086
        %v1088 = vpop.f32.mrf.mxu0
        %v1089 = vadd.f32 0.0, %v1088
        %v1090 = vpop.f32.mrf.mxu0
        %v1091 = vpop.f32.mrf.mxu0
        %1092 = vdwg.mxu0
        %1093 = vmatprep.subr.bf16.mxu0 %v955
        %1094 = vmatpush1.bf16.msra.mxu0 %v954
        %1095 = vmatprep.subr.bf16.mxu0 %v951
        %1096 = vmatpush1.bf16.msra.mxu0 %v950
        %1097 = vmatprep.subr.bf16.mxu0 %v947
        %1098 = vmatpush1.bf16.msra.mxu0 %v946
        %1099 = vmatprep.subr.bf16.mxu0 %v943
        %1100 = vmatpush1.bf16.msra.mxu0 %v942
        %1101 = vmatprep.subr.bf16.mxu0 %v939
        %1102 = vmatpush1.bf16.msra.mxu0 %v938
        %1103 = vmatprep.subr.bf16.mxu0 %v935
        %1104 = vmatpush1.bf16.msra.mxu0 %v934
        %1105 = vmatprep.subr.bf16.mxu0 %v931
        %1106 = vmatpush1.bf16.msra.mxu0 %v930
        %1107 = vmatprep.subr.bf16.mxu0 %v927
        %1108 = vmatpush1.bf16.msra.mxu0 %v926
        %1109 = vmatprep.subr.bf16.mxu0 %v987
        %1110 = vmatpush2.bf16.msra.mxu0 %v986
        %1111 = vmatprep.subr.bf16.mxu0 %v983
        %1112 = vmatpush2.bf16.msra.mxu0 %v982
        %1113 = vmatprep.subr.bf16.mxu0 %v979
        %1114 = vmatpush2.bf16.msra.mxu0 %v978
        %1115 = vmatprep.subr.bf16.mxu0 %v975
        %1116 = vmatpush2.bf16.msra.mxu0 %v974
        %1117 = vmatprep.subr.bf16.mxu0 %v971
        %1118 = vmatpush2.bf16.msra.mxu0 %v970
        %1119 = vmatprep.subr.bf16.mxu0 %v967
        %1120 = vmatpush2.bf16.msra.mxu0 %v966
        %1121 = vmatprep.subr.bf16.mxu0 %v963
        %1122 = vmatpush2.bf16.msra.mxu0 %v962
        %1123 = vmatprep.subr.bf16.mxu0 %v959
        %1124 = vmatpush2.bf16.msra.mxu0 %v958
        %1125 = vmatprep.mubr.bf16.mxu0 %v667
        %1126 = vmatmul.mubr.bf16.gmra.mxu0 %v666
        %v1127 = vpop.f32.mrf.mxu0
        %v1128 = vadd.f32 0.0, %v1127
        %v1129 = vpop.f32.mrf.mxu0
        %v1130 = vadd.f32 0.0, %v1129
        %v1131 = vpop.f32.mrf.mxu0
        %v1132 = vpop.f32.mrf.mxu0
        %1133 = vdwg.mxu0
        %v1134 = vld [vmem:[#allocation13 + $0x5] sm:$0xf]
        %v1135 = vld [vmem:[#allocation13 + $0x9] sm:$0xf]
        %v1136 = vrot.slane %v1087, 4
        %v1137 = vadd.f32 %v1087, %v1136
        %v1138 = vrot.slane %v1137, 2
        %v1139 = vadd.f32 %v1137, %v1138
        %v1140 = vrot.slane %v1139, 1
        %v1141 = vadd.f32 %v1139, %v1140
        %v1142 = vrot.slane %v1089, 4
        %v1143 = vadd.f32 %v1089, %v1142
        %v1144 = vrot.slane %v1143, 2
        %v1145 = vadd.f32 %v1143, %v1144
        %v1146 = vrot.slane %v1145, 1
        %v1147 = vadd.f32 %v1145, %v1146
        %v1148 = vrot.slane %v1128, 4
        %v1149 = vadd.f32 %v1128, %v1148
        %v1150 = vrot.slane %v1149, 2
        %v1151 = vadd.f32 %v1149, %v1150
        %v1152 = vrot.slane %v1151, 1
        %v1153 = vadd.f32 %v1151, %v1152
        %v1154 = vrot.slane %v1130, 4
        %v1155 = vadd.f32 %v1130, %v1154
        %v1156 = vrot.slane %v1155, 2
        %v1157 = vadd.f32 %v1155, %v1156
        %v1158 = vrot.slane %v1157, 1
        %v1159 = vadd.f32 %v1157, %v1158
        %v1160 = vmul.f32 %v1087, %v1087
        %v1161 = vmul.f32 %v1089, %v1089
        %v1162 = vmul.f32 %v1128, %v1128
        %v1163 = vmul.f32 %v1130, %v1130
        %v1164 = vrot.slane %v1160, 4
        %v1165 = vadd.f32 %v1160, %v1164
        %v1166 = vrot.slane %v1165, 2
        %v1167 = vadd.f32 %v1165, %v1166
        %v1168 = vrot.slane %v1167, 1
        %v1169 = vadd.f32 %v1167, %v1168
        %v1170 = vrot.slane %v1161, 4
        %v1171 = vadd.f32 %v1161, %v1170
        %v1172 = vrot.slane %v1171, 2
        %v1173 = vadd.f32 %v1171, %v1172
        %v1174 = vrot.slane %v1173, 1
        %v1175 = vadd.f32 %v1173, %v1174
        %v1176 = vrot.slane %v1162, 4
        %v1177 = vadd.f32 %v1162, %v1176
        %v1178 = vrot.slane %v1177, 2
        %v1179 = vadd.f32 %v1177, %v1178
        %v1180 = vrot.slane %v1179, 1
        %v1181 = vadd.f32 %v1179, %v1180
        %v1182 = vrot.slane %v1163, 4
        %v1183 = vadd.f32 %v1163, %v1182
        %v1184 = vrot.slane %v1183, 2
        %v1185 = vadd.f32 %v1183, %v1184
        %v1186 = vrot.slane %v1185, 1
        %v1187 = vadd.f32 %v1185, %v1186
        %v1188 = vmul.f32 %v1141, 0.125
        %v1189 = vmul.f32 %v1147, 0.125
        %v1190 = vmul.f32 %v1153, 0.125
        %v1191 = vmul.f32 %v1159, 0.125
        %v1192 = vmul.f32 %v1169, 0.125
        %v1193 = vmul.f32 %v1175, 0.125
        %v1194 = vmul.f32 %v1181, 0.125
        %v1195 = vmul.f32 %v1187, 0.125
        %v1196 = vmul.f32 %v1188, %v1188
        %v1197 = vmul.f32 %v1189, %v1189
        %v1198 = vmul.f32 %v1190, %v1190
        %v1199 = vmul.f32 %v1191, %v1191
        %v1200 = vsub.f32 %v1192, %v1196
        %v1201 = vsub.f32 %v1193, %v1197
        %v1202 = vsub.f32 %v1194, %v1198
        %v1203 = vsub.f32 %v1195, %v1199
        %v1204 = vsub.f32 %v1087, %v1188
        %v1205 = vsub.f32 %v1089, %v1189
        %v1206 = vsub.f32 %v1128, %v1190
        %v1207 = vsub.f32 %v1130, %v1191
        %v1209 = vlaneseq
        %v1210 = vshrl.u32 %v1209, 7
        %v1211 = vsub.s32 0, %v1210
        %v1212 = vrot.slane %v1134, %v1211
        %v1213 = vlaneseq
        %v1214 = vshrl.u32 %v1213, 7
        %v1215 = vsub.s32 1, %v1214
        %v1216 = vrot.slane %v1134, %v1215
        %v1217 = vlaneseq
        %v1218 = vshrl.u32 %v1217, 7
        %v1219 = vsub.s32 2, %v1218
        %v1220 = vrot.slane %v1134, %v1219
        %v1221 = vlaneseq
        %v1222 = vshrl.u32 %v1221, 7
        %v1223 = vsub.s32 3, %v1222
        %v1224 = vrot.slane %v1134, %v1223
        %v1229 = vmul.f32 %v1212, %v1204
        %v1230 = vmul.f32 %v1216, %v1205
        %v1231 = vmul.f32 %v1220, %v1206
        %v1232 = vmul.f32 %v1224, %v1207
        %v1233 = vadd.f32 %v1200, 0.8
        %v1234 = vadd.f32 %v1201, 0.8
        %v1235 = vadd.f32 %v1202, 0.8
        %v1236 = vadd.f32 %v1203, 0.8
        %v1237 = vrsqrt.pop %v1233
        %v1238 = vrsqrt.pop %v1234
        %v1239 = vrsqrt.pop %v1235
        %v1240 = vrsqrt.pop %v1236
        %v1241 = vmul.f32 %v1229, %v1237
        %v1242 = vmul.f32 %v1230, %v1238
        %v1243 = vmul.f32 %v1231, %v1239
        %v1244 = vmul.f32 %v1232, %v1240
        %v1246 = vlaneseq
        %v1247 = vshrl.u32 %v1246, 7
        %v1248 = vsub.s32 0, %v1247
        %v1249 = vrot.slane %v1135, %v1248
        %v1250 = vlaneseq
        %v1251 = vshrl.u32 %v1250, 7
        %v1252 = vsub.s32 1, %v1251
        %v1253 = vrot.slane %v1135, %v1252
        %v1254 = vlaneseq
        %v1255 = vshrl.u32 %v1254, 7
        %v1256 = vsub.s32 2, %v1255
        %v1257 = vrot.slane %v1135, %v1256
        %v1258 = vlaneseq
        %v1259 = vshrl.u32 %v1258, 7
        %v1260 = vsub.s32 3, %v1259
        %v1261 = vrot.slane %v1135, %v1260
        %v1266 = vadd.f32 %v1241, %v1249
        %v1267 = vadd.f32 %v1242, %v1253
        %v1268 = vadd.f32 %v1243, %v1257
        %v1269 = vadd.f32 %v1244, %v1261
        %vm1270 = vcmp.gt.f32.partialorder %v1266, 0.0
        %vm1271 = vcmp.gt.f32.partialorder %v1267, 0.0
        %vm1272 = vcmp.gt.f32.partialorder %v1268, 0.0
        %vm1273 = vcmp.gt.f32.partialorder %v1269, 0.0
        %v1274 = vmul.f32 %v1266, 0.2
        %v1275 = vmul.f32 %v1267, 0.2
        %v1276 = vmul.f32 %v1268, 0.2
        %v1277 = vmul.f32 %v1269, 0.2
        %v1278 = vsel %vm1270, %v1266, %v1274
        %v1279 = vsel %vm1271, %v1267, %v1275
        %v1280 = vsel %vm1272, %v1268, %v1276
        %v1281 = vsel %vm1273, %v1269, %v1277
        %v1282 = vpack.c.bf16 %v1278, %v1278
        %v1283 = vpack.c.bf16 %v1279, %v1279
        %v1284 = vpack.c.bf16 %v1280, %v1280
        %v1285 = vpack.c.bf16 %v1281, %v1281
        %v1286 = vld [vmem:[#allocation10] sm:$0xff]
        %v1287 = vld [vmem:[#allocation10 + $0x8] sm:$0xff]
        %v1288 = vld [vmem:[#allocation10 + $0x10] sm:$0xff]
        %v1289 = vld [vmem:[#allocation10 + $0x18] sm:$0xff]
        %v1290 = vld [vmem:[#allocation10 + $0x20] sm:$0xff]
        %v1291 = vld [vmem:[#allocation10 + $0x28] sm:$0xff]
        %v1292 = vld [vmem:[#allocation10 + $0x30] sm:$0xff]
        %v1293 = vld [vmem:[#allocation10 + $0x38] sm:$0xff]
        %v1294 = vld [vmem:[#allocation10 + $0x40] sm:$0xff]
        %v1295 = vld [vmem:[#allocation10 + $0x48] sm:$0xff]
        %v1296 = vld [vmem:[#allocation10 + $0x50] sm:$0xff]
        %v1297 = vld [vmem:[#allocation10 + $0x58] sm:$0xff]
        %v1298 = vld [vmem:[#allocation10 + $0x60] sm:$0xff]
        %v1299 = vld [vmem:[#allocation10 + $0x68] sm:$0xff]
        %v1300 = vld [vmem:[#allocation10 + $0x70] sm:$0xff]
        %v1301 = vld [vmem:[#allocation10 + $0x78] sm:$0xff]
        %v1302 = vld [vmem:[#allocation10 + $0x80] sm:$0xff]
        %v1303 = vld [vmem:[#allocation10 + $0x88] sm:$0xff]
        %v1304 = vld [vmem:[#allocation10 + $0x90] sm:$0xff]
        %v1305 = vld [vmem:[#allocation10 + $0x98] sm:$0xff]
        %v1306 = vld [vmem:[#allocation10 + $0xa0] sm:$0xff]
        %v1307 = vld [vmem:[#allocation10 + $0xa8] sm:$0xff]
        %v1308 = vld [vmem:[#allocation10 + $0xb0] sm:$0xff]
        %v1309 = vld [vmem:[#allocation10 + $0xb8] sm:$0xff]
        %v1310 = vld [vmem:[#allocation10 + $0xc0] sm:$0xff]
        %v1311 = vld [vmem:[#allocation10 + $0xc8] sm:$0xff]
        %v1312 = vld [vmem:[#allocation10 + $0xd0] sm:$0xff]
        %v1313 = vld [vmem:[#allocation10 + $0xd8] sm:$0xff]
        %v1314 = vld [vmem:[#allocation10 + $0xe0] sm:$0xff]
        %v1315 = vld [vmem:[#allocation10 + $0xe8] sm:$0xff]
        %v1316 = vld [vmem:[#allocation10 + $0xf0] sm:$0xff]
        %v1317 = vld [vmem:[#allocation10 + $0xf8] sm:$0xff]
        %v1318 = vld [vmem:[#allocation10 + $0x100] sm:$0xff]
        %v1319 = vld [vmem:[#allocation10 + $0x108] sm:$0xff]
        %v1320 = vld [vmem:[#allocation10 + $0x110] sm:$0xff]
        %v1321 = vld [vmem:[#allocation10 + $0x118] sm:$0xff]
        %v1322 = vld [vmem:[#allocation10 + $0x120] sm:$0xff]
        %v1323 = vld [vmem:[#allocation10 + $0x128] sm:$0xff]
        %v1324 = vld [vmem:[#allocation10 + $0x130] sm:$0xff]
        %v1325 = vld [vmem:[#allocation10 + $0x138] sm:$0xff]
        %v1326 = vld [vmem:[#allocation10 + $0x140] sm:$0xff]
        %v1327 = vld [vmem:[#allocation10 + $0x148] sm:$0xff]
        %v1328 = vld [vmem:[#allocation10 + $0x150] sm:$0xff]
        %v1329 = vld [vmem:[#allocation10 + $0x158] sm:$0xff]
        %v1330 = vld [vmem:[#allocation10 + $0x160] sm:$0xff]
        %v1331 = vld [vmem:[#allocation10 + $0x168] sm:$0xff]
        %v1332 = vld [vmem:[#allocation10 + $0x170] sm:$0xff]
        %v1333 = vld [vmem:[#allocation10 + $0x178] sm:$0xff]
        %v1334 = vld [vmem:[#allocation10 + $0x180] sm:$0xff]
        %v1335 = vld [vmem:[#allocation10 + $0x188] sm:$0xff]
        %v1336 = vld [vmem:[#allocation10 + $0x190] sm:$0xff]
        %v1337 = vld [vmem:[#allocation10 + $0x198] sm:$0xff]
        %v1338 = vld [vmem:[#allocation10 + $0x1a0] sm:$0xff]
        %v1339 = vld [vmem:[#allocation10 + $0x1a8] sm:$0xff]
        %v1340 = vld [vmem:[#allocation10 + $0x1b0] sm:$0xff]
        %v1341 = vld [vmem:[#allocation10 + $0x1b8] sm:$0xff]
        %v1342 = vld [vmem:[#allocation10 + $0x1c0] sm:$0xff]
        %v1343 = vld [vmem:[#allocation10 + $0x1c8] sm:$0xff]
        %v1344 = vld [vmem:[#allocation10 + $0x1d0] sm:$0xff]
        %v1345 = vld [vmem:[#allocation10 + $0x1d8] sm:$0xff]
        %v1346 = vld [vmem:[#allocation10 + $0x1e0] sm:$0xff]
        %v1347 = vld [vmem:[#allocation10 + $0x1e8] sm:$0xff]
        %v1348 = vld [vmem:[#allocation10 + $0x1f0] sm:$0xff]
        %v1349 = vld [vmem:[#allocation10 + $0x1f8] sm:$0xff]
        %v1350 = vld [vmem:[#allocation10 + $0x200] sm:$0xff]
        %v1351 = vld [vmem:[#allocation10 + $0x208] sm:$0xff]
        %v1352 = vld [vmem:[#allocation10 + $0x210] sm:$0xff]
        %v1353 = vld [vmem:[#allocation10 + $0x218] sm:$0xff]
        %v1354 = vld [vmem:[#allocation10 + $0x220] sm:$0xff]
        %v1355 = vld [vmem:[#allocation10 + $0x228] sm:$0xff]
        %v1356 = vld [vmem:[#allocation10 + $0x230] sm:$0xff]
        %v1357 = vld [vmem:[#allocation10 + $0x238] sm:$0xff]
        %v1358 = vld [vmem:[#allocation10 + $0x240] sm:$0xff]
        %v1359 = vld [vmem:[#allocation10 + $0x248] sm:$0xff]
        %v1360 = vld [vmem:[#allocation10 + $0x250] sm:$0xff]
        %v1361 = vld [vmem:[#allocation10 + $0x258] sm:$0xff]
        %v1362 = vld [vmem:[#allocation10 + $0x260] sm:$0xff]
        %v1363 = vld [vmem:[#allocation10 + $0x268] sm:$0xff]
        %v1364 = vld [vmem:[#allocation10 + $0x270] sm:$0xff]
        %v1365 = vld [vmem:[#allocation10 + $0x278] sm:$0xff]
        %v1366 = vld [vmem:[#allocation10 + $0x280] sm:$0xff]
        %v1367 = vld [vmem:[#allocation10 + $0x288] sm:$0xff]
        %v1368 = vld [vmem:[#allocation10 + $0x290] sm:$0xff]
        %v1369 = vld [vmem:[#allocation10 + $0x298] sm:$0xff]
        %v1370 = vld [vmem:[#allocation10 + $0x2a0] sm:$0xff]
        %v1371 = vld [vmem:[#allocation10 + $0x2a8] sm:$0xff]
        %v1372 = vld [vmem:[#allocation10 + $0x2b0] sm:$0xff]
        %v1373 = vld [vmem:[#allocation10 + $0x2b8] sm:$0xff]
        %v1374 = vld [vmem:[#allocation10 + $0x2c0] sm:$0xff]
        %v1375 = vld [vmem:[#allocation10 + $0x2c8] sm:$0xff]
        %v1376 = vld [vmem:[#allocation10 + $0x2d0] sm:$0xff]
        %v1377 = vld [vmem:[#allocation10 + $0x2d8] sm:$0xff]
        %v1378 = vld [vmem:[#allocation10 + $0x2e0] sm:$0xff]
        %v1379 = vld [vmem:[#allocation10 + $0x2e8] sm:$0xff]
        %v1380 = vld [vmem:[#allocation10 + $0x2f0] sm:$0xff]
        %v1381 = vld [vmem:[#allocation10 + $0x2f8] sm:$0xff]
        %v1382 = vld [vmem:[#allocation10 + $0x300] sm:$0xff]
        %v1383 = vld [vmem:[#allocation10 + $0x308] sm:$0xff]
        %v1384 = vld [vmem:[#allocation10 + $0x310] sm:$0xff]
        %v1385 = vld [vmem:[#allocation10 + $0x318] sm:$0xff]
        %v1386 = vld [vmem:[#allocation10 + $0x320] sm:$0xff]
        %v1387 = vld [vmem:[#allocation10 + $0x328] sm:$0xff]
        %v1388 = vld [vmem:[#allocation10 + $0x330] sm:$0xff]
        %v1389 = vld [vmem:[#allocation10 + $0x338] sm:$0xff]
        %v1390 = vld [vmem:[#allocation10 + $0x340] sm:$0xff]
        %v1391 = vld [vmem:[#allocation10 + $0x348] sm:$0xff]
        %v1392 = vld [vmem:[#allocation10 + $0x350] sm:$0xff]
        %v1393 = vld [vmem:[#allocation10 + $0x358] sm:$0xff]
        %v1394 = vld [vmem:[#allocation10 + $0x360] sm:$0xff]
        %v1395 = vld [vmem:[#allocation10 + $0x368] sm:$0xff]
        %v1396 = vld [vmem:[#allocation10 + $0x370] sm:$0xff]
        %v1397 = vld [vmem:[#allocation10 + $0x378] sm:$0xff]
        %v1398 = vld [vmem:[#allocation10 + $0x380] sm:$0xff]
        %v1399 = vld [vmem:[#allocation10 + $0x388] sm:$0xff]
        %v1400 = vld [vmem:[#allocation10 + $0x390] sm:$0xff]
        %v1401 = vld [vmem:[#allocation10 + $0x398] sm:$0xff]
        %v1402 = vld [vmem:[#allocation10 + $0x3a0] sm:$0xff]
        %v1403 = vld [vmem:[#allocation10 + $0x3a8] sm:$0xff]
        %v1404 = vld [vmem:[#allocation10 + $0x3b0] sm:$0xff]
        %v1405 = vld [vmem:[#allocation10 + $0x3b8] sm:$0xff]
        %v1406 = vld [vmem:[#allocation10 + $0x3c0] sm:$0xff]
        %v1407 = vld [vmem:[#allocation10 + $0x3c8] sm:$0xff]
        %v1408 = vld [vmem:[#allocation10 + $0x3d0] sm:$0xff]
        %v1409 = vld [vmem:[#allocation10 + $0x3d8] sm:$0xff]
        %v1410 = vld [vmem:[#allocation10 + $0x3e0] sm:$0xff]
        %v1411 = vld [vmem:[#allocation10 + $0x3e8] sm:$0xff]
        %v1412 = vld [vmem:[#allocation10 + $0x3f0] sm:$0xff]
        %v1413 = vld [vmem:[#allocation10 + $0x3f8] sm:$0xff]
        %v1414 = vld [vmem:[#allocation10 + $0x400] sm:$0xff]
        %v1415 = vld [vmem:[#allocation10 + $0x408] sm:$0xff]
        %v1416 = vld [vmem:[#allocation10 + $0x410] sm:$0xff]
        %v1417 = vld [vmem:[#allocation10 + $0x418] sm:$0xff]
        %v1418 = vld [vmem:[#allocation10 + $0x420] sm:$0xff]
        %v1419 = vld [vmem:[#allocation10 + $0x428] sm:$0xff]
        %v1420 = vld [vmem:[#allocation10 + $0x430] sm:$0xff]
        %v1421 = vld [vmem:[#allocation10 + $0x438] sm:$0xff]
        %v1422 = vld [vmem:[#allocation10 + $0x440] sm:$0xff]
        %v1423 = vld [vmem:[#allocation10 + $0x448] sm:$0xff]
        %v1424 = vld [vmem:[#allocation10 + $0x450] sm:$0xff]
        %v1425 = vld [vmem:[#allocation10 + $0x458] sm:$0xff]
        %v1426 = vld [vmem:[#allocation10 + $0x460] sm:$0xff]
        %v1427 = vld [vmem:[#allocation10 + $0x468] sm:$0xff]
        %v1428 = vld [vmem:[#allocation10 + $0x470] sm:$0xff]
        %v1429 = vld [vmem:[#allocation10 + $0x478] sm:$0xff]
        %v1430 = vld [vmem:[#allocation10 + $0x480] sm:$0xff]
        %v1431 = vld [vmem:[#allocation10 + $0x488] sm:$0xff]
        %v1432 = vld [vmem:[#allocation10 + $0x490] sm:$0xff]
        %v1433 = vld [vmem:[#allocation10 + $0x498] sm:$0xff]
        %v1434 = vld [vmem:[#allocation10 + $0x4a0] sm:$0xff]
        %v1435 = vld [vmem:[#allocation10 + $0x4a8] sm:$0xff]
        %v1436 = vld [vmem:[#allocation10 + $0x4b0] sm:$0xff]
        %v1437 = vld [vmem:[#allocation10 + $0x4b8] sm:$0xff]
        %v1438 = vld [vmem:[#allocation10 + $0x4c0] sm:$0xff]
        %v1439 = vld [vmem:[#allocation10 + $0x4c8] sm:$0xff]
        %v1440 = vld [vmem:[#allocation10 + $0x4d0] sm:$0xff]
        %v1441 = vld [vmem:[#allocation10 + $0x4d8] sm:$0xff]
        %v1442 = vld [vmem:[#allocation10 + $0x4e0] sm:$0xff]
        %v1443 = vld [vmem:[#allocation10 + $0x4e8] sm:$0xff]
        %v1444 = vld [vmem:[#allocation10 + $0x4f0] sm:$0xff]
        %v1445 = vld [vmem:[#allocation10 + $0x4f8] sm:$0xff]
        %v1446 = vld [vmem:[#allocation10 + $0x500] sm:$0xff]
        %v1447 = vld [vmem:[#allocation10 + $0x508] sm:$0xff]
        %v1448 = vld [vmem:[#allocation10 + $0x510] sm:$0xff]
        %v1449 = vld [vmem:[#allocation10 + $0x518] sm:$0xff]
        %v1450 = vld [vmem:[#allocation10 + $0x520] sm:$0xff]
        %v1451 = vld [vmem:[#allocation10 + $0x528] sm:$0xff]
        %v1452 = vld [vmem:[#allocation10 + $0x530] sm:$0xff]
        %v1453 = vld [vmem:[#allocation10 + $0x538] sm:$0xff]
        %v1454 = vld [vmem:[#allocation10 + $0x540] sm:$0xff]
        %v1455 = vld [vmem:[#allocation10 + $0x548] sm:$0xff]
        %v1456 = vld [vmem:[#allocation10 + $0x550] sm:$0xff]
        %v1457 = vld [vmem:[#allocation10 + $0x558] sm:$0xff]
        %v1458 = vld [vmem:[#allocation10 + $0x560] sm:$0xff]
        %v1459 = vld [vmem:[#allocation10 + $0x568] sm:$0xff]
        %v1460 = vld [vmem:[#allocation10 + $0x570] sm:$0xff]
        %v1461 = vld [vmem:[#allocation10 + $0x578] sm:$0xff]
        %v1462 = vld [vmem:[#allocation10 + $0x580] sm:$0xff]
        %v1463 = vld [vmem:[#allocation10 + $0x588] sm:$0xff]
        %v1464 = vld [vmem:[#allocation10 + $0x590] sm:$0xff]
        %v1465 = vld [vmem:[#allocation10 + $0x598] sm:$0xff]
        %v1466 = vld [vmem:[#allocation10 + $0x5a0] sm:$0xff]
        %v1467 = vld [vmem:[#allocation10 + $0x5a8] sm:$0xff]
        %v1468 = vld [vmem:[#allocation10 + $0x5b0] sm:$0xff]
        %v1469 = vld [vmem:[#allocation10 + $0x5b8] sm:$0xff]
        %v1470 = vld [vmem:[#allocation10 + $0x5c0] sm:$0xff]
        %v1471 = vld [vmem:[#allocation10 + $0x5c8] sm:$0xff]
        %v1472 = vld [vmem:[#allocation10 + $0x5d0] sm:$0xff]
        %v1473 = vld [vmem:[#allocation10 + $0x5d8] sm:$0xff]
        %v1474 = vld [vmem:[#allocation10 + $0x5e0] sm:$0xff]
        %v1475 = vld [vmem:[#allocation10 + $0x5e8] sm:$0xff]
        %v1476 = vld [vmem:[#allocation10 + $0x5f0] sm:$0xff]
        %v1477 = vld [vmem:[#allocation10 + $0x5f8] sm:$0xff]
        %v1478 = vld [vmem:[#allocation10 + $0x600] sm:$0xff]
        %v1479 = vld [vmem:[#allocation10 + $0x608] sm:$0xff]
        %v1480 = vld [vmem:[#allocation10 + $0x610] sm:$0xff]
        %v1481 = vld [vmem:[#allocation10 + $0x618] sm:$0xff]
        %v1482 = vld [vmem:[#allocation10 + $0x620] sm:$0xff]
        %v1483 = vld [vmem:[#allocation10 + $0x628] sm:$0xff]
        %v1484 = vld [vmem:[#allocation10 + $0x630] sm:$0xff]
        %v1485 = vld [vmem:[#allocation10 + $0x638] sm:$0xff]
        %v1486 = vld [vmem:[#allocation10 + $0x640] sm:$0xff]
        %v1487 = vld [vmem:[#allocation10 + $0x648] sm:$0xff]
        %v1488 = vld [vmem:[#allocation10 + $0x650] sm:$0xff]
        %v1489 = vld [vmem:[#allocation10 + $0x658] sm:$0xff]
        %v1490 = vld [vmem:[#allocation10 + $0x660] sm:$0xff]
        %v1491 = vld [vmem:[#allocation10 + $0x668] sm:$0xff]
        %v1492 = vld [vmem:[#allocation10 + $0x670] sm:$0xff]
        %v1493 = vld [vmem:[#allocation10 + $0x678] sm:$0xff]
        %v1494 = vld [vmem:[#allocation10 + $0x680] sm:$0xff]
        %v1495 = vld [vmem:[#allocation10 + $0x688] sm:$0xff]
        %v1496 = vld [vmem:[#allocation10 + $0x690] sm:$0xff]
        %v1497 = vld [vmem:[#allocation10 + $0x698] sm:$0xff]
        %v1498 = vld [vmem:[#allocation10 + $0x6a0] sm:$0xff]
        %v1499 = vld [vmem:[#allocation10 + $0x6a8] sm:$0xff]
        %v1500 = vld [vmem:[#allocation10 + $0x6b0] sm:$0xff]
        %v1501 = vld [vmem:[#allocation10 + $0x6b8] sm:$0xff]
        %v1502 = vld [vmem:[#allocation10 + $0x6c0] sm:$0xff]
        %v1503 = vld [vmem:[#allocation10 + $0x6c8] sm:$0xff]
        %v1504 = vld [vmem:[#allocation10 + $0x6d0] sm:$0xff]
        %v1505 = vld [vmem:[#allocation10 + $0x6d8] sm:$0xff]
        %v1506 = vld [vmem:[#allocation10 + $0x6e0] sm:$0xff]
        %v1507 = vld [vmem:[#allocation10 + $0x6e8] sm:$0xff]
        %v1508 = vld [vmem:[#allocation10 + $0x6f0] sm:$0xff]
        %v1509 = vld [vmem:[#allocation10 + $0x6f8] sm:$0xff]
        %v1510 = vld [vmem:[#allocation10 + $0x700] sm:$0xff]
        %v1511 = vld [vmem:[#allocation10 + $0x708] sm:$0xff]
        %v1512 = vld [vmem:[#allocation10 + $0x710] sm:$0xff]
        %v1513 = vld [vmem:[#allocation10 + $0x718] sm:$0xff]
        %v1514 = vld [vmem:[#allocation10 + $0x720] sm:$0xff]
        %v1515 = vld [vmem:[#allocation10 + $0x728] sm:$0xff]
        %v1516 = vld [vmem:[#allocation10 + $0x730] sm:$0xff]
        %v1517 = vld [vmem:[#allocation10 + $0x738] sm:$0xff]
        %v1518 = vld [vmem:[#allocation10 + $0x740] sm:$0xff]
        %v1519 = vld [vmem:[#allocation10 + $0x748] sm:$0xff]
        %v1520 = vld [vmem:[#allocation10 + $0x750] sm:$0xff]
        %v1521 = vld [vmem:[#allocation10 + $0x758] sm:$0xff]
        %v1522 = vld [vmem:[#allocation10 + $0x760] sm:$0xff]
        %v1523 = vld [vmem:[#allocation10 + $0x768] sm:$0xff]
        %v1524 = vld [vmem:[#allocation10 + $0x770] sm:$0xff]
        %v1525 = vld [vmem:[#allocation10 + $0x778] sm:$0xff]
        %v1526 = vld [vmem:[#allocation10 + $0x780] sm:$0xff]
        %v1527 = vld [vmem:[#allocation10 + $0x788] sm:$0xff]
        %v1528 = vld [vmem:[#allocation10 + $0x790] sm:$0xff]
        %v1529 = vld [vmem:[#allocation10 + $0x798] sm:$0xff]
        %v1530 = vld [vmem:[#allocation10 + $0x7a0] sm:$0xff]
        %v1531 = vld [vmem:[#allocation10 + $0x7a8] sm:$0xff]
        %v1532 = vld [vmem:[#allocation10 + $0x7b0] sm:$0xff]
        %v1533 = vld [vmem:[#allocation10 + $0x7b8] sm:$0xff]
        %v1534 = vld [vmem:[#allocation10 + $0x7c0] sm:$0xff]
        %v1535 = vld [vmem:[#allocation10 + $0x7c8] sm:$0xff]
        %v1536 = vld [vmem:[#allocation10 + $0x7d0] sm:$0xff]
        %v1537 = vld [vmem:[#allocation10 + $0x7d8] sm:$0xff]
        %v1538 = vld [vmem:[#allocation10 + $0x7e0] sm:$0xff]
        %v1539 = vld [vmem:[#allocation10 + $0x7e8] sm:$0xff]
        %v1540 = vld [vmem:[#allocation10 + $0x7f0] sm:$0xff]
        %v1541 = vld [vmem:[#allocation10 + $0x7f8] sm:$0xff]
        %v1798 = vunpack.c.l.b16 %v1286
        %v1799 = vunpack.c.h.b16 %v1286
        %v1800 = vunpack.c.l.b16 %v1287
        %v1801 = vunpack.c.h.b16 %v1287
        %v1802 = vunpack.c.l.b16 %v1288
        %v1803 = vunpack.c.h.b16 %v1288
        %v1804 = vunpack.c.l.b16 %v1289
        %v1805 = vunpack.c.h.b16 %v1289
        %v1806 = vunpack.c.l.b16 %v1290
        %v1807 = vunpack.c.h.b16 %v1290
        %v1808 = vunpack.c.l.b16 %v1291
        %v1809 = vunpack.c.h.b16 %v1291
        %v1810 = vunpack.c.l.b16 %v1292
        %v1811 = vunpack.c.h.b16 %v1292
        %v1812 = vunpack.c.l.b16 %v1293
        %v1813 = vunpack.c.h.b16 %v1293
        %v1814 = vunpack.c.l.b16 %v1294
        %v1815 = vunpack.c.h.b16 %v1294
        %v1816 = vunpack.c.l.b16 %v1295
        %v1817 = vunpack.c.h.b16 %v1295
        %v1818 = vunpack.c.l.b16 %v1296
        %v1819 = vunpack.c.h.b16 %v1296
        %v1820 = vunpack.c.l.b16 %v1297
        %v1821 = vunpack.c.h.b16 %v1297
        %v1822 = vunpack.c.l.b16 %v1298
        %v1823 = vunpack.c.h.b16 %v1298
        %v1824 = vunpack.c.l.b16 %v1299
        %v1825 = vunpack.c.h.b16 %v1299
        %v1826 = vunpack.c.l.b16 %v1300
        %v1827 = vunpack.c.h.b16 %v1300
        %v1828 = vunpack.c.l.b16 %v1301
        %v1829 = vunpack.c.h.b16 %v1301
        %v1830 = vunpack.c.l.b16 %v1302
        %v1831 = vunpack.c.h.b16 %v1302
        %v1832 = vunpack.c.l.b16 %v1303
        %v1833 = vunpack.c.h.b16 %v1303
        %v1834 = vunpack.c.l.b16 %v1304
        %v1835 = vunpack.c.h.b16 %v1304
        %v1836 = vunpack.c.l.b16 %v1305
        %v1837 = vunpack.c.h.b16 %v1305
        %v1838 = vunpack.c.l.b16 %v1306
        %v1839 = vunpack.c.h.b16 %v1306
        %v1840 = vunpack.c.l.b16 %v1307
        %v1841 = vunpack.c.h.b16 %v1307
        %v1842 = vunpack.c.l.b16 %v1308
        %v1843 = vunpack.c.h.b16 %v1308
        %v1844 = vunpack.c.l.b16 %v1309
        %v1845 = vunpack.c.h.b16 %v1309
        %v1846 = vunpack.c.l.b16 %v1310
        %v1847 = vunpack.c.h.b16 %v1310
        %v1848 = vunpack.c.l.b16 %v1311
        %v1849 = vunpack.c.h.b16 %v1311
        %v1850 = vunpack.c.l.b16 %v1312
        %v1851 = vunpack.c.h.b16 %v1312
        %v1852 = vunpack.c.l.b16 %v1313
        %v1853 = vunpack.c.h.b16 %v1313
        %v1854 = vunpack.c.l.b16 %v1314
        %v1855 = vunpack.c.h.b16 %v1314
        %v1856 = vunpack.c.l.b16 %v1315
        %v1857 = vunpack.c.h.b16 %v1315
        %v1858 = vunpack.c.l.b16 %v1316
        %v1859 = vunpack.c.h.b16 %v1316
        %v1860 = vunpack.c.l.b16 %v1317
        %v1861 = vunpack.c.h.b16 %v1317
        %v1862 = vunpack.c.l.b16 %v1318
        %v1863 = vunpack.c.h.b16 %v1318
        %v1864 = vunpack.c.l.b16 %v1319
        %v1865 = vunpack.c.h.b16 %v1319
        %v1866 = vunpack.c.l.b16 %v1320
        %v1867 = vunpack.c.h.b16 %v1320
        %v1868 = vunpack.c.l.b16 %v1321
        %v1869 = vunpack.c.h.b16 %v1321
        %v1870 = vunpack.c.l.b16 %v1322
        %v1871 = vunpack.c.h.b16 %v1322
        %v1872 = vunpack.c.l.b16 %v1323
        %v1873 = vunpack.c.h.b16 %v1323
        %v1874 = vunpack.c.l.b16 %v1324
        %v1875 = vunpack.c.h.b16 %v1324
        %v1876 = vunpack.c.l.b16 %v1325
        %v1877 = vunpack.c.h.b16 %v1325
        %v1878 = vunpack.c.l.b16 %v1326
        %v1879 = vunpack.c.h.b16 %v1326
        %v1880 = vunpack.c.l.b16 %v1327
        %v1881 = vunpack.c.h.b16 %v1327
        %v1882 = vunpack.c.l.b16 %v1328
        %v1883 = vunpack.c.h.b16 %v1328
        %v1884 = vunpack.c.l.b16 %v1329
        %v1885 = vunpack.c.h.b16 %v1329
        %v1886 = vunpack.c.l.b16 %v1330
        %v1887 = vunpack.c.h.b16 %v1330
        %v1888 = vunpack.c.l.b16 %v1331
        %v1889 = vunpack.c.h.b16 %v1331
        %v1890 = vunpack.c.l.b16 %v1332
        %v1891 = vunpack.c.h.b16 %v1332
        %v1892 = vunpack.c.l.b16 %v1333
        %v1893 = vunpack.c.h.b16 %v1333
        %v1894 = vunpack.c.l.b16 %v1334
        %v1895 = vunpack.c.h.b16 %v1334
        %v1896 = vunpack.c.l.b16 %v1335
        %v1897 = vunpack.c.h.b16 %v1335
        %v1898 = vunpack.c.l.b16 %v1336
        %v1899 = vunpack.c.h.b16 %v1336
        %v1900 = vunpack.c.l.b16 %v1337
        %v1901 = vunpack.c.h.b16 %v1337
        %v1902 = vunpack.c.l.b16 %v1338
        %v1903 = vunpack.c.h.b16 %v1338
        %v1904 = vunpack.c.l.b16 %v1339
        %v1905 = vunpack.c.h.b16 %v1339
        %v1906 = vunpack.c.l.b16 %v1340
        %v1907 = vunpack.c.h.b16 %v1340
        %v1908 = vunpack.c.l.b16 %v1341
        %v1909 = vunpack.c.h.b16 %v1341
        %v1910 = vunpack.c.l.b16 %v1342
        %v1911 = vunpack.c.h.b16 %v1342
        %v1912 = vunpack.c.l.b16 %v1343
        %v1913 = vunpack.c.h.b16 %v1343
        %v1914 = vunpack.c.l.b16 %v1344
        %v1915 = vunpack.c.h.b16 %v1344
        %v1916 = vunpack.c.l.b16 %v1345
        %v1917 = vunpack.c.h.b16 %v1345
        %v1918 = vunpack.c.l.b16 %v1346
        %v1919 = vunpack.c.h.b16 %v1346
        %v1920 = vunpack.c.l.b16 %v1347
        %v1921 = vunpack.c.h.b16 %v1347
        %v1922 = vunpack.c.l.b16 %v1348
        %v1923 = vunpack.c.h.b16 %v1348
        %v1924 = vunpack.c.l.b16 %v1349
        %v1925 = vunpack.c.h.b16 %v1349
        %v1926 = vunpack.c.l.b16 %v1350
        %v1927 = vunpack.c.h.b16 %v1350
        %v1928 = vunpack.c.l.b16 %v1351
        %v1929 = vunpack.c.h.b16 %v1351
        %v1930 = vunpack.c.l.b16 %v1352
        %v1931 = vunpack.c.h.b16 %v1352
        %v1932 = vunpack.c.l.b16 %v1353
        %v1933 = vunpack.c.h.b16 %v1353
        %v1934 = vunpack.c.l.b16 %v1354
        %v1935 = vunpack.c.h.b16 %v1354
        %v1936 = vunpack.c.l.b16 %v1355
        %v1937 = vunpack.c.h.b16 %v1355
        %v1938 = vunpack.c.l.b16 %v1356
        %v1939 = vunpack.c.h.b16 %v1356
        %v1940 = vunpack.c.l.b16 %v1357
        %v1941 = vunpack.c.h.b16 %v1357
        %v1942 = vunpack.c.l.b16 %v1358
        %v1943 = vunpack.c.h.b16 %v1358
        %v1944 = vunpack.c.l.b16 %v1359
        %v1945 = vunpack.c.h.b16 %v1359
        %v1946 = vunpack.c.l.b16 %v1360
        %v1947 = vunpack.c.h.b16 %v1360
        %v1948 = vunpack.c.l.b16 %v1361
        %v1949 = vunpack.c.h.b16 %v1361
        %v1950 = vunpack.c.l.b16 %v1362
        %v1951 = vunpack.c.h.b16 %v1362
        %v1952 = vunpack.c.l.b16 %v1363
        %v1953 = vunpack.c.h.b16 %v1363
        %v1954 = vunpack.c.l.b16 %v1364
        %v1955 = vunpack.c.h.b16 %v1364
        %v1956 = vunpack.c.l.b16 %v1365
        %v1957 = vunpack.c.h.b16 %v1365
        %v1958 = vunpack.c.l.b16 %v1366
        %v1959 = vunpack.c.h.b16 %v1366
        %v1960 = vunpack.c.l.b16 %v1367
        %v1961 = vunpack.c.h.b16 %v1367
        %v1962 = vunpack.c.l.b16 %v1368
        %v1963 = vunpack.c.h.b16 %v1368
        %v1964 = vunpack.c.l.b16 %v1369
        %v1965 = vunpack.c.h.b16 %v1369
        %v1966 = vunpack.c.l.b16 %v1370
        %v1967 = vunpack.c.h.b16 %v1370
        %v1968 = vunpack.c.l.b16 %v1371
        %v1969 = vunpack.c.h.b16 %v1371
        %v1970 = vunpack.c.l.b16 %v1372
        %v1971 = vunpack.c.h.b16 %v1372
        %v1972 = vunpack.c.l.b16 %v1373
        %v1973 = vunpack.c.h.b16 %v1373
        %v1974 = vunpack.c.l.b16 %v1374
        %v1975 = vunpack.c.h.b16 %v1374
        %v1976 = vunpack.c.l.b16 %v1375
        %v1977 = vunpack.c.h.b16 %v1375
        %v1978 = vunpack.c.l.b16 %v1376
        %v1979 = vunpack.c.h.b16 %v1376
        %v1980 = vunpack.c.l.b16 %v1377
        %v1981 = vunpack.c.h.b16 %v1377
        %v1982 = vunpack.c.l.b16 %v1378
        %v1983 = vunpack.c.h.b16 %v1378
        %v1984 = vunpack.c.l.b16 %v1379
        %v1985 = vunpack.c.h.b16 %v1379
        %v1986 = vunpack.c.l.b16 %v1380
        %v1987 = vunpack.c.h.b16 %v1380
        %v1988 = vunpack.c.l.b16 %v1381
        %v1989 = vunpack.c.h.b16 %v1381
        %v1990 = vunpack.c.l.b16 %v1382
        %v1991 = vunpack.c.h.b16 %v1382
        %v1992 = vunpack.c.l.b16 %v1383
        %v1993 = vunpack.c.h.b16 %v1383
        %v1994 = vunpack.c.l.b16 %v1384
        %v1995 = vunpack.c.h.b16 %v1384
        %v1996 = vunpack.c.l.b16 %v1385
        %v1997 = vunpack.c.h.b16 %v1385
        %v1998 = vunpack.c.l.b16 %v1386
        %v1999 = vunpack.c.h.b16 %v1386
        %v2000 = vunpack.c.l.b16 %v1387
        %v2001 = vunpack.c.h.b16 %v1387
        %v2002 = vunpack.c.l.b16 %v1388
        %v2003 = vunpack.c.h.b16 %v1388
        %v2004 = vunpack.c.l.b16 %v1389
        %v2005 = vunpack.c.h.b16 %v1389
        %v2006 = vunpack.c.l.b16 %v1390
        %v2007 = vunpack.c.h.b16 %v1390
        %v2008 = vunpack.c.l.b16 %v1391
        %v2009 = vunpack.c.h.b16 %v1391
        %v2010 = vunpack.c.l.b16 %v1392
        %v2011 = vunpack.c.h.b16 %v1392
        %v2012 = vunpack.c.l.b16 %v1393
        %v2013 = vunpack.c.h.b16 %v1393
        %v2014 = vunpack.c.l.b16 %v1394
        %v2015 = vunpack.c.h.b16 %v1394
        %v2016 = vunpack.c.l.b16 %v1395
        %v2017 = vunpack.c.h.b16 %v1395
        %v2018 = vunpack.c.l.b16 %v1396
        %v2019 = vunpack.c.h.b16 %v1396
        %v2020 = vunpack.c.l.b16 %v1397
        %v2021 = vunpack.c.h.b16 %v1397
        %v2022 = vunpack.c.l.b16 %v1398
        %v2023 = vunpack.c.h.b16 %v1398
        %v2024 = vunpack.c.l.b16 %v1399
        %v2025 = vunpack.c.h.b16 %v1399
        %v2026 = vunpack.c.l.b16 %v1400
        %v2027 = vunpack.c.h.b16 %v1400
        %v2028 = vunpack.c.l.b16 %v1401
        %v2029 = vunpack.c.h.b16 %v1401
        %v2030 = vunpack.c.l.b16 %v1402
        %v2031 = vunpack.c.h.b16 %v1402
        %v2032 = vunpack.c.l.b16 %v1403
        %v2033 = vunpack.c.h.b16 %v1403
        %v2034 = vunpack.c.l.b16 %v1404
        %v2035 = vunpack.c.h.b16 %v1404
        %v2036 = vunpack.c.l.b16 %v1405
        %v2037 = vunpack.c.h.b16 %v1405
        %v2038 = vunpack.c.l.b16 %v1406
        %v2039 = vunpack.c.h.b16 %v1406
        %v2040 = vunpack.c.l.b16 %v1407
        %v2041 = vunpack.c.h.b16 %v1407
        %v2042 = vunpack.c.l.b16 %v1408
        %v2043 = vunpack.c.h.b16 %v1408
        %v2044 = vunpack.c.l.b16 %v1409
        %v2045 = vunpack.c.h.b16 %v1409
        %v2046 = vunpack.c.l.b16 %v1410
        %v2047 = vunpack.c.h.b16 %v1410
        %v2048 = vunpack.c.l.b16 %v1411
        %v2049 = vunpack.c.h.b16 %v1411
        %v2050 = vunpack.c.l.b16 %v1412
        %v2051 = vunpack.c.h.b16 %v1412
        %v2052 = vunpack.c.l.b16 %v1413
        %v2053 = vunpack.c.h.b16 %v1413
        %v2054 = vunpack.c.l.b16 %v1414
        %v2055 = vunpack.c.h.b16 %v1414
        %v2056 = vunpack.c.l.b16 %v1415
        %v2057 = vunpack.c.h.b16 %v1415
        %v2058 = vunpack.c.l.b16 %v1416
        %v2059 = vunpack.c.h.b16 %v1416
        %v2060 = vunpack.c.l.b16 %v1417
        %v2061 = vunpack.c.h.b16 %v1417
        %v2062 = vunpack.c.l.b16 %v1418
        %v2063 = vunpack.c.h.b16 %v1418
        %v2064 = vunpack.c.l.b16 %v1419
        %v2065 = vunpack.c.h.b16 %v1419
        %v2066 = vunpack.c.l.b16 %v1420
        %v2067 = vunpack.c.h.b16 %v1420
        %v2068 = vunpack.c.l.b16 %v1421
        %v2069 = vunpack.c.h.b16 %v1421
        %v2070 = vunpack.c.l.b16 %v1422
        %v2071 = vunpack.c.h.b16 %v1422
        %v2072 = vunpack.c.l.b16 %v1423
        %v2073 = vunpack.c.h.b16 %v1423
        %v2074 = vunpack.c.l.b16 %v1424
        %v2075 = vunpack.c.h.b16 %v1424
        %v2076 = vunpack.c.l.b16 %v1425
        %v2077 = vunpack.c.h.b16 %v1425
        %v2078 = vunpack.c.l.b16 %v1426
        %v2079 = vunpack.c.h.b16 %v1426
        %v2080 = vunpack.c.l.b16 %v1427
        %v2081 = vunpack.c.h.b16 %v1427
        %v2082 = vunpack.c.l.b16 %v1428
        %v2083 = vunpack.c.h.b16 %v1428
        %v2084 = vunpack.c.l.b16 %v1429
        %v2085 = vunpack.c.h.b16 %v1429
        %v2086 = vunpack.c.l.b16 %v1430
        %v2087 = vunpack.c.h.b16 %v1430
        %v2088 = vunpack.c.l.b16 %v1431
        %v2089 = vunpack.c.h.b16 %v1431
        %v2090 = vunpack.c.l.b16 %v1432
        %v2091 = vunpack.c.h.b16 %v1432
        %v2092 = vunpack.c.l.b16 %v1433
        %v2093 = vunpack.c.h.b16 %v1433
        %v2094 = vunpack.c.l.b16 %v1434
        %v2095 = vunpack.c.h.b16 %v1434
        %v2096 = vunpack.c.l.b16 %v1435
        %v2097 = vunpack.c.h.b16 %v1435
        %v2098 = vunpack.c.l.b16 %v1436
        %v2099 = vunpack.c.h.b16 %v1436
        %v2100 = vunpack.c.l.b16 %v1437
        %v2101 = vunpack.c.h.b16 %v1437
        %v2102 = vunpack.c.l.b16 %v1438
        %v2103 = vunpack.c.h.b16 %v1438
        %v2104 = vunpack.c.l.b16 %v1439
        %v2105 = vunpack.c.h.b16 %v1439
        %v2106 = vunpack.c.l.b16 %v1440
        %v2107 = vunpack.c.h.b16 %v1440
        %v2108 = vunpack.c.l.b16 %v1441
        %v2109 = vunpack.c.h.b16 %v1441
        %v2110 = vunpack.c.l.b16 %v1442
        %v2111 = vunpack.c.h.b16 %v1442
        %v2112 = vunpack.c.l.b16 %v1443
        %v2113 = vunpack.c.h.b16 %v1443
        %v2114 = vunpack.c.l.b16 %v1444
        %v2115 = vunpack.c.h.b16 %v1444
        %v2116 = vunpack.c.l.b16 %v1445
        %v2117 = vunpack.c.h.b16 %v1445
        %v2118 = vunpack.c.l.b16 %v1446
        %v2119 = vunpack.c.h.b16 %v1446
        %v2120 = vunpack.c.l.b16 %v1447
        %v2121 = vunpack.c.h.b16 %v1447
        %v2122 = vunpack.c.l.b16 %v1448
        %v2123 = vunpack.c.h.b16 %v1448
        %v2124 = vunpack.c.l.b16 %v1449
        %v2125 = vunpack.c.h.b16 %v1449
        %v2126 = vunpack.c.l.b16 %v1450
        %v2127 = vunpack.c.h.b16 %v1450
        %v2128 = vunpack.c.l.b16 %v1451
        %v2129 = vunpack.c.h.b16 %v1451
        %v2130 = vunpack.c.l.b16 %v1452
        %v2131 = vunpack.c.h.b16 %v1452
        %v2132 = vunpack.c.l.b16 %v1453
        %v2133 = vunpack.c.h.b16 %v1453
        %v2134 = vunpack.c.l.b16 %v1454
        %v2135 = vunpack.c.h.b16 %v1454
        %v2136 = vunpack.c.l.b16 %v1455
        %v2137 = vunpack.c.h.b16 %v1455
        %v2138 = vunpack.c.l.b16 %v1456
        %v2139 = vunpack.c.h.b16 %v1456
        %v2140 = vunpack.c.l.b16 %v1457
        %v2141 = vunpack.c.h.b16 %v1457
        %v2142 = vunpack.c.l.b16 %v1458
        %v2143 = vunpack.c.h.b16 %v1458
        %v2144 = vunpack.c.l.b16 %v1459
        %v2145 = vunpack.c.h.b16 %v1459
        %v2146 = vunpack.c.l.b16 %v1460
        %v2147 = vunpack.c.h.b16 %v1460
        %v2148 = vunpack.c.l.b16 %v1461
        %v2149 = vunpack.c.h.b16 %v1461
        %v2150 = vunpack.c.l.b16 %v1462
        %v2151 = vunpack.c.h.b16 %v1462
        %v2152 = vunpack.c.l.b16 %v1463
        %v2153 = vunpack.c.h.b16 %v1463
        %v2154 = vunpack.c.l.b16 %v1464
        %v2155 = vunpack.c.h.b16 %v1464
        %v2156 = vunpack.c.l.b16 %v1465
        %v2157 = vunpack.c.h.b16 %v1465
        %v2158 = vunpack.c.l.b16 %v1466
        %v2159 = vunpack.c.h.b16 %v1466
        %v2160 = vunpack.c.l.b16 %v1467
        %v2161 = vunpack.c.h.b16 %v1467
        %v2162 = vunpack.c.l.b16 %v1468
        %v2163 = vunpack.c.h.b16 %v1468
        %v2164 = vunpack.c.l.b16 %v1469
        %v2165 = vunpack.c.h.b16 %v1469
        %v2166 = vunpack.c.l.b16 %v1470
        %v2167 = vunpack.c.h.b16 %v1470
        %v2168 = vunpack.c.l.b16 %v1471
        %v2169 = vunpack.c.h.b16 %v1471
        %v2170 = vunpack.c.l.b16 %v1472
        %v2171 = vunpack.c.h.b16 %v1472
        %v2172 = vunpack.c.l.b16 %v1473
        %v2173 = vunpack.c.h.b16 %v1473
        %v2174 = vunpack.c.l.b16 %v1474
        %v2175 = vunpack.c.h.b16 %v1474
        %v2176 = vunpack.c.l.b16 %v1475
        %v2177 = vunpack.c.h.b16 %v1475
        %v2178 = vunpack.c.l.b16 %v1476
        %v2179 = vunpack.c.h.b16 %v1476
        %v2180 = vunpack.c.l.b16 %v1477
        %v2181 = vunpack.c.h.b16 %v1477
        %v2182 = vunpack.c.l.b16 %v1478
        %v2183 = vunpack.c.h.b16 %v1478
        %v2184 = vunpack.c.l.b16 %v1479
        %v2185 = vunpack.c.h.b16 %v1479
        %v2186 = vunpack.c.l.b16 %v1480
        %v2187 = vunpack.c.h.b16 %v1480
        %v2188 = vunpack.c.l.b16 %v1481
        %v2189 = vunpack.c.h.b16 %v1481
        %v2190 = vunpack.c.l.b16 %v1482
        %v2191 = vunpack.c.h.b16 %v1482
        %v2192 = vunpack.c.l.b16 %v1483
        %v2193 = vunpack.c.h.b16 %v1483
        %v2194 = vunpack.c.l.b16 %v1484
        %v2195 = vunpack.c.h.b16 %v1484
        %v2196 = vunpack.c.l.b16 %v1485
        %v2197 = vunpack.c.h.b16 %v1485
        %v2198 = vunpack.c.l.b16 %v1486
        %v2199 = vunpack.c.h.b16 %v1486
        %v2200 = vunpack.c.l.b16 %v1487
        %v2201 = vunpack.c.h.b16 %v1487
        %v2202 = vunpack.c.l.b16 %v1488
        %v2203 = vunpack.c.h.b16 %v1488
        %v2204 = vunpack.c.l.b16 %v1489
        %v2205 = vunpack.c.h.b16 %v1489
        %v2206 = vunpack.c.l.b16 %v1490
        %v2207 = vunpack.c.h.b16 %v1490
        %v2208 = vunpack.c.l.b16 %v1491
        %v2209 = vunpack.c.h.b16 %v1491
        %v2210 = vunpack.c.l.b16 %v1492
        %v2211 = vunpack.c.h.b16 %v1492
        %v2212 = vunpack.c.l.b16 %v1493
        %v2213 = vunpack.c.h.b16 %v1493
        %v2214 = vunpack.c.l.b16 %v1494
        %v2215 = vunpack.c.h.b16 %v1494
        %v2216 = vunpack.c.l.b16 %v1495
        %v2217 = vunpack.c.h.b16 %v1495
        %v2218 = vunpack.c.l.b16 %v1496
        %v2219 = vunpack.c.h.b16 %v1496
        %v2220 = vunpack.c.l.b16 %v1497
        %v2221 = vunpack.c.h.b16 %v1497
        %v2222 = vunpack.c.l.b16 %v1498
        %v2223 = vunpack.c.h.b16 %v1498
        %v2224 = vunpack.c.l.b16 %v1499
        %v2225 = vunpack.c.h.b16 %v1499
        %v2226 = vunpack.c.l.b16 %v1500
        %v2227 = vunpack.c.h.b16 %v1500
        %v2228 = vunpack.c.l.b16 %v1501
        %v2229 = vunpack.c.h.b16 %v1501
        %v2230 = vunpack.c.l.b16 %v1502
        %v2231 = vunpack.c.h.b16 %v1502
        %v2232 = vunpack.c.l.b16 %v1503
        %v2233 = vunpack.c.h.b16 %v1503
        %v2234 = vunpack.c.l.b16 %v1504
        %v2235 = vunpack.c.h.b16 %v1504
        %v2236 = vunpack.c.l.b16 %v1505
        %v2237 = vunpack.c.h.b16 %v1505
        %v2238 = vunpack.c.l.b16 %v1506
        %v2239 = vunpack.c.h.b16 %v1506
        %v2240 = vunpack.c.l.b16 %v1507
        %v2241 = vunpack.c.h.b16 %v1507
        %v2242 = vunpack.c.l.b16 %v1508
        %v2243 = vunpack.c.h.b16 %v1508
        %v2244 = vunpack.c.l.b16 %v1509
        %v2245 = vunpack.c.h.b16 %v1509
        %v2246 = vunpack.c.l.b16 %v1510
        %v2247 = vunpack.c.h.b16 %v1510
        %v2248 = vunpack.c.l.b16 %v1511
        %v2249 = vunpack.c.h.b16 %v1511
        %v2250 = vunpack.c.l.b16 %v1512
        %v2251 = vunpack.c.h.b16 %v1512
        %v2252 = vunpack.c.l.b16 %v1513
        %v2253 = vunpack.c.h.b16 %v1513
        %v2254 = vunpack.c.l.b16 %v1514
        %v2255 = vunpack.c.h.b16 %v1514
        %v2256 = vunpack.c.l.b16 %v1515
        %v2257 = vunpack.c.h.b16 %v1515
        %v2258 = vunpack.c.l.b16 %v1516
        %v2259 = vunpack.c.h.b16 %v1516
        %v2260 = vunpack.c.l.b16 %v1517
        %v2261 = vunpack.c.h.b16 %v1517
        %v2262 = vunpack.c.l.b16 %v1518
        %v2263 = vunpack.c.h.b16 %v1518
        %v2264 = vunpack.c.l.b16 %v1519
        %v2265 = vunpack.c.h.b16 %v1519
        %v2266 = vunpack.c.l.b16 %v1520
        %v2267 = vunpack.c.h.b16 %v1520
        %v2268 = vunpack.c.l.b16 %v1521
        %v2269 = vunpack.c.h.b16 %v1521
        %v2270 = vunpack.c.l.b16 %v1522
        %v2271 = vunpack.c.h.b16 %v1522
        %v2272 = vunpack.c.l.b16 %v1523
        %v2273 = vunpack.c.h.b16 %v1523
        %v2274 = vunpack.c.l.b16 %v1524
        %v2275 = vunpack.c.h.b16 %v1524
        %v2276 = vunpack.c.l.b16 %v1525
        %v2277 = vunpack.c.h.b16 %v1525
        %v2278 = vunpack.c.l.b16 %v1526
        %v2279 = vunpack.c.h.b16 %v1526
        %v2280 = vunpack.c.l.b16 %v1527
        %v2281 = vunpack.c.h.b16 %v1527
        %v2282 = vunpack.c.l.b16 %v1528
        %v2283 = vunpack.c.h.b16 %v1528
        %v2284 = vunpack.c.l.b16 %v1529
        %v2285 = vunpack.c.h.b16 %v1529
        %v2286 = vunpack.c.l.b16 %v1530
        %v2287 = vunpack.c.h.b16 %v1530
        %v2288 = vunpack.c.l.b16 %v1531
        %v2289 = vunpack.c.h.b16 %v1531
        %v2290 = vunpack.c.l.b16 %v1532
        %v2291 = vunpack.c.h.b16 %v1532
        %v2292 = vunpack.c.l.b16 %v1533
        %v2293 = vunpack.c.h.b16 %v1533
        %v2294 = vunpack.c.l.b16 %v1534
        %v2295 = vunpack.c.h.b16 %v1534
        %v2296 = vunpack.c.l.b16 %v1535
        %v2297 = vunpack.c.h.b16 %v1535
        %v2298 = vunpack.c.l.b16 %v1536
        %v2299 = vunpack.c.h.b16 %v1536
        %v2300 = vunpack.c.l.b16 %v1537
        %v2301 = vunpack.c.h.b16 %v1537
        %v2302 = vunpack.c.l.b16 %v1538
        %v2303 = vunpack.c.h.b16 %v1538
        %v2304 = vunpack.c.l.b16 %v1539
        %v2305 = vunpack.c.h.b16 %v1539
        %v2306 = vunpack.c.l.b16 %v1540
        %v2307 = vunpack.c.h.b16 %v1540
        %v2308 = vunpack.c.l.b16 %v1541
        %v2309 = vunpack.c.h.b16 %v1541
        %v2310 = vpack.c.b16 %v1806, %v1798
        %v2311 = vpack.c.b16 %v1807, %v1799
        %v2312 = vpack.c.b16 %v1808, %v1800
        %v2313 = vpack.c.b16 %v1809, %v1801
        %v2314 = vpack.c.b16 %v1810, %v1802
        %v2315 = vpack.c.b16 %v1811, %v1803
        %v2316 = vpack.c.b16 %v1812, %v1804
        %v2317 = vpack.c.b16 %v1813, %v1805
        %v2318 = vpack.c.b16 %v1822, %v1814
        %v2319 = vpack.c.b16 %v1823, %v1815
        %v2320 = vpack.c.b16 %v1824, %v1816
        %v2321 = vpack.c.b16 %v1825, %v1817
        %v2322 = vpack.c.b16 %v1826, %v1818
        %v2323 = vpack.c.b16 %v1827, %v1819
        %v2324 = vpack.c.b16 %v1828, %v1820
        %v2325 = vpack.c.b16 %v1829, %v1821
        %v2326 = vpack.c.b16 %v1838, %v1830
        %v2327 = vpack.c.b16 %v1839, %v1831
        %v2328 = vpack.c.b16 %v1840, %v1832
        %v2329 = vpack.c.b16 %v1841, %v1833
        %v2330 = vpack.c.b16 %v1842, %v1834
        %v2331 = vpack.c.b16 %v1843, %v1835
        %v2332 = vpack.c.b16 %v1844, %v1836
        %v2333 = vpack.c.b16 %v1845, %v1837
        %v2334 = vpack.c.b16 %v1854, %v1846
        %v2335 = vpack.c.b16 %v1855, %v1847
        %v2336 = vpack.c.b16 %v1856, %v1848
        %v2337 = vpack.c.b16 %v1857, %v1849
        %v2338 = vpack.c.b16 %v1858, %v1850
        %v2339 = vpack.c.b16 %v1859, %v1851
        %v2340 = vpack.c.b16 %v1860, %v1852
        %v2341 = vpack.c.b16 %v1861, %v1853
        %v2342 = vpack.c.b16 %v1870, %v1862
        %v2343 = vpack.c.b16 %v1871, %v1863
        %v2344 = vpack.c.b16 %v1872, %v1864
        %v2345 = vpack.c.b16 %v1873, %v1865
        %v2346 = vpack.c.b16 %v1874, %v1866
        %v2347 = vpack.c.b16 %v1875, %v1867
        %v2348 = vpack.c.b16 %v1876, %v1868
        %v2349 = vpack.c.b16 %v1877, %v1869
        %v2350 = vpack.c.b16 %v1886, %v1878
        %v2351 = vpack.c.b16 %v1887, %v1879
        %v2352 = vpack.c.b16 %v1888, %v1880
        %v2353 = vpack.c.b16 %v1889, %v1881
        %v2354 = vpack.c.b16 %v1890, %v1882
        %v2355 = vpack.c.b16 %v1891, %v1883
        %v2356 = vpack.c.b16 %v1892, %v1884
        %v2357 = vpack.c.b16 %v1893, %v1885
        %v2358 = vpack.c.b16 %v1902, %v1894
        %v2359 = vpack.c.b16 %v1903, %v1895
        %v2360 = vpack.c.b16 %v1904, %v1896
        %v2361 = vpack.c.b16 %v1905, %v1897
        %v2362 = vpack.c.b16 %v1906, %v1898
        %v2363 = vpack.c.b16 %v1907, %v1899
        %v2364 = vpack.c.b16 %v1908, %v1900
        %v2365 = vpack.c.b16 %v1909, %v1901
        %v2366 = vpack.c.b16 %v1918, %v1910
        %v2367 = vpack.c.b16 %v1919, %v1911
        %v2368 = vpack.c.b16 %v1920, %v1912
        %v2369 = vpack.c.b16 %v1921, %v1913
        %v2370 = vpack.c.b16 %v1922, %v1914
        %v2371 = vpack.c.b16 %v1923, %v1915
        %v2372 = vpack.c.b16 %v1924, %v1916
        %v2373 = vpack.c.b16 %v1925, %v1917
        %v2374 = vpack.c.b16 %v1934, %v1926
        %v2375 = vpack.c.b16 %v1935, %v1927
        %v2376 = vpack.c.b16 %v1936, %v1928
        %v2377 = vpack.c.b16 %v1937, %v1929
        %v2378 = vpack.c.b16 %v1938, %v1930
        %v2379 = vpack.c.b16 %v1939, %v1931
        %v2380 = vpack.c.b16 %v1940, %v1932
        %v2381 = vpack.c.b16 %v1941, %v1933
        %v2382 = vpack.c.b16 %v1950, %v1942
        %v2383 = vpack.c.b16 %v1951, %v1943
        %v2384 = vpack.c.b16 %v1952, %v1944
        %v2385 = vpack.c.b16 %v1953, %v1945
        %v2386 = vpack.c.b16 %v1954, %v1946
        %v2387 = vpack.c.b16 %v1955, %v1947
        %v2388 = vpack.c.b16 %v1956, %v1948
        %v2389 = vpack.c.b16 %v1957, %v1949
        %v2390 = vpack.c.b16 %v1966, %v1958
        %v2391 = vpack.c.b16 %v1967, %v1959
        %v2392 = vpack.c.b16 %v1968, %v1960
        %v2393 = vpack.c.b16 %v1969, %v1961
        %v2394 = vpack.c.b16 %v1970, %v1962
        %v2395 = vpack.c.b16 %v1971, %v1963
        %v2396 = vpack.c.b16 %v1972, %v1964
        %v2397 = vpack.c.b16 %v1973, %v1965
        %v2398 = vpack.c.b16 %v1982, %v1974
        %v2399 = vpack.c.b16 %v1983, %v1975
        %v2400 = vpack.c.b16 %v1984, %v1976
        %v2401 = vpack.c.b16 %v1985, %v1977
        %v2402 = vpack.c.b16 %v1986, %v1978
        %v2403 = vpack.c.b16 %v1987, %v1979
        %v2404 = vpack.c.b16 %v1988, %v1980
        %v2405 = vpack.c.b16 %v1989, %v1981
        %v2406 = vpack.c.b16 %v1998, %v1990
        %v2407 = vpack.c.b16 %v1999, %v1991
        %v2408 = vpack.c.b16 %v2000, %v1992
        %v2409 = vpack.c.b16 %v2001, %v1993
        %v2410 = vpack.c.b16 %v2002, %v1994
        %v2411 = vpack.c.b16 %v2003, %v1995
        %v2412 = vpack.c.b16 %v2004, %v1996
        %v2413 = vpack.c.b16 %v2005, %v1997
        %v2414 = vpack.c.b16 %v2014, %v2006
        %v2415 = vpack.c.b16 %v2015, %v2007
        %v2416 = vpack.c.b16 %v2016, %v2008
        %v2417 = vpack.c.b16 %v2017, %v2009
        %v2418 = vpack.c.b16 %v2018, %v2010
        %v2419 = vpack.c.b16 %v2019, %v2011
        %v2420 = vpack.c.b16 %v2020, %v2012
        %v2421 = vpack.c.b16 %v2021, %v2013
        %v2422 = vpack.c.b16 %v2030, %v2022
        %v2423 = vpack.c.b16 %v2031, %v2023
        %v2424 = vpack.c.b16 %v2032, %v2024
        %v2425 = vpack.c.b16 %v2033, %v2025
        %v2426 = vpack.c.b16 %v2034, %v2026
        %v2427 = vpack.c.b16 %v2035, %v2027
        %v2428 = vpack.c.b16 %v2036, %v2028
        %v2429 = vpack.c.b16 %v2037, %v2029
        %v2430 = vpack.c.b16 %v2046, %v2038
        %v2431 = vpack.c.b16 %v2047, %v2039
        %v2432 = vpack.c.b16 %v2048, %v2040
        %v2433 = vpack.c.b16 %v2049, %v2041
        %v2434 = vpack.c.b16 %v2050, %v2042
        %v2435 = vpack.c.b16 %v2051, %v2043
        %v2436 = vpack.c.b16 %v2052, %v2044
        %v2437 = vpack.c.b16 %v2053, %v2045
        %v2438 = vpack.c.b16 %v2062, %v2054
        %v2439 = vpack.c.b16 %v2063, %v2055
        %v2440 = vpack.c.b16 %v2064, %v2056
        %v2441 = vpack.c.b16 %v2065, %v2057
        %v2442 = vpack.c.b16 %v2066, %v2058
        %v2443 = vpack.c.b16 %v2067, %v2059
        %v2444 = vpack.c.b16 %v2068, %v2060
        %v2445 = vpack.c.b16 %v2069, %v2061
        %v2446 = vpack.c.b16 %v2078, %v2070
        %v2447 = vpack.c.b16 %v2079, %v2071
        %v2448 = vpack.c.b16 %v2080, %v2072
        %v2449 = vpack.c.b16 %v2081, %v2073
        %v2450 = vpack.c.b16 %v2082, %v2074
        %v2451 = vpack.c.b16 %v2083, %v2075
        %v2452 = vpack.c.b16 %v2084, %v2076
        %v2453 = vpack.c.b16 %v2085, %v2077
        %v2454 = vpack.c.b16 %v2094, %v2086
        %v2455 = vpack.c.b16 %v2095, %v2087
        %v2456 = vpack.c.b16 %v2096, %v2088
        %v2457 = vpack.c.b16 %v2097, %v2089
        %v2458 = vpack.c.b16 %v2098, %v2090
        %v2459 = vpack.c.b16 %v2099, %v2091
        %v2460 = vpack.c.b16 %v2100, %v2092
        %v2461 = vpack.c.b16 %v2101, %v2093
        %v2462 = vpack.c.b16 %v2110, %v2102
        %v2463 = vpack.c.b16 %v2111, %v2103
        %v2464 = vpack.c.b16 %v2112, %v2104
        %v2465 = vpack.c.b16 %v2113, %v2105
        %v2466 = vpack.c.b16 %v2114, %v2106
        %v2467 = vpack.c.b16 %v2115, %v2107
        %v2468 = vpack.c.b16 %v2116, %v2108
        %v2469 = vpack.c.b16 %v2117, %v2109
        %v2470 = vpack.c.b16 %v2126, %v2118
        %v2471 = vpack.c.b16 %v2127, %v2119
        %v2472 = vpack.c.b16 %v2128, %v2120
        %v2473 = vpack.c.b16 %v2129, %v2121
        %v2474 = vpack.c.b16 %v2130, %v2122
        %v2475 = vpack.c.b16 %v2131, %v2123
        %v2476 = vpack.c.b16 %v2132, %v2124
        %v2477 = vpack.c.b16 %v2133, %v2125
        %v2478 = vpack.c.b16 %v2142, %v2134
        %v2479 = vpack.c.b16 %v2143, %v2135
        %v2480 = vpack.c.b16 %v2144, %v2136
        %v2481 = vpack.c.b16 %v2145, %v2137
        %v2482 = vpack.c.b16 %v2146, %v2138
        %v2483 = vpack.c.b16 %v2147, %v2139
        %v2484 = vpack.c.b16 %v2148, %v2140
        %v2485 = vpack.c.b16 %v2149, %v2141
        %v2486 = vpack.c.b16 %v2158, %v2150
        %v2487 = vpack.c.b16 %v2159, %v2151
        %v2488 = vpack.c.b16 %v2160, %v2152
        %v2489 = vpack.c.b16 %v2161, %v2153
        %v2490 = vpack.c.b16 %v2162, %v2154
        %v2491 = vpack.c.b16 %v2163, %v2155
        %v2492 = vpack.c.b16 %v2164, %v2156
        %v2493 = vpack.c.b16 %v2165, %v2157
        %v2494 = vpack.c.b16 %v2174, %v2166
        %v2495 = vpack.c.b16 %v2175, %v2167
        %v2496 = vpack.c.b16 %v2176, %v2168
        %v2497 = vpack.c.b16 %v2177, %v2169
        %v2498 = vpack.c.b16 %v2178, %v2170
        %v2499 = vpack.c.b16 %v2179, %v2171
        %v2500 = vpack.c.b16 %v2180, %v2172
        %v2501 = vpack.c.b16 %v2181, %v2173
        %v2502 = vpack.c.b16 %v2190, %v2182
        %v2503 = vpack.c.b16 %v2191, %v2183
        %v2504 = vpack.c.b16 %v2192, %v2184
        %v2505 = vpack.c.b16 %v2193, %v2185
        %v2506 = vpack.c.b16 %v2194, %v2186
        %v2507 = vpack.c.b16 %v2195, %v2187
        %v2508 = vpack.c.b16 %v2196, %v2188
        %v2509 = vpack.c.b16 %v2197, %v2189
        %v2510 = vpack.c.b16 %v2206, %v2198
        %v2511 = vpack.c.b16 %v2207, %v2199
        %v2512 = vpack.c.b16 %v2208, %v2200
        %v2513 = vpack.c.b16 %v2209, %v2201
        %v2514 = vpack.c.b16 %v2210, %v2202
        %v2515 = vpack.c.b16 %v2211, %v2203
        %v2516 = vpack.c.b16 %v2212, %v2204
        %v2517 = vpack.c.b16 %v2213, %v2205
        %v2518 = vpack.c.b16 %v2222, %v2214
        %v2519 = vpack.c.b16 %v2223, %v2215
        %v2520 = vpack.c.b16 %v2224, %v2216
        %v2521 = vpack.c.b16 %v2225, %v2217
        %v2522 = vpack.c.b16 %v2226, %v2218
        %v2523 = vpack.c.b16 %v2227, %v2219
        %v2524 = vpack.c.b16 %v2228, %v2220
        %v2525 = vpack.c.b16 %v2229, %v2221
        %v2526 = vpack.c.b16 %v2238, %v2230
        %v2527 = vpack.c.b16 %v2239, %v2231
        %v2528 = vpack.c.b16 %v2240, %v2232
        %v2529 = vpack.c.b16 %v2241, %v2233
        %v2530 = vpack.c.b16 %v2242, %v2234
        %v2531 = vpack.c.b16 %v2243, %v2235
        %v2532 = vpack.c.b16 %v2244, %v2236
        %v2533 = vpack.c.b16 %v2245, %v2237
        %v2534 = vpack.c.b16 %v2254, %v2246
        %v2535 = vpack.c.b16 %v2255, %v2247
        %v2536 = vpack.c.b16 %v2256, %v2248
        %v2537 = vpack.c.b16 %v2257, %v2249
        %v2538 = vpack.c.b16 %v2258, %v2250
        %v2539 = vpack.c.b16 %v2259, %v2251
        %v2540 = vpack.c.b16 %v2260, %v2252
        %v2541 = vpack.c.b16 %v2261, %v2253
        %v2542 = vpack.c.b16 %v2270, %v2262
        %v2543 = vpack.c.b16 %v2271, %v2263
        %v2544 = vpack.c.b16 %v2272, %v2264
        %v2545 = vpack.c.b16 %v2273, %v2265
        %v2546 = vpack.c.b16 %v2274, %v2266
        %v2547 = vpack.c.b16 %v2275, %v2267
        %v2548 = vpack.c.b16 %v2276, %v2268
        %v2549 = vpack.c.b16 %v2277, %v2269
        %v2550 = vpack.c.b16 %v2286, %v2278
        %v2551 = vpack.c.b16 %v2287, %v2279
        %v2552 = vpack.c.b16 %v2288, %v2280
        %v2553 = vpack.c.b16 %v2289, %v2281
        %v2554 = vpack.c.b16 %v2290, %v2282
        %v2555 = vpack.c.b16 %v2291, %v2283
        %v2556 = vpack.c.b16 %v2292, %v2284
        %v2557 = vpack.c.b16 %v2293, %v2285
        %v2558 = vpack.c.b16 %v2302, %v2294
        %v2559 = vpack.c.b16 %v2303, %v2295
        %v2560 = vpack.c.b16 %v2304, %v2296
        %v2561 = vpack.c.b16 %v2305, %v2297
        %v2562 = vpack.c.b16 %v2306, %v2298
        %v2563 = vpack.c.b16 %v2307, %v2299
        %v2564 = vpack.c.b16 %v2308, %v2300
        %v2565 = vpack.c.b16 %v2309, %v2301
        %2822 = vmatprep.subr.bf16.mxu0 %v2367
        %2823 = vmatpush1.bf16.msra.mxu0 %v2366
        %2824 = vmatprep.subr.bf16.mxu0 %v2359
        %2825 = vmatpush1.bf16.msra.mxu0 %v2358
        %2826 = vmatprep.subr.bf16.mxu0 %v2351
        %2827 = vmatpush1.bf16.msra.mxu0 %v2350
        %2828 = vmatprep.subr.bf16.mxu0 %v2343
        %2829 = vmatpush1.bf16.msra.mxu0 %v2342
        %2830 = vmatprep.subr.bf16.mxu0 %v2335
        %2831 = vmatpush1.bf16.msra.mxu0 %v2334
        %2832 = vmatprep.subr.bf16.mxu0 %v2327
        %2833 = vmatpush1.bf16.msra.mxu0 %v2326
        %2834 = vmatprep.subr.bf16.mxu0 %v2319
        %2835 = vmatpush1.bf16.msra.mxu0 %v2318
        %2836 = vmatprep.subr.bf16.mxu0 %v2311
        %2837 = vmatpush1.bf16.msra.mxu0 %v2310
        %2838 = vmatprep.subr.bf16.mxu0 %v2431
        %2839 = vmatpush2.bf16.msra.mxu0 %v2430
        %2840 = vmatprep.subr.bf16.mxu0 %v2423
        %2841 = vmatpush2.bf16.msra.mxu0 %v2422
        %2842 = vmatprep.subr.bf16.mxu0 %v2415
        %2843 = vmatpush2.bf16.msra.mxu0 %v2414
        %2844 = vmatprep.subr.bf16.mxu0 %v2407
        %2845 = vmatpush2.bf16.msra.mxu0 %v2406
        %2846 = vmatprep.subr.bf16.mxu0 %v2399
        %2847 = vmatpush2.bf16.msra.mxu0 %v2398
        %2848 = vmatprep.subr.bf16.mxu0 %v2391
        %2849 = vmatpush2.bf16.msra.mxu0 %v2390
        %2850 = vmatprep.subr.bf16.mxu0 %v2383
        %2851 = vmatpush2.bf16.msra.mxu0 %v2382
        %2852 = vmatprep.subr.bf16.mxu0 %v2375
        %2853 = vmatpush2.bf16.msra.mxu0 %v2374
        %2854 = vmatprep.mubr.bf16.mxu0 %v1283
        %2855 = vmatmul.mubr.bf16.gmra.mxu0 %v1282
        %v2856 = vpop.f32.mrf.mxu0
        %v2857 = vadd.f32 0.0, %v2856
        %v2858 = vpop.f32.mrf.mxu0
        %v2859 = vadd.f32 0.0, %v2858
        %v2860 = vpop.f32.mrf.mxu0
        %v2861 = vpop.f32.mrf.mxu0
        %2862 = vdwg.mxu0
        %2863 = vmatprep.subr.bf16.mxu0 %v2495
        %2864 = vmatpush1.bf16.msra.mxu0 %v2494
        %2865 = vmatprep.subr.bf16.mxu0 %v2487
        %2866 = vmatpush1.bf16.msra.mxu0 %v2486
        %2867 = vmatprep.subr.bf16.mxu0 %v2479
        %2868 = vmatpush1.bf16.msra.mxu0 %v2478
        %2869 = vmatprep.subr.bf16.mxu0 %v2471
        %2870 = vmatpush1.bf16.msra.mxu0 %v2470
        %2871 = vmatprep.subr.bf16.mxu0 %v2463
        %2872 = vmatpush1.bf16.msra.mxu0 %v2462
        %2873 = vmatprep.subr.bf16.mxu0 %v2455
        %2874 = vmatpush1.bf16.msra.mxu0 %v2454
        %2875 = vmatprep.subr.bf16.mxu0 %v2447
        %2876 = vmatpush1.bf16.msra.mxu0 %v2446
        %2877 = vmatprep.subr.bf16.mxu0 %v2439
        %2878 = vmatpush1.bf16.msra.mxu0 %v2438
        %2879 = vmatprep.subr.bf16.mxu0 %v2559
        %2880 = vmatpush2.bf16.msra.mxu0 %v2558
        %2881 = vmatprep.subr.bf16.mxu0 %v2551
        %2882 = vmatpush2.bf16.msra.mxu0 %v2550
        %2883 = vmatprep.subr.bf16.mxu0 %v2543
        %2884 = vmatpush2.bf16.msra.mxu0 %v2542
        %2885 = vmatprep.subr.bf16.mxu0 %v2535
        %2886 = vmatpush2.bf16.msra.mxu0 %v2534
        %2887 = vmatprep.subr.bf16.mxu0 %v2527
        %2888 = vmatpush2.bf16.msra.mxu0 %v2526
        %2889 = vmatprep.subr.bf16.mxu0 %v2519
        %2890 = vmatpush2.bf16.msra.mxu0 %v2518
        %2891 = vmatprep.subr.bf16.mxu0 %v2511
        %2892 = vmatpush2.bf16.msra.mxu0 %v2510
        %2893 = vmatprep.subr.bf16.mxu0 %v2503
        %2894 = vmatpush2.bf16.msra.mxu0 %v2502
        %2895 = vmatprep.mubr.bf16.mxu0 %v1285
        %2896 = vmatmul.mubr.bf16.gmra.mxu0 %v1284
        %v2897 = vpop.f32.mrf.mxu0
        %v2898 = vadd.f32 %v2857, %v2897
        %v2899 = vpop.f32.mrf.mxu0
        %v2900 = vadd.f32 %v2859, %v2899
        %v2901 = vpop.f32.mrf.mxu0
        %v2902 = vpop.f32.mrf.mxu0
        %2903 = vdwg.mxu0
        %2904 = vmatprep.subr.bf16.mxu0 %v2369
        %2905 = vmatpush1.bf16.msra.mxu0 %v2368
        %2906 = vmatprep.subr.bf16.mxu0 %v2361
        %2907 = vmatpush1.bf16.msra.mxu0 %v2360
        %2908 = vmatprep.subr.bf16.mxu0 %v2353
        %2909 = vmatpush1.bf16.msra.mxu0 %v2352
        %2910 = vmatprep.subr.bf16.mxu0 %v2345
        %2911 = vmatpush1.bf16.msra.mxu0 %v2344
        %2912 = vmatprep.subr.bf16.mxu0 %v2337
        %2913 = vmatpush1.bf16.msra.mxu0 %v2336
        %2914 = vmatprep.subr.bf16.mxu0 %v2329
        %2915 = vmatpush1.bf16.msra.mxu0 %v2328
        %2916 = vmatprep.subr.bf16.mxu0 %v2321
        %2917 = vmatpush1.bf16.msra.mxu0 %v2320
        %2918 = vmatprep.subr.bf16.mxu0 %v2313
        %2919 = vmatpush1.bf16.msra.mxu0 %v2312
        %2920 = vmatprep.subr.bf16.mxu0 %v2433
        %2921 = vmatpush2.bf16.msra.mxu0 %v2432
        %2922 = vmatprep.subr.bf16.mxu0 %v2425
        %2923 = vmatpush2.bf16.msra.mxu0 %v2424
        %2924 = vmatprep.subr.bf16.mxu0 %v2417
        %2925 = vmatpush2.bf16.msra.mxu0 %v2416
        %2926 = vmatprep.subr.bf16.mxu0 %v2409
        %2927 = vmatpush2.bf16.msra.mxu0 %v2408
        %2928 = vmatprep.subr.bf16.mxu0 %v2401
        %2929 = vmatpush2.bf16.msra.mxu0 %v2400
        %2930 = vmatprep.subr.bf16.mxu0 %v2393
        %2931 = vmatpush2.bf16.msra.mxu0 %v2392
        %2932 = vmatprep.subr.bf16.mxu0 %v2385
        %2933 = vmatpush2.bf16.msra.mxu0 %v2384
        %2934 = vmatprep.subr.bf16.mxu0 %v2377
        %2935 = vmatpush2.bf16.msra.mxu0 %v2376
        %2936 = vmatprep.mubr.bf16.mxu0 %v1283
        %2937 = vmatmul.mubr.bf16.gmra.mxu0 %v1282
        %v2938 = vpop.f32.mrf.mxu0
        %v2939 = vadd.f32 0.0, %v2938
        %v2940 = vpop.f32.mrf.mxu0
        %v2941 = vadd.f32 0.0, %v2940
        %v2942 = vpop.f32.mrf.mxu0
        %v2943 = vpop.f32.mrf.mxu0
        %2944 = vdwg.mxu0
        %2945 = vmatprep.subr.bf16.mxu0 %v2497
        %2946 = vmatpush1.bf16.msra.mxu0 %v2496
        %2947 = vmatprep.subr.bf16.mxu0 %v2489
        %2948 = vmatpush1.bf16.msra.mxu0 %v2488
        %2949 = vmatprep.subr.bf16.mxu0 %v2481
        %2950 = vmatpush1.bf16.msra.mxu0 %v2480
        %2951 = vmatprep.subr.bf16.mxu0 %v2473
        %2952 = vmatpush1.bf16.msra.mxu0 %v2472
        %2953 = vmatprep.subr.bf16.mxu0 %v2465
        %2954 = vmatpush1.bf16.msra.mxu0 %v2464
        %2955 = vmatprep.subr.bf16.mxu0 %v2457
        %2956 = vmatpush1.bf16.msra.mxu0 %v2456
        %2957 = vmatprep.subr.bf16.mxu0 %v2449
        %2958 = vmatpush1.bf16.msra.mxu0 %v2448
        %2959 = vmatprep.subr.bf16.mxu0 %v2441
        %2960 = vmatpush1.bf16.msra.mxu0 %v2440
        %2961 = vmatprep.subr.bf16.mxu0 %v2561
        %2962 = vmatpush2.bf16.msra.mxu0 %v2560
        %2963 = vmatprep.subr.bf16.mxu0 %v2553
        %2964 = vmatpush2.bf16.msra.mxu0 %v2552
        %2965 = vmatprep.subr.bf16.mxu0 %v2545
        %2966 = vmatpush2.bf16.msra.mxu0 %v2544
        %2967 = vmatprep.subr.bf16.mxu0 %v2537
        %2968 = vmatpush2.bf16.msra.mxu0 %v2536
        %2969 = vmatprep.subr.bf16.mxu0 %v2529
        %2970 = vmatpush2.bf16.msra.mxu0 %v2528
        %2971 = vmatprep.subr.bf16.mxu0 %v2521
        %2972 = vmatpush2.bf16.msra.mxu0 %v2520
        %2973 = vmatprep.subr.bf16.mxu0 %v2513
        %2974 = vmatpush2.bf16.msra.mxu0 %v2512
        %2975 = vmatprep.subr.bf16.mxu0 %v2505
        %2976 = vmatpush2.bf16.msra.mxu0 %v2504
        %2977 = vmatprep.mubr.bf16.mxu0 %v1285
        %2978 = vmatmul.mubr.bf16.gmra.mxu0 %v1284
        %v2979 = vpop.f32.mrf.mxu0
        %v2980 = vadd.f32 %v2939, %v2979
        %v2981 = vpop.f32.mrf.mxu0
        %v2982 = vadd.f32 %v2941, %v2981
        %v2983 = vpop.f32.mrf.mxu0
        %v2984 = vpop.f32.mrf.mxu0
        %2985 = vdwg.mxu0
        %2986 = vmatprep.subr.bf16.mxu0 %v2371
        %2987 = vmatpush1.bf16.msra.mxu0 %v2370
        %2988 = vmatprep.subr.bf16.mxu0 %v2363
        %2989 = vmatpush1.bf16.msra.mxu0 %v2362
        %2990 = vmatprep.subr.bf16.mxu0 %v2355
        %2991 = vmatpush1.bf16.msra.mxu0 %v2354
        %2992 = vmatprep.subr.bf16.mxu0 %v2347
        %2993 = vmatpush1.bf16.msra.mxu0 %v2346
        %2994 = vmatprep.subr.bf16.mxu0 %v2339
        %2995 = vmatpush1.bf16.msra.mxu0 %v2338
        %2996 = vmatprep.subr.bf16.mxu0 %v2331
        %2997 = vmatpush1.bf16.msra.mxu0 %v2330
        %2998 = vmatprep.subr.bf16.mxu0 %v2323
        %2999 = vmatpush1.bf16.msra.mxu0 %v2322
        %3000 = vmatprep.subr.bf16.mxu0 %v2315
        %3001 = vmatpush1.bf16.msra.mxu0 %v2314
        %3002 = vmatprep.subr.bf16.mxu0 %v2435
        %3003 = vmatpush2.bf16.msra.mxu0 %v2434
        %3004 = vmatprep.subr.bf16.mxu0 %v2427
        %3005 = vmatpush2.bf16.msra.mxu0 %v2426
        %3006 = vmatprep.subr.bf16.mxu0 %v2419
        %3007 = vmatpush2.bf16.msra.mxu0 %v2418
        %3008 = vmatprep.subr.bf16.mxu0 %v2411
        %3009 = vmatpush2.bf16.msra.mxu0 %v2410
        %3010 = vmatprep.subr.bf16.mxu0 %v2403
        %3011 = vmatpush2.bf16.msra.mxu0 %v2402
        %3012 = vmatprep.subr.bf16.mxu0 %v2395
        %3013 = vmatpush2.bf16.msra.mxu0 %v2394
        %3014 = vmatprep.subr.bf16.mxu0 %v2387
        %3015 = vmatpush2.bf16.msra.mxu0 %v2386
        %3016 = vmatprep.subr.bf16.mxu0 %v2379
        %3017 = vmatpush2.bf16.msra.mxu0 %v2378
        %3018 = vmatprep.mubr.bf16.mxu0 %v1283
        %3019 = vmatmul.mubr.bf16.gmra.mxu0 %v1282
        %v3020 = vpop.f32.mrf.mxu0
        %v3021 = vadd.f32 0.0, %v3020
        %v3022 = vpop.f32.mrf.mxu0
        %v3023 = vadd.f32 0.0, %v3022
        %v3024 = vpop.f32.mrf.mxu0
        %v3025 = vpop.f32.mrf.mxu0
        %3026 = vdwg.mxu0
        %3027 = vmatprep.subr.bf16.mxu0 %v2499
        %3028 = vmatpush1.bf16.msra.mxu0 %v2498
        %3029 = vmatprep.subr.bf16.mxu0 %v2491
        %3030 = vmatpush1.bf16.msra.mxu0 %v2490
        %3031 = vmatprep.subr.bf16.mxu0 %v2483
        %3032 = vmatpush1.bf16.msra.mxu0 %v2482
        %3033 = vmatprep.subr.bf16.mxu0 %v2475
        %3034 = vmatpush1.bf16.msra.mxu0 %v2474
        %3035 = vmatprep.subr.bf16.mxu0 %v2467
        %3036 = vmatpush1.bf16.msra.mxu0 %v2466
        %3037 = vmatprep.subr.bf16.mxu0 %v2459
        %3038 = vmatpush1.bf16.msra.mxu0 %v2458
        %3039 = vmatprep.subr.bf16.mxu0 %v2451
        %3040 = vmatpush1.bf16.msra.mxu0 %v2450
        %3041 = vmatprep.subr.bf16.mxu0 %v2443
        %3042 = vmatpush1.bf16.msra.mxu0 %v2442
        %3043 = vmatprep.subr.bf16.mxu0 %v2563
        %3044 = vmatpush2.bf16.msra.mxu0 %v2562
        %3045 = vmatprep.subr.bf16.mxu0 %v2555
        %3046 = vmatpush2.bf16.msra.mxu0 %v2554
        %3047 = vmatprep.subr.bf16.mxu0 %v2547
        %3048 = vmatpush2.bf16.msra.mxu0 %v2546
        %3049 = vmatprep.subr.bf16.mxu0 %v2539
        %3050 = vmatpush2.bf16.msra.mxu0 %v2538
        %3051 = vmatprep.subr.bf16.mxu0 %v2531
        %3052 = vmatpush2.bf16.msra.mxu0 %v2530
        %3053 = vmatprep.subr.bf16.mxu0 %v2523
        %3054 = vmatpush2.bf16.msra.mxu0 %v2522
        %3055 = vmatprep.subr.bf16.mxu0 %v2515
        %3056 = vmatpush2.bf16.msra.mxu0 %v2514
        %3057 = vmatprep.subr.bf16.mxu0 %v2507
        %3058 = vmatpush2.bf16.msra.mxu0 %v2506
        %3059 = vmatprep.mubr.bf16.mxu0 %v1285
        %3060 = vmatmul.mubr.bf16.gmra.mxu0 %v1284
        %v3061 = vpop.f32.mrf.mxu0
        %v3062 = vadd.f32 %v3021, %v3061
        %v3063 = vpop.f32.mrf.mxu0
        %v3064 = vadd.f32 %v3023, %v3063
        %v3065 = vpop.f32.mrf.mxu0
        %v3066 = vpop.f32.mrf.mxu0
        %3067 = vdwg.mxu0
        %3068 = vmatprep.subr.bf16.mxu0 %v2373
        %3069 = vmatpush1.bf16.msra.mxu0 %v2372
        %3070 = vmatprep.subr.bf16.mxu0 %v2365
        %3071 = vmatpush1.bf16.msra.mxu0 %v2364
        %3072 = vmatprep.subr.bf16.mxu0 %v2357
        %3073 = vmatpush1.bf16.msra.mxu0 %v2356
        %3074 = vmatprep.subr.bf16.mxu0 %v2349
        %3075 = vmatpush1.bf16.msra.mxu0 %v2348
        %3076 = vmatprep.subr.bf16.mxu0 %v2341
        %3077 = vmatpush1.bf16.msra.mxu0 %v2340
        %3078 = vmatprep.subr.bf16.mxu0 %v2333
        %3079 = vmatpush1.bf16.msra.mxu0 %v2332
        %3080 = vmatprep.subr.bf16.mxu0 %v2325
        %3081 = vmatpush1.bf16.msra.mxu0 %v2324
        %3082 = vmatprep.subr.bf16.mxu0 %v2317
        %3083 = vmatpush1.bf16.msra.mxu0 %v2316
        %3084 = vmatprep.subr.bf16.mxu0 %v2437
        %3085 = vmatpush2.bf16.msra.mxu0 %v2436
        %3086 = vmatprep.subr.bf16.mxu0 %v2429
        %3087 = vmatpush2.bf16.msra.mxu0 %v2428
        %3088 = vmatprep.subr.bf16.mxu0 %v2421
        %3089 = vmatpush2.bf16.msra.mxu0 %v2420
        %3090 = vmatprep.subr.bf16.mxu0 %v2413
        %3091 = vmatpush2.bf16.msra.mxu0 %v2412
        %3092 = vmatprep.subr.bf16.mxu0 %v2405
        %3093 = vmatpush2.bf16.msra.mxu0 %v2404
        %3094 = vmatprep.subr.bf16.mxu0 %v2397
        %3095 = vmatpush2.bf16.msra.mxu0 %v2396
        %3096 = vmatprep.subr.bf16.mxu0 %v2389
        %3097 = vmatpush2.bf16.msra.mxu0 %v2388
        %3098 = vmatprep.subr.bf16.mxu0 %v2381
        %3099 = vmatpush2.bf16.msra.mxu0 %v2380
        %3100 = vmatprep.mubr.bf16.mxu0 %v1283
        %3101 = vmatmul.mubr.bf16.gmra.mxu0 %v1282
        %v3102 = vpop.f32.mrf.mxu0
        %v3103 = vadd.f32 0.0, %v3102
        %v3104 = vpop.f32.mrf.mxu0
        %v3105 = vadd.f32 0.0, %v3104
        %v3106 = vpop.f32.mrf.mxu0
        %v3107 = vpop.f32.mrf.mxu0
        %3108 = vdwg.mxu0
        %3109 = vmatprep.subr.bf16.mxu0 %v2501
        %3110 = vmatpush1.bf16.msra.mxu0 %v2500
        %3111 = vmatprep.subr.bf16.mxu0 %v2493
        %3112 = vmatpush1.bf16.msra.mxu0 %v2492
        %3113 = vmatprep.subr.bf16.mxu0 %v2485
        %3114 = vmatpush1.bf16.msra.mxu0 %v2484
        %3115 = vmatprep.subr.bf16.mxu0 %v2477
        %3116 = vmatpush1.bf16.msra.mxu0 %v2476
        %3117 = vmatprep.subr.bf16.mxu0 %v2469
        %3118 = vmatpush1.bf16.msra.mxu0 %v2468
        %3119 = vmatprep.subr.bf16.mxu0 %v2461
        %3120 = vmatpush1.bf16.msra.mxu0 %v2460
        %3121 = vmatprep.subr.bf16.mxu0 %v2453
        %3122 = vmatpush1.bf16.msra.mxu0 %v2452
        %3123 = vmatprep.subr.bf16.mxu0 %v2445
        %3124 = vmatpush1.bf16.msra.mxu0 %v2444
        %3125 = vmatprep.subr.bf16.mxu0 %v2565
        %3126 = vmatpush2.bf16.msra.mxu0 %v2564
        %3127 = vmatprep.subr.bf16.mxu0 %v2557
        %3128 = vmatpush2.bf16.msra.mxu0 %v2556
        %3129 = vmatprep.subr.bf16.mxu0 %v2549
        %3130 = vmatpush2.bf16.msra.mxu0 %v2548
        %3131 = vmatprep.subr.bf16.mxu0 %v2541
        %3132 = vmatpush2.bf16.msra.mxu0 %v2540
        %3133 = vmatprep.subr.bf16.mxu0 %v2533
        %3134 = vmatpush2.bf16.msra.mxu0 %v2532
        %3135 = vmatprep.subr.bf16.mxu0 %v2525
        %3136 = vmatpush2.bf16.msra.mxu0 %v2524
        %3137 = vmatprep.subr.bf16.mxu0 %v2517
        %3138 = vmatpush2.bf16.msra.mxu0 %v2516
        %3139 = vmatprep.subr.bf16.mxu0 %v2509
        %3140 = vmatpush2.bf16.msra.mxu0 %v2508
        %3141 = vmatprep.mubr.bf16.mxu0 %v1285
        %3142 = vmatmul.mubr.bf16.gmra.mxu0 %v1284
        %v3143 = vpop.f32.mrf.mxu0
        %v3144 = vadd.f32 %v3103, %v3143
        %v3145 = vpop.f32.mrf.mxu0
        %v3146 = vadd.f32 %v3105, %v3145
        %v3147 = vpop.f32.mrf.mxu0
        %v3148 = vpop.f32.mrf.mxu0
        %3149 = vdwg.mxu0
        %v3150 = vld [vmem:[#allocation13 + $0xd] sm:$0xff]
        %v3151 = vld [vmem:[#allocation13 + $0x15] sm:$0xff]
        %v3152 = vrot.slane %v2898, 4
        %v3153 = vadd.f32 %v2898, %v3152
        %v3154 = vrot.slane %v3153, 2
        %v3155 = vadd.f32 %v3153, %v3154
        %v3156 = vrot.slane %v3155, 1
        %v3157 = vadd.f32 %v3155, %v3156
        %v3158 = vrot.slane %v2900, 4
        %v3159 = vadd.f32 %v2900, %v3158
        %v3160 = vrot.slane %v3159, 2
        %v3161 = vadd.f32 %v3159, %v3160
        %v3162 = vrot.slane %v3161, 1
        %v3163 = vadd.f32 %v3161, %v3162
        %v3164 = vrot.slane %v2980, 4
        %v3165 = vadd.f32 %v2980, %v3164
        %v3166 = vrot.slane %v3165, 2
        %v3167 = vadd.f32 %v3165, %v3166
        %v3168 = vrot.slane %v3167, 1
        %v3169 = vadd.f32 %v3167, %v3168
        %v3170 = vrot.slane %v2982, 4
        %v3171 = vadd.f32 %v2982, %v3170
        %v3172 = vrot.slane %v3171, 2
        %v3173 = vadd.f32 %v3171, %v3172
        %v3174 = vrot.slane %v3173, 1
        %v3175 = vadd.f32 %v3173, %v3174
        %v3176 = vrot.slane %v3062, 4
        %v3177 = vadd.f32 %v3062, %v3176
        %v3178 = vrot.slane %v3177, 2
        %v3179 = vadd.f32 %v3177, %v3178
        %v3180 = vrot.slane %v3179, 1
        %v3181 = vadd.f32 %v3179, %v3180
        %v3182 = vrot.slane %v3064, 4
        %v3183 = vadd.f32 %v3064, %v3182
        %v3184 = vrot.slane %v3183, 2
        %v3185 = vadd.f32 %v3183, %v3184
        %v3186 = vrot.slane %v3185, 1
        %v3187 = vadd.f32 %v3185, %v3186
        %v3188 = vrot.slane %v3144, 4
        %v3189 = vadd.f32 %v3144, %v3188
        %v3190 = vrot.slane %v3189, 2
        %v3191 = vadd.f32 %v3189, %v3190
        %v3192 = vrot.slane %v3191, 1
        %v3193 = vadd.f32 %v3191, %v3192
        %v3194 = vrot.slane %v3146, 4
        %v3195 = vadd.f32 %v3146, %v3194
        %v3196 = vrot.slane %v3195, 2
        %v3197 = vadd.f32 %v3195, %v3196
        %v3198 = vrot.slane %v3197, 1
        %v3199 = vadd.f32 %v3197, %v3198
        %v3200 = vmul.f32 %v2898, %v2898
        %v3201 = vmul.f32 %v2900, %v2900
        %v3202 = vmul.f32 %v2980, %v2980
        %v3203 = vmul.f32 %v2982, %v2982
        %v3204 = vmul.f32 %v3062, %v3062
        %v3205 = vmul.f32 %v3064, %v3064
        %v3206 = vmul.f32 %v3144, %v3144
        %v3207 = vmul.f32 %v3146, %v3146
        %v3208 = vrot.slane %v3200, 4
        %v3209 = vadd.f32 %v3200, %v3208
        %v3210 = vrot.slane %v3209, 2
        %v3211 = vadd.f32 %v3209, %v3210
        %v3212 = vrot.slane %v3211, 1
        %v3213 = vadd.f32 %v3211, %v3212
        %v3214 = vrot.slane %v3201, 4
        %v3215 = vadd.f32 %v3201, %v3214
        %v3216 = vrot.slane %v3215, 2
        %v3217 = vadd.f32 %v3215, %v3216
        %v3218 = vrot.slane %v3217, 1
        %v3219 = vadd.f32 %v3217, %v3218
        %v3220 = vrot.slane %v3202, 4
        %v3221 = vadd.f32 %v3202, %v3220
        %v3222 = vrot.slane %v3221, 2
        %v3223 = vadd.f32 %v3221, %v3222
        %v3224 = vrot.slane %v3223, 1
        %v3225 = vadd.f32 %v3223, %v3224
        %v3226 = vrot.slane %v3203, 4
        %v3227 = vadd.f32 %v3203, %v3226
        %v3228 = vrot.slane %v3227, 2
        %v3229 = vadd.f32 %v3227, %v3228
        %v3230 = vrot.slane %v3229, 1
        %v3231 = vadd.f32 %v3229, %v3230
        %v3232 = vrot.slane %v3204, 4
        %v3233 = vadd.f32 %v3204, %v3232
        %v3234 = vrot.slane %v3233, 2
        %v3235 = vadd.f32 %v3233, %v3234
        %v3236 = vrot.slane %v3235, 1
        %v3237 = vadd.f32 %v3235, %v3236
        %v3238 = vrot.slane %v3205, 4
        %v3239 = vadd.f32 %v3205, %v3238
        %v3240 = vrot.slane %v3239, 2
        %v3241 = vadd.f32 %v3239, %v3240
        %v3242 = vrot.slane %v3241, 1
        %v3243 = vadd.f32 %v3241, %v3242
        %v3244 = vrot.slane %v3206, 4
        %v3245 = vadd.f32 %v3206, %v3244
        %v3246 = vrot.slane %v3245, 2
        %v3247 = vadd.f32 %v3245, %v3246
        %v3248 = vrot.slane %v3247, 1
        %v3249 = vadd.f32 %v3247, %v3248
        %v3250 = vrot.slane %v3207, 4
        %v3251 = vadd.f32 %v3207, %v3250
        %v3252 = vrot.slane %v3251, 2
        %v3253 = vadd.f32 %v3251, %v3252
        %v3254 = vrot.slane %v3253, 1
        %v3255 = vadd.f32 %v3253, %v3254
        %v3256 = vmul.f32 %v3157, 0.125
        %v3257 = vmul.f32 %v3163, 0.125
        %v3258 = vmul.f32 %v3169, 0.125
        %v3259 = vmul.f32 %v3175, 0.125
        %v3260 = vmul.f32 %v3181, 0.125
        %v3261 = vmul.f32 %v3187, 0.125
        %v3262 = vmul.f32 %v3193, 0.125
        %v3263 = vmul.f32 %v3199, 0.125
        %v3264 = vmul.f32 %v3213, 0.125
        %v3265 = vmul.f32 %v3219, 0.125
        %v3266 = vmul.f32 %v3225, 0.125
        %v3267 = vmul.f32 %v3231, 0.125
        %v3268 = vmul.f32 %v3237, 0.125
        %v3269 = vmul.f32 %v3243, 0.125
        %v3270 = vmul.f32 %v3249, 0.125
        %v3271 = vmul.f32 %v3255, 0.125
        %v3272 = vmul.f32 %v3256, %v3256
        %v3273 = vmul.f32 %v3257, %v3257
        %v3274 = vmul.f32 %v3258, %v3258
        %v3275 = vmul.f32 %v3259, %v3259
        %v3276 = vmul.f32 %v3260, %v3260
        %v3277 = vmul.f32 %v3261, %v3261
        %v3278 = vmul.f32 %v3262, %v3262
        %v3279 = vmul.f32 %v3263, %v3263
        %v3280 = vsub.f32 %v3264, %v3272
        %v3281 = vsub.f32 %v3265, %v3273
        %v3282 = vsub.f32 %v3266, %v3274
        %v3283 = vsub.f32 %v3267, %v3275
        %v3284 = vsub.f32 %v3268, %v3276
        %v3285 = vsub.f32 %v3269, %v3277
        %v3286 = vsub.f32 %v3270, %v3278
        %v3287 = vsub.f32 %v3271, %v3279
        %v3288 = vsub.f32 %v2898, %v3256
        %v3289 = vsub.f32 %v2900, %v3257
        %v3290 = vsub.f32 %v2980, %v3258
        %v3291 = vsub.f32 %v2982, %v3259
        %v3292 = vsub.f32 %v3062, %v3260
        %v3293 = vsub.f32 %v3064, %v3261
        %v3294 = vsub.f32 %v3144, %v3262
        %v3295 = vsub.f32 %v3146, %v3263
        %v3297 = vlaneseq
        %v3298 = vshrl.u32 %v3297, 7
        %v3299 = vsub.s32 0, %v3298
        %v3300 = vrot.slane %v3150, %v3299
        %v3301 = vlaneseq
        %v3302 = vshrl.u32 %v3301, 7
        %v3303 = vsub.s32 1, %v3302
        %v3304 = vrot.slane %v3150, %v3303
        %v3305 = vlaneseq
        %v3306 = vshrl.u32 %v3305, 7
        %v3307 = vsub.s32 2, %v3306
        %v3308 = vrot.slane %v3150, %v3307
        %v3309 = vlaneseq
        %v3310 = vshrl.u32 %v3309, 7
        %v3311 = vsub.s32 3, %v3310
        %v3312 = vrot.slane %v3150, %v3311
        %v3313 = vlaneseq
        %v3314 = vshrl.u32 %v3313, 7
        %v3315 = vsub.s32 4, %v3314
        %v3316 = vrot.slane %v3150, %v3315
        %v3317 = vlaneseq
        %v3318 = vshrl.u32 %v3317, 7
        %v3319 = vsub.s32 5, %v3318
        %v3320 = vrot.slane %v3150, %v3319
        %v3321 = vlaneseq
        %v3322 = vshrl.u32 %v3321, 7
        %v3323 = vsub.s32 6, %v3322
        %v3324 = vrot.slane %v3150, %v3323
        %v3325 = vlaneseq
        %v3326 = vshrl.u32 %v3325, 7
        %v3327 = vsub.s32 7, %v3326
        %v3328 = vrot.slane %v3150, %v3327
        %v3337 = vmul.f32 %v3300, %v3288
        %v3338 = vmul.f32 %v3304, %v3289
        %v3339 = vmul.f32 %v3308, %v3290
        %v3340 = vmul.f32 %v3312, %v3291
        %v3341 = vmul.f32 %v3316, %v3292
        %v3342 = vmul.f32 %v3320, %v3293
        %v3343 = vmul.f32 %v3324, %v3294
        %v3344 = vmul.f32 %v3328, %v3295
        %v3345 = vadd.f32 %v3280, 0.8
        %v3346 = vadd.f32 %v3281, 0.8
        %v3347 = vadd.f32 %v3282, 0.8
        %v3348 = vadd.f32 %v3283, 0.8
        %v3349 = vadd.f32 %v3284, 0.8
        %v3350 = vadd.f32 %v3285, 0.8
        %v3351 = vadd.f32 %v3286, 0.8
        %v3352 = vadd.f32 %v3287, 0.8
        %v3353 = vrsqrt.pop %v3345
        %v3354 = vrsqrt.pop %v3346
        %v3355 = vrsqrt.pop %v3347
        %v3356 = vrsqrt.pop %v3348
        %v3357 = vrsqrt.pop %v3349
        %v3358 = vrsqrt.pop %v3350
        %v3359 = vrsqrt.pop %v3351
        %v3360 = vrsqrt.pop %v3352
        %v3361 = vmul.f32 %v3337, %v3353
        %v3362 = vmul.f32 %v3338, %v3354
        %v3363 = vmul.f32 %v3339, %v3355
        %v3364 = vmul.f32 %v3340, %v3356
        %v3365 = vmul.f32 %v3341, %v3357
        %v3366 = vmul.f32 %v3342, %v3358
        %v3367 = vmul.f32 %v3343, %v3359
        %v3368 = vmul.f32 %v3344, %v3360
        %v3370 = vlaneseq
        %v3371 = vshrl.u32 %v3370, 7
        %v3372 = vsub.s32 0, %v3371
        %v3373 = vrot.slane %v3151, %v3372
        %v3374 = vlaneseq
        %v3375 = vshrl.u32 %v3374, 7
        %v3376 = vsub.s32 1, %v3375
        %v3377 = vrot.slane %v3151, %v3376
        %v3378 = vlaneseq
        %v3379 = vshrl.u32 %v3378, 7
        %v3380 = vsub.s32 2, %v3379
        %v3381 = vrot.slane %v3151, %v3380
        %v3382 = vlaneseq
        %v3383 = vshrl.u32 %v3382, 7
        %v3384 = vsub.s32 3, %v3383
        %v3385 = vrot.slane %v3151, %v3384
        %v3386 = vlaneseq
        %v3387 = vshrl.u32 %v3386, 7
        %v3388 = vsub.s32 4, %v3387
        %v3389 = vrot.slane %v3151, %v3388
        %v3390 = vlaneseq
        %v3391 = vshrl.u32 %v3390, 7
        %v3392 = vsub.s32 5, %v3391
        %v3393 = vrot.slane %v3151, %v3392
        %v3394 = vlaneseq
        %v3395 = vshrl.u32 %v3394, 7
        %v3396 = vsub.s32 6, %v3395
        %v3397 = vrot.slane %v3151, %v3396
        %v3398 = vlaneseq
        %v3399 = vshrl.u32 %v3398, 7
        %v3400 = vsub.s32 7, %v3399
        %v3401 = vrot.slane %v3151, %v3400
        %v3410 = vadd.f32 %v3361, %v3373
        %v3411 = vadd.f32 %v3362, %v3377
        %v3412 = vadd.f32 %v3363, %v3381
        %v3413 = vadd.f32 %v3364, %v3385
        %v3414 = vadd.f32 %v3365, %v3389
        %v3415 = vadd.f32 %v3366, %v3393
        %v3416 = vadd.f32 %v3367, %v3397
        %v3417 = vadd.f32 %v3368, %v3401
        %vm3418 = vcmp.gt.f32.partialorder %v3410, 0.0
        %vm3419 = vcmp.gt.f32.partialorder %v3411, 0.0
        %vm3420 = vcmp.gt.f32.partialorder %v3412, 0.0
        %vm3421 = vcmp.gt.f32.partialorder %v3413, 0.0
        %vm3422 = vcmp.gt.f32.partialorder %v3414, 0.0
        %vm3423 = vcmp.gt.f32.partialorder %v3415, 0.0
        %vm3424 = vcmp.gt.f32.partialorder %v3416, 0.0
        %vm3425 = vcmp.gt.f32.partialorder %v3417, 0.0
        %v3426 = vmul.f32 %v3410, 0.2
        %v3427 = vmul.f32 %v3411, 0.2
        %v3428 = vmul.f32 %v3412, 0.2
        %v3429 = vmul.f32 %v3413, 0.2
        %v3430 = vmul.f32 %v3414, 0.2
        %v3431 = vmul.f32 %v3415, 0.2
        %v3432 = vmul.f32 %v3416, 0.2
        %v3433 = vmul.f32 %v3417, 0.2
        %v3434 = vsel %vm3418, %v3410, %v3426
        %v3435 = vsel %vm3419, %v3411, %v3427
        %v3436 = vsel %vm3420, %v3412, %v3428
        %v3437 = vsel %vm3421, %v3413, %v3429
        %v3438 = vsel %vm3422, %v3414, %v3430
        %v3439 = vsel %vm3423, %v3415, %v3431
        %v3440 = vsel %vm3424, %v3416, %v3432
        %v3441 = vsel %vm3425, %v3417, %v3433
        %v3442 = vpack.c.bf16 %v3434, %v3434
        %v3443 = vpack.c.bf16 %v3435, %v3435
        %v3444 = vpack.c.bf16 %v3436, %v3436
        %v3445 = vpack.c.bf16 %v3437, %v3437
        %v3446 = vpack.c.bf16 %v3438, %v3438
        %v3447 = vpack.c.bf16 %v3439, %v3439
        %v3448 = vpack.c.bf16 %v3440, %v3440
        %v3449 = vpack.c.bf16 %v3441, %v3441
        %v3450 = vld [vmem:[#allocation11] sm:$0xff]
        %v3451 = vld [vmem:[#allocation11 + $0x8] sm:$0xff]
        %v3452 = vld [vmem:[#allocation11 + $0x10] sm:$0xff]
        %v3453 = vld [vmem:[#allocation11 + $0x18] sm:$0xff]
        %v3454 = vld [vmem:[#allocation11 + $0x20] sm:$0xff]
        %v3455 = vld [vmem:[#allocation11 + $0x28] sm:$0xff]
        %v3456 = vld [vmem:[#allocation11 + $0x30] sm:$0xff]
        %v3457 = vld [vmem:[#allocation11 + $0x38] sm:$0xff]
        %v3458 = vld [vmem:[#allocation11 + $0x40] sm:$0xff]
        %v3459 = vld [vmem:[#allocation11 + $0x48] sm:$0xff]
        %v3460 = vld [vmem:[#allocation11 + $0x50] sm:$0xff]
        %v3461 = vld [vmem:[#allocation11 + $0x58] sm:$0xff]
        %v3462 = vld [vmem:[#allocation11 + $0x60] sm:$0xff]
        %v3463 = vld [vmem:[#allocation11 + $0x68] sm:$0xff]
        %v3464 = vld [vmem:[#allocation11 + $0x70] sm:$0xff]
        %v3465 = vld [vmem:[#allocation11 + $0x78] sm:$0xff]
        %v3466 = vld [vmem:[#allocation11 + $0x80] sm:$0xff]
        %v3467 = vld [vmem:[#allocation11 + $0x88] sm:$0xff]
        %v3468 = vld [vmem:[#allocation11 + $0x90] sm:$0xff]
        %v3469 = vld [vmem:[#allocation11 + $0x98] sm:$0xff]
        %v3470 = vld [vmem:[#allocation11 + $0xa0] sm:$0xff]
        %v3471 = vld [vmem:[#allocation11 + $0xa8] sm:$0xff]
        %v3472 = vld [vmem:[#allocation11 + $0xb0] sm:$0xff]
        %v3473 = vld [vmem:[#allocation11 + $0xb8] sm:$0xff]
        %v3474 = vld [vmem:[#allocation11 + $0xc0] sm:$0xff]
        %v3475 = vld [vmem:[#allocation11 + $0xc8] sm:$0xff]
        %v3476 = vld [vmem:[#allocation11 + $0xd0] sm:$0xff]
        %v3477 = vld [vmem:[#allocation11 + $0xd8] sm:$0xff]
        %v3478 = vld [vmem:[#allocation11 + $0xe0] sm:$0xff]
        %v3479 = vld [vmem:[#allocation11 + $0xe8] sm:$0xff]
        %v3480 = vld [vmem:[#allocation11 + $0xf0] sm:$0xff]
        %v3481 = vld [vmem:[#allocation11 + $0xf8] sm:$0xff]
        %v3482 = vld [vmem:[#allocation11 + $0x100] sm:$0xff]
        %v3483 = vld [vmem:[#allocation11 + $0x108] sm:$0xff]
        %v3484 = vld [vmem:[#allocation11 + $0x110] sm:$0xff]
        %v3485 = vld [vmem:[#allocation11 + $0x118] sm:$0xff]
        %v3486 = vld [vmem:[#allocation11 + $0x120] sm:$0xff]
        %v3487 = vld [vmem:[#allocation11 + $0x128] sm:$0xff]
        %v3488 = vld [vmem:[#allocation11 + $0x130] sm:$0xff]
        %v3489 = vld [vmem:[#allocation11 + $0x138] sm:$0xff]
        %v3490 = vld [vmem:[#allocation11 + $0x140] sm:$0xff]
        %v3491 = vld [vmem:[#allocation11 + $0x148] sm:$0xff]
        %v3492 = vld [vmem:[#allocation11 + $0x150] sm:$0xff]
        %v3493 = vld [vmem:[#allocation11 + $0x158] sm:$0xff]
        %v3494 = vld [vmem:[#allocation11 + $0x160] sm:$0xff]
        %v3495 = vld [vmem:[#allocation11 + $0x168] sm:$0xff]
        %v3496 = vld [vmem:[#allocation11 + $0x170] sm:$0xff]
        %v3497 = vld [vmem:[#allocation11 + $0x178] sm:$0xff]
        %v3498 = vld [vmem:[#allocation11 + $0x180] sm:$0xff]
        %v3499 = vld [vmem:[#allocation11 + $0x188] sm:$0xff]
        %v3500 = vld [vmem:[#allocation11 + $0x190] sm:$0xff]
        %v3501 = vld [vmem:[#allocation11 + $0x198] sm:$0xff]
        %v3502 = vld [vmem:[#allocation11 + $0x1a0] sm:$0xff]
        %v3503 = vld [vmem:[#allocation11 + $0x1a8] sm:$0xff]
        %v3504 = vld [vmem:[#allocation11 + $0x1b0] sm:$0xff]
        %v3505 = vld [vmem:[#allocation11 + $0x1b8] sm:$0xff]
        %v3506 = vld [vmem:[#allocation11 + $0x1c0] sm:$0xff]
        %v3507 = vld [vmem:[#allocation11 + $0x1c8] sm:$0xff]
        %v3508 = vld [vmem:[#allocation11 + $0x1d0] sm:$0xff]
        %v3509 = vld [vmem:[#allocation11 + $0x1d8] sm:$0xff]
        %v3510 = vld [vmem:[#allocation11 + $0x1e0] sm:$0xff]
        %v3511 = vld [vmem:[#allocation11 + $0x1e8] sm:$0xff]
        %v3512 = vld [vmem:[#allocation11 + $0x1f0] sm:$0xff]
        %v3513 = vld [vmem:[#allocation11 + $0x1f8] sm:$0xff]
        %v3514 = vld [vmem:[#allocation11 + $0x200] sm:$0xff]
        %v3515 = vld [vmem:[#allocation11 + $0x208] sm:$0xff]
        %v3516 = vld [vmem:[#allocation11 + $0x210] sm:$0xff]
        %v3517 = vld [vmem:[#allocation11 + $0x218] sm:$0xff]
        %v3518 = vld [vmem:[#allocation11 + $0x220] sm:$0xff]
        %v3519 = vld [vmem:[#allocation11 + $0x228] sm:$0xff]
        %v3520 = vld [vmem:[#allocation11 + $0x230] sm:$0xff]
        %v3521 = vld [vmem:[#allocation11 + $0x238] sm:$0xff]
        %v3522 = vld [vmem:[#allocation11 + $0x240] sm:$0xff]
        %v3523 = vld [vmem:[#allocation11 + $0x248] sm:$0xff]
        %v3524 = vld [vmem:[#allocation11 + $0x250] sm:$0xff]
        %v3525 = vld [vmem:[#allocation11 + $0x258] sm:$0xff]
        %v3526 = vld [vmem:[#allocation11 + $0x260] sm:$0xff]
        %v3527 = vld [vmem:[#allocation11 + $0x268] sm:$0xff]
        %v3528 = vld [vmem:[#allocation11 + $0x270] sm:$0xff]
        %v3529 = vld [vmem:[#allocation11 + $0x278] sm:$0xff]
        %v3530 = vld [vmem:[#allocation11 + $0x280] sm:$0xff]
        %v3531 = vld [vmem:[#allocation11 + $0x288] sm:$0xff]
        %v3532 = vld [vmem:[#allocation11 + $0x290] sm:$0xff]
        %v3533 = vld [vmem:[#allocation11 + $0x298] sm:$0xff]
        %v3534 = vld [vmem:[#allocation11 + $0x2a0] sm:$0xff]
        %v3535 = vld [vmem:[#allocation11 + $0x2a8] sm:$0xff]
        %v3536 = vld [vmem:[#allocation11 + $0x2b0] sm:$0xff]
        %v3537 = vld [vmem:[#allocation11 + $0x2b8] sm:$0xff]
        %v3538 = vld [vmem:[#allocation11 + $0x2c0] sm:$0xff]
        %v3539 = vld [vmem:[#allocation11 + $0x2c8] sm:$0xff]
        %v3540 = vld [vmem:[#allocation11 + $0x2d0] sm:$0xff]
        %v3541 = vld [vmem:[#allocation11 + $0x2d8] sm:$0xff]
        %v3542 = vld [vmem:[#allocation11 + $0x2e0] sm:$0xff]
        %v3543 = vld [vmem:[#allocation11 + $0x2e8] sm:$0xff]
        %v3544 = vld [vmem:[#allocation11 + $0x2f0] sm:$0xff]
        %v3545 = vld [vmem:[#allocation11 + $0x2f8] sm:$0xff]
        %v3546 = vld [vmem:[#allocation11 + $0x300] sm:$0xff]
        %v3547 = vld [vmem:[#allocation11 + $0x308] sm:$0xff]
        %v3548 = vld [vmem:[#allocation11 + $0x310] sm:$0xff]
        %v3549 = vld [vmem:[#allocation11 + $0x318] sm:$0xff]
        %v3550 = vld [vmem:[#allocation11 + $0x320] sm:$0xff]
        %v3551 = vld [vmem:[#allocation11 + $0x328] sm:$0xff]
        %v3552 = vld [vmem:[#allocation11 + $0x330] sm:$0xff]
        %v3553 = vld [vmem:[#allocation11 + $0x338] sm:$0xff]
        %v3554 = vld [vmem:[#allocation11 + $0x340] sm:$0xff]
        %v3555 = vld [vmem:[#allocation11 + $0x348] sm:$0xff]
        %v3556 = vld [vmem:[#allocation11 + $0x350] sm:$0xff]
        %v3557 = vld [vmem:[#allocation11 + $0x358] sm:$0xff]
        %v3558 = vld [vmem:[#allocation11 + $0x360] sm:$0xff]
        %v3559 = vld [vmem:[#allocation11 + $0x368] sm:$0xff]
        %v3560 = vld [vmem:[#allocation11 + $0x370] sm:$0xff]
        %v3561 = vld [vmem:[#allocation11 + $0x378] sm:$0xff]
        %v3562 = vld [vmem:[#allocation11 + $0x380] sm:$0xff]
        %v3563 = vld [vmem:[#allocation11 + $0x388] sm:$0xff]
        %v3564 = vld [vmem:[#allocation11 + $0x390] sm:$0xff]
        %v3565 = vld [vmem:[#allocation11 + $0x398] sm:$0xff]
        %v3566 = vld [vmem:[#allocation11 + $0x3a0] sm:$0xff]
        %v3567 = vld [vmem:[#allocation11 + $0x3a8] sm:$0xff]
        %v3568 = vld [vmem:[#allocation11 + $0x3b0] sm:$0xff]
        %v3569 = vld [vmem:[#allocation11 + $0x3b8] sm:$0xff]
        %v3570 = vld [vmem:[#allocation11 + $0x3c0] sm:$0xff]
        %v3571 = vld [vmem:[#allocation11 + $0x3c8] sm:$0xff]
        %v3572 = vld [vmem:[#allocation11 + $0x3d0] sm:$0xff]
        %v3573 = vld [vmem:[#allocation11 + $0x3d8] sm:$0xff]
        %v3574 = vld [vmem:[#allocation11 + $0x3e0] sm:$0xff]
        %v3575 = vld [vmem:[#allocation11 + $0x3e8] sm:$0xff]
        %v3576 = vld [vmem:[#allocation11 + $0x3f0] sm:$0xff]
        %v3577 = vld [vmem:[#allocation11 + $0x3f8] sm:$0xff]
        %v3578 = vld [vmem:[#allocation13 + $0x1d] sm:$0x3]
        %v3580 = vlaneseq
        %v3581 = vshrl.u32 %v3580, 7
        %v3582 = vsub.s32 0, %v3581
        %v3583 = vrot.slane %v3578, %v3582
        %v3584 = vlaneseq
        %v3585 = vshrl.u32 %v3584, 7
        %v3586 = vsub.s32 1, %v3585
        %v3587 = vrot.slane %v3578, %v3586
        %v3718 = vunpack.c.l.b16 %v3450
        %v3719 = vunpack.c.h.b16 %v3450
        %v3720 = vunpack.c.l.b16 %v3451
        %v3721 = vunpack.c.h.b16 %v3451
        %v3722 = vunpack.c.l.b16 %v3452
        %v3723 = vunpack.c.h.b16 %v3452
        %v3724 = vunpack.c.l.b16 %v3453
        %v3725 = vunpack.c.h.b16 %v3453
        %v3726 = vunpack.c.l.b16 %v3454
        %v3727 = vunpack.c.h.b16 %v3454
        %v3728 = vunpack.c.l.b16 %v3455
        %v3729 = vunpack.c.h.b16 %v3455
        %v3730 = vunpack.c.l.b16 %v3456
        %v3731 = vunpack.c.h.b16 %v3456
        %v3732 = vunpack.c.l.b16 %v3457
        %v3733 = vunpack.c.h.b16 %v3457
        %v3734 = vunpack.c.l.b16 %v3458
        %v3735 = vunpack.c.h.b16 %v3458
        %v3736 = vunpack.c.l.b16 %v3459
        %v3737 = vunpack.c.h.b16 %v3459
        %v3738 = vunpack.c.l.b16 %v3460
        %v3739 = vunpack.c.h.b16 %v3460
        %v3740 = vunpack.c.l.b16 %v3461
        %v3741 = vunpack.c.h.b16 %v3461
        %v3742 = vunpack.c.l.b16 %v3462
        %v3743 = vunpack.c.h.b16 %v3462
        %v3744 = vunpack.c.l.b16 %v3463
        %v3745 = vunpack.c.h.b16 %v3463
        %v3746 = vunpack.c.l.b16 %v3464
        %v3747 = vunpack.c.h.b16 %v3464
        %v3748 = vunpack.c.l.b16 %v3465
        %v3749 = vunpack.c.h.b16 %v3465
        %v3750 = vunpack.c.l.b16 %v3466
        %v3751 = vunpack.c.h.b16 %v3466
        %v3752 = vunpack.c.l.b16 %v3467
        %v3753 = vunpack.c.h.b16 %v3467
        %v3754 = vunpack.c.l.b16 %v3468
        %v3755 = vunpack.c.h.b16 %v3468
        %v3756 = vunpack.c.l.b16 %v3469
        %v3757 = vunpack.c.h.b16 %v3469
        %v3758 = vunpack.c.l.b16 %v3470
        %v3759 = vunpack.c.h.b16 %v3470
        %v3760 = vunpack.c.l.b16 %v3471
        %v3761 = vunpack.c.h.b16 %v3471
        %v3762 = vunpack.c.l.b16 %v3472
        %v3763 = vunpack.c.h.b16 %v3472
        %v3764 = vunpack.c.l.b16 %v3473
        %v3765 = vunpack.c.h.b16 %v3473
        %v3766 = vunpack.c.l.b16 %v3474
        %v3767 = vunpack.c.h.b16 %v3474
        %v3768 = vunpack.c.l.b16 %v3475
        %v3769 = vunpack.c.h.b16 %v3475
        %v3770 = vunpack.c.l.b16 %v3476
        %v3771 = vunpack.c.h.b16 %v3476
        %v3772 = vunpack.c.l.b16 %v3477
        %v3773 = vunpack.c.h.b16 %v3477
        %v3774 = vunpack.c.l.b16 %v3478
        %v3775 = vunpack.c.h.b16 %v3478
        %v3776 = vunpack.c.l.b16 %v3479
        %v3777 = vunpack.c.h.b16 %v3479
        %v3778 = vunpack.c.l.b16 %v3480
        %v3779 = vunpack.c.h.b16 %v3480
        %v3780 = vunpack.c.l.b16 %v3481
        %v3781 = vunpack.c.h.b16 %v3481
        %v3782 = vunpack.c.l.b16 %v3482
        %v3783 = vunpack.c.h.b16 %v3482
        %v3784 = vunpack.c.l.b16 %v3483
        %v3785 = vunpack.c.h.b16 %v3483
        %v3786 = vunpack.c.l.b16 %v3484
        %v3787 = vunpack.c.h.b16 %v3484
        %v3788 = vunpack.c.l.b16 %v3485
        %v3789 = vunpack.c.h.b16 %v3485
        %v3790 = vunpack.c.l.b16 %v3486
        %v3791 = vunpack.c.h.b16 %v3486
        %v3792 = vunpack.c.l.b16 %v3487
        %v3793 = vunpack.c.h.b16 %v3487
        %v3794 = vunpack.c.l.b16 %v3488
        %v3795 = vunpack.c.h.b16 %v3488
        %v3796 = vunpack.c.l.b16 %v3489
        %v3797 = vunpack.c.h.b16 %v3489
        %v3798 = vunpack.c.l.b16 %v3490
        %v3799 = vunpack.c.h.b16 %v3490
        %v3800 = vunpack.c.l.b16 %v3491
        %v3801 = vunpack.c.h.b16 %v3491
        %v3802 = vunpack.c.l.b16 %v3492
        %v3803 = vunpack.c.h.b16 %v3492
        %v3804 = vunpack.c.l.b16 %v3493
        %v3805 = vunpack.c.h.b16 %v3493
        %v3806 = vunpack.c.l.b16 %v3494
        %v3807 = vunpack.c.h.b16 %v3494
        %v3808 = vunpack.c.l.b16 %v3495
        %v3809 = vunpack.c.h.b16 %v3495
        %v3810 = vunpack.c.l.b16 %v3496
        %v3811 = vunpack.c.h.b16 %v3496
        %v3812 = vunpack.c.l.b16 %v3497
        %v3813 = vunpack.c.h.b16 %v3497
        %v3814 = vunpack.c.l.b16 %v3498
        %v3815 = vunpack.c.h.b16 %v3498
        %v3816 = vunpack.c.l.b16 %v3499
        %v3817 = vunpack.c.h.b16 %v3499
        %v3818 = vunpack.c.l.b16 %v3500
        %v3819 = vunpack.c.h.b16 %v3500
        %v3820 = vunpack.c.l.b16 %v3501
        %v3821 = vunpack.c.h.b16 %v3501
        %v3822 = vunpack.c.l.b16 %v3502
        %v3823 = vunpack.c.h.b16 %v3502
        %v3824 = vunpack.c.l.b16 %v3503
        %v3825 = vunpack.c.h.b16 %v3503
        %v3826 = vunpack.c.l.b16 %v3504
        %v3827 = vunpack.c.h.b16 %v3504
        %v3828 = vunpack.c.l.b16 %v3505
        %v3829 = vunpack.c.h.b16 %v3505
        %v3830 = vunpack.c.l.b16 %v3506
        %v3831 = vunpack.c.h.b16 %v3506
        %v3832 = vunpack.c.l.b16 %v3507
        %v3833 = vunpack.c.h.b16 %v3507
        %v3834 = vunpack.c.l.b16 %v3508
        %v3835 = vunpack.c.h.b16 %v3508
        %v3836 = vunpack.c.l.b16 %v3509
        %v3837 = vunpack.c.h.b16 %v3509
        %v3838 = vunpack.c.l.b16 %v3510
        %v3839 = vunpack.c.h.b16 %v3510
        %v3840 = vunpack.c.l.b16 %v3511
        %v3841 = vunpack.c.h.b16 %v3511
        %v3842 = vunpack.c.l.b16 %v3512
        %v3843 = vunpack.c.h.b16 %v3512
        %v3844 = vunpack.c.l.b16 %v3513
        %v3845 = vunpack.c.h.b16 %v3513
        %v3846 = vunpack.c.l.b16 %v3514
        %v3847 = vunpack.c.h.b16 %v3514
        %v3848 = vunpack.c.l.b16 %v3515
        %v3849 = vunpack.c.h.b16 %v3515
        %v3850 = vunpack.c.l.b16 %v3516
        %v3851 = vunpack.c.h.b16 %v3516
        %v3852 = vunpack.c.l.b16 %v3517
        %v3853 = vunpack.c.h.b16 %v3517
        %v3854 = vunpack.c.l.b16 %v3518
        %v3855 = vunpack.c.h.b16 %v3518
        %v3856 = vunpack.c.l.b16 %v3519
        %v3857 = vunpack.c.h.b16 %v3519
        %v3858 = vunpack.c.l.b16 %v3520
        %v3859 = vunpack.c.h.b16 %v3520
        %v3860 = vunpack.c.l.b16 %v3521
        %v3861 = vunpack.c.h.b16 %v3521
        %v3862 = vunpack.c.l.b16 %v3522
        %v3863 = vunpack.c.h.b16 %v3522
        %v3864 = vunpack.c.l.b16 %v3523
        %v3865 = vunpack.c.h.b16 %v3523
        %v3866 = vunpack.c.l.b16 %v3524
        %v3867 = vunpack.c.h.b16 %v3524
        %v3868 = vunpack.c.l.b16 %v3525
        %v3869 = vunpack.c.h.b16 %v3525
        %v3870 = vunpack.c.l.b16 %v3526
        %v3871 = vunpack.c.h.b16 %v3526
        %v3872 = vunpack.c.l.b16 %v3527
        %v3873 = vunpack.c.h.b16 %v3527
        %v3874 = vunpack.c.l.b16 %v3528
        %v3875 = vunpack.c.h.b16 %v3528
        %v3876 = vunpack.c.l.b16 %v3529
        %v3877 = vunpack.c.h.b16 %v3529
        %v3878 = vunpack.c.l.b16 %v3530
        %v3879 = vunpack.c.h.b16 %v3530
        %v3880 = vunpack.c.l.b16 %v3531
        %v3881 = vunpack.c.h.b16 %v3531
        %v3882 = vunpack.c.l.b16 %v3532
        %v3883 = vunpack.c.h.b16 %v3532
        %v3884 = vunpack.c.l.b16 %v3533
        %v3885 = vunpack.c.h.b16 %v3533
        %v3886 = vunpack.c.l.b16 %v3534
        %v3887 = vunpack.c.h.b16 %v3534
        %v3888 = vunpack.c.l.b16 %v3535
        %v3889 = vunpack.c.h.b16 %v3535
        %v3890 = vunpack.c.l.b16 %v3536
        %v3891 = vunpack.c.h.b16 %v3536
        %v3892 = vunpack.c.l.b16 %v3537
        %v3893 = vunpack.c.h.b16 %v3537
        %v3894 = vunpack.c.l.b16 %v3538
        %v3895 = vunpack.c.h.b16 %v3538
        %v3896 = vunpack.c.l.b16 %v3539
        %v3897 = vunpack.c.h.b16 %v3539
        %v3898 = vunpack.c.l.b16 %v3540
        %v3899 = vunpack.c.h.b16 %v3540
        %v3900 = vunpack.c.l.b16 %v3541
        %v3901 = vunpack.c.h.b16 %v3541
        %v3902 = vunpack.c.l.b16 %v3542
        %v3903 = vunpack.c.h.b16 %v3542
        %v3904 = vunpack.c.l.b16 %v3543
        %v3905 = vunpack.c.h.b16 %v3543
        %v3906 = vunpack.c.l.b16 %v3544
        %v3907 = vunpack.c.h.b16 %v3544
        %v3908 = vunpack.c.l.b16 %v3545
        %v3909 = vunpack.c.h.b16 %v3545
        %v3910 = vunpack.c.l.b16 %v3546
        %v3911 = vunpack.c.h.b16 %v3546
        %v3912 = vunpack.c.l.b16 %v3547
        %v3913 = vunpack.c.h.b16 %v3547
        %v3914 = vunpack.c.l.b16 %v3548
        %v3915 = vunpack.c.h.b16 %v3548
        %v3916 = vunpack.c.l.b16 %v3549
        %v3917 = vunpack.c.h.b16 %v3549
        %v3918 = vunpack.c.l.b16 %v3550
        %v3919 = vunpack.c.h.b16 %v3550
        %v3920 = vunpack.c.l.b16 %v3551
        %v3921 = vunpack.c.h.b16 %v3551
        %v3922 = vunpack.c.l.b16 %v3552
        %v3923 = vunpack.c.h.b16 %v3552
        %v3924 = vunpack.c.l.b16 %v3553
        %v3925 = vunpack.c.h.b16 %v3553
        %v3926 = vunpack.c.l.b16 %v3554
        %v3927 = vunpack.c.h.b16 %v3554
        %v3928 = vunpack.c.l.b16 %v3555
        %v3929 = vunpack.c.h.b16 %v3555
        %v3930 = vunpack.c.l.b16 %v3556
        %v3931 = vunpack.c.h.b16 %v3556
        %v3932 = vunpack.c.l.b16 %v3557
        %v3933 = vunpack.c.h.b16 %v3557
        %v3934 = vunpack.c.l.b16 %v3558
        %v3935 = vunpack.c.h.b16 %v3558
        %v3936 = vunpack.c.l.b16 %v3559
        %v3937 = vunpack.c.h.b16 %v3559
        %v3938 = vunpack.c.l.b16 %v3560
        %v3939 = vunpack.c.h.b16 %v3560
        %v3940 = vunpack.c.l.b16 %v3561
        %v3941 = vunpack.c.h.b16 %v3561
        %v3942 = vunpack.c.l.b16 %v3562
        %v3943 = vunpack.c.h.b16 %v3562
        %v3944 = vunpack.c.l.b16 %v3563
        %v3945 = vunpack.c.h.b16 %v3563
        %v3946 = vunpack.c.l.b16 %v3564
        %v3947 = vunpack.c.h.b16 %v3564
        %v3948 = vunpack.c.l.b16 %v3565
        %v3949 = vunpack.c.h.b16 %v3565
        %v3950 = vunpack.c.l.b16 %v3566
        %v3951 = vunpack.c.h.b16 %v3566
        %v3952 = vunpack.c.l.b16 %v3567
        %v3953 = vunpack.c.h.b16 %v3567
        %v3954 = vunpack.c.l.b16 %v3568
        %v3955 = vunpack.c.h.b16 %v3568
        %v3956 = vunpack.c.l.b16 %v3569
        %v3957 = vunpack.c.h.b16 %v3569
        %v3958 = vunpack.c.l.b16 %v3570
        %v3959 = vunpack.c.h.b16 %v3570
        %v3960 = vunpack.c.l.b16 %v3571
        %v3961 = vunpack.c.h.b16 %v3571
        %v3962 = vunpack.c.l.b16 %v3572
        %v3963 = vunpack.c.h.b16 %v3572
        %v3964 = vunpack.c.l.b16 %v3573
        %v3965 = vunpack.c.h.b16 %v3573
        %v3966 = vunpack.c.l.b16 %v3574
        %v3967 = vunpack.c.h.b16 %v3574
        %v3968 = vunpack.c.l.b16 %v3575
        %v3969 = vunpack.c.h.b16 %v3575
        %v3970 = vunpack.c.l.b16 %v3576
        %v3971 = vunpack.c.h.b16 %v3576
        %v3972 = vunpack.c.l.b16 %v3577
        %v3973 = vunpack.c.h.b16 %v3577
        %v3974 = vpack.c.b16 %v3720, %v3718
        %v3975 = vpack.c.b16 %v3721, %v3719
        %v3976 = vpack.c.b16 %v3724, %v3722
        %v3977 = vpack.c.b16 %v3725, %v3723
        %v3978 = vpack.c.b16 %v3728, %v3726
        %v3979 = vpack.c.b16 %v3729, %v3727
        %v3980 = vpack.c.b16 %v3732, %v3730
        %v3981 = vpack.c.b16 %v3733, %v3731
        %v3982 = vpack.c.b16 %v3736, %v3734
        %v3983 = vpack.c.b16 %v3737, %v3735
        %v3984 = vpack.c.b16 %v3740, %v3738
        %v3985 = vpack.c.b16 %v3741, %v3739
        %v3986 = vpack.c.b16 %v3744, %v3742
        %v3987 = vpack.c.b16 %v3745, %v3743
        %v3988 = vpack.c.b16 %v3748, %v3746
        %v3989 = vpack.c.b16 %v3749, %v3747
        %v3990 = vpack.c.b16 %v3752, %v3750
        %v3991 = vpack.c.b16 %v3753, %v3751
        %v3992 = vpack.c.b16 %v3756, %v3754
        %v3993 = vpack.c.b16 %v3757, %v3755
        %v3994 = vpack.c.b16 %v3760, %v3758
        %v3995 = vpack.c.b16 %v3761, %v3759
        %v3996 = vpack.c.b16 %v3764, %v3762
        %v3997 = vpack.c.b16 %v3765, %v3763
        %v3998 = vpack.c.b16 %v3768, %v3766
        %v3999 = vpack.c.b16 %v3769, %v3767
        %v4000 = vpack.c.b16 %v3772, %v3770
        %v4001 = vpack.c.b16 %v3773, %v3771
        %v4002 = vpack.c.b16 %v3776, %v3774
        %v4003 = vpack.c.b16 %v3777, %v3775
        %v4004 = vpack.c.b16 %v3780, %v3778
        %v4005 = vpack.c.b16 %v3781, %v3779
        %v4006 = vpack.c.b16 %v3784, %v3782
        %v4007 = vpack.c.b16 %v3785, %v3783
        %v4008 = vpack.c.b16 %v3788, %v3786
        %v4009 = vpack.c.b16 %v3789, %v3787
        %v4010 = vpack.c.b16 %v3792, %v3790
        %v4011 = vpack.c.b16 %v3793, %v3791
        %v4012 = vpack.c.b16 %v3796, %v3794
        %v4013 = vpack.c.b16 %v3797, %v3795
        %v4014 = vpack.c.b16 %v3800, %v3798
        %v4015 = vpack.c.b16 %v3801, %v3799
        %v4016 = vpack.c.b16 %v3804, %v3802
        %v4017 = vpack.c.b16 %v3805, %v3803
        %v4018 = vpack.c.b16 %v3808, %v3806
        %v4019 = vpack.c.b16 %v3809, %v3807
        %v4020 = vpack.c.b16 %v3812, %v3810
        %v4021 = vpack.c.b16 %v3813, %v3811
        %v4022 = vpack.c.b16 %v3816, %v3814
        %v4023 = vpack.c.b16 %v3817, %v3815
        %v4024 = vpack.c.b16 %v3820, %v3818
        %v4025 = vpack.c.b16 %v3821, %v3819
        %v4026 = vpack.c.b16 %v3824, %v3822
        %v4027 = vpack.c.b16 %v3825, %v3823
        %v4028 = vpack.c.b16 %v3828, %v3826
        %v4029 = vpack.c.b16 %v3829, %v3827
        %v4030 = vpack.c.b16 %v3832, %v3830
        %v4031 = vpack.c.b16 %v3833, %v3831
        %v4032 = vpack.c.b16 %v3836, %v3834
        %v4033 = vpack.c.b16 %v3837, %v3835
        %v4034 = vpack.c.b16 %v3840, %v3838
        %v4035 = vpack.c.b16 %v3841, %v3839
        %v4036 = vpack.c.b16 %v3844, %v3842
        %v4037 = vpack.c.b16 %v3845, %v3843
        %v4038 = vpack.c.b16 %v3848, %v3846
        %v4039 = vpack.c.b16 %v3849, %v3847
        %v4040 = vpack.c.b16 %v3852, %v3850
        %v4041 = vpack.c.b16 %v3853, %v3851
        %v4042 = vpack.c.b16 %v3856, %v3854
        %v4043 = vpack.c.b16 %v3857, %v3855
        %v4044 = vpack.c.b16 %v3860, %v3858
        %v4045 = vpack.c.b16 %v3861, %v3859
        %v4046 = vpack.c.b16 %v3864, %v3862
        %v4047 = vpack.c.b16 %v3865, %v3863
        %v4048 = vpack.c.b16 %v3868, %v3866
        %v4049 = vpack.c.b16 %v3869, %v3867
        %v4050 = vpack.c.b16 %v3872, %v3870
        %v4051 = vpack.c.b16 %v3873, %v3871
        %v4052 = vpack.c.b16 %v3876, %v3874
        %v4053 = vpack.c.b16 %v3877, %v3875
        %v4054 = vpack.c.b16 %v3880, %v3878
        %v4055 = vpack.c.b16 %v3881, %v3879
        %v4056 = vpack.c.b16 %v3884, %v3882
        %v4057 = vpack.c.b16 %v3885, %v3883
        %v4058 = vpack.c.b16 %v3888, %v3886
        %v4059 = vpack.c.b16 %v3889, %v3887
        %v4060 = vpack.c.b16 %v3892, %v3890
        %v4061 = vpack.c.b16 %v3893, %v3891
        %v4062 = vpack.c.b16 %v3896, %v3894
        %v4063 = vpack.c.b16 %v3897, %v3895
        %v4064 = vpack.c.b16 %v3900, %v3898
        %v4065 = vpack.c.b16 %v3901, %v3899
        %v4066 = vpack.c.b16 %v3904, %v3902
        %v4067 = vpack.c.b16 %v3905, %v3903
        %v4068 = vpack.c.b16 %v3908, %v3906
        %v4069 = vpack.c.b16 %v3909, %v3907
        %v4070 = vpack.c.b16 %v3912, %v3910
        %v4071 = vpack.c.b16 %v3913, %v3911
        %v4072 = vpack.c.b16 %v3916, %v3914
        %v4073 = vpack.c.b16 %v3917, %v3915
        %v4074 = vpack.c.b16 %v3920, %v3918
        %v4075 = vpack.c.b16 %v3921, %v3919
        %v4076 = vpack.c.b16 %v3924, %v3922
        %v4077 = vpack.c.b16 %v3925, %v3923
        %v4078 = vpack.c.b16 %v3928, %v3926
        %v4079 = vpack.c.b16 %v3929, %v3927
        %v4080 = vpack.c.b16 %v3932, %v3930
        %v4081 = vpack.c.b16 %v3933, %v3931
        %v4082 = vpack.c.b16 %v3936, %v3934
        %v4083 = vpack.c.b16 %v3937, %v3935
        %v4084 = vpack.c.b16 %v3940, %v3938
        %v4085 = vpack.c.b16 %v3941, %v3939
        %v4086 = vpack.c.b16 %v3944, %v3942
        %v4087 = vpack.c.b16 %v3945, %v3943
        %v4088 = vpack.c.b16 %v3948, %v3946
        %v4089 = vpack.c.b16 %v3949, %v3947
        %v4090 = vpack.c.b16 %v3952, %v3950
        %v4091 = vpack.c.b16 %v3953, %v3951
        %v4092 = vpack.c.b16 %v3956, %v3954
        %v4093 = vpack.c.b16 %v3957, %v3955
        %v4094 = vpack.c.b16 %v3960, %v3958
        %v4095 = vpack.c.b16 %v3961, %v3959
        %v4096 = vpack.c.b16 %v3964, %v3962
        %v4097 = vpack.c.b16 %v3965, %v3963
        %v4098 = vpack.c.b16 %v3968, %v3966
        %v4099 = vpack.c.b16 %v3969, %v3967
        %v4100 = vpack.c.b16 %v3972, %v3970
        %v4101 = vpack.c.b16 %v3973, %v3971
        %4230 = vmatprep.subr.bf16.mxu0 %v3989
        %4231 = vmatpush1.bf16.msra.mxu0 %v3988
        %4232 = vmatprep.subr.bf16.mxu0 %v3987
        %4233 = vmatpush1.bf16.msra.mxu0 %v3986
        %4234 = vmatprep.subr.bf16.mxu0 %v3985
        %4235 = vmatpush1.bf16.msra.mxu0 %v3984
        %4236 = vmatprep.subr.bf16.mxu0 %v3983
        %4237 = vmatpush1.bf16.msra.mxu0 %v3982
        %4238 = vmatprep.subr.bf16.mxu0 %v3981
        %4239 = vmatpush1.bf16.msra.mxu0 %v3980
        %4240 = vmatprep.subr.bf16.mxu0 %v3979
        %4241 = vmatpush1.bf16.msra.mxu0 %v3978
        %4242 = vmatprep.subr.bf16.mxu0 %v3977
        %4243 = vmatpush1.bf16.msra.mxu0 %v3976
        %4244 = vmatprep.subr.bf16.mxu0 %v3975
        %4245 = vmatpush1.bf16.msra.mxu0 %v3974
        %4246 = vmatprep.subr.bf16.mxu0 %v4005
        %4247 = vmatpush2.bf16.msra.mxu0 %v4004
        %4248 = vmatprep.subr.bf16.mxu0 %v4003
        %4249 = vmatpush2.bf16.msra.mxu0 %v4002
        %4250 = vmatprep.subr.bf16.mxu0 %v4001
        %4251 = vmatpush2.bf16.msra.mxu0 %v4000
        %4252 = vmatprep.subr.bf16.mxu0 %v3999
        %4253 = vmatpush2.bf16.msra.mxu0 %v3998
        %4254 = vmatprep.subr.bf16.mxu0 %v3997
        %4255 = vmatpush2.bf16.msra.mxu0 %v3996
        %4256 = vmatprep.subr.bf16.mxu0 %v3995
        %4257 = vmatpush2.bf16.msra.mxu0 %v3994
        %4258 = vmatprep.subr.bf16.mxu0 %v3993
        %4259 = vmatpush2.bf16.msra.mxu0 %v3992
        %4260 = vmatprep.subr.bf16.mxu0 %v3991
        %4261 = vmatpush2.bf16.msra.mxu0 %v3990
        %4262 = vmatprep.mubr.bf16.mxu0 %v3443
        %4263 = vmatmul.mubr.bf16.gmra.mxu0 %v3442
        %v4264 = vpop.f32.mrf.mxu0
        %v4265 = vadd.f32 %v3583, %v4264
        %v4266 = vpop.f32.mrf.mxu0
        %v4267 = vadd.f32 %v3587, %v4266
        %v4268 = vpop.f32.mrf.mxu0
        %v4269 = vpop.f32.mrf.mxu0
        %4270 = vdwg.mxu0
        %4271 = vmatprep.subr.bf16.mxu0 %v4021
        %4272 = vmatpush1.bf16.msra.mxu0 %v4020
        %4273 = vmatprep.subr.bf16.mxu0 %v4019
        %4274 = vmatpush1.bf16.msra.mxu0 %v4018
        %4275 = vmatprep.subr.bf16.mxu0 %v4017
        %4276 = vmatpush1.bf16.msra.mxu0 %v4016
        %4277 = vmatprep.subr.bf16.mxu0 %v4015
        %4278 = vmatpush1.bf16.msra.mxu0 %v4014
        %4279 = vmatprep.subr.bf16.mxu0 %v4013
        %4280 = vmatpush1.bf16.msra.mxu0 %v4012
        %4281 = vmatprep.subr.bf16.mxu0 %v4011
        %4282 = vmatpush1.bf16.msra.mxu0 %v4010
        %4283 = vmatprep.subr.bf16.mxu0 %v4009
        %4284 = vmatpush1.bf16.msra.mxu0 %v4008
        %4285 = vmatprep.subr.bf16.mxu0 %v4007
        %4286 = vmatpush1.bf16.msra.mxu0 %v4006
        %4287 = vmatprep.subr.bf16.mxu0 %v4037
        %4288 = vmatpush2.bf16.msra.mxu0 %v4036
        %4289 = vmatprep.subr.bf16.mxu0 %v4035
        %4290 = vmatpush2.bf16.msra.mxu0 %v4034
        %4291 = vmatprep.subr.bf16.mxu0 %v4033
        %4292 = vmatpush2.bf16.msra.mxu0 %v4032
        %4293 = vmatprep.subr.bf16.mxu0 %v4031
        %4294 = vmatpush2.bf16.msra.mxu0 %v4030
        %4295 = vmatprep.subr.bf16.mxu0 %v4029
        %4296 = vmatpush2.bf16.msra.mxu0 %v4028
        %4297 = vmatprep.subr.bf16.mxu0 %v4027
        %4298 = vmatpush2.bf16.msra.mxu0 %v4026
        %4299 = vmatprep.subr.bf16.mxu0 %v4025
        %4300 = vmatpush2.bf16.msra.mxu0 %v4024
        %4301 = vmatprep.subr.bf16.mxu0 %v4023
        %4302 = vmatpush2.bf16.msra.mxu0 %v4022
        %4303 = vmatprep.mubr.bf16.mxu0 %v3445
        %4304 = vmatmul.mubr.bf16.gmra.mxu0 %v3444
        %v4305 = vpop.f32.mrf.mxu0
        %v4306 = vadd.f32 %v4265, %v4305
        %v4307 = vpop.f32.mrf.mxu0
        %v4308 = vadd.f32 %v4267, %v4307
        %v4309 = vpop.f32.mrf.mxu0
        %v4310 = vpop.f32.mrf.mxu0
        %4311 = vdwg.mxu0
        %4312 = vmatprep.subr.bf16.mxu0 %v4053
        %4313 = vmatpush1.bf16.msra.mxu0 %v4052
        %4314 = vmatprep.subr.bf16.mxu0 %v4051
        %4315 = vmatpush1.bf16.msra.mxu0 %v4050
        %4316 = vmatprep.subr.bf16.mxu0 %v4049
        %4317 = vmatpush1.bf16.msra.mxu0 %v4048
        %4318 = vmatprep.subr.bf16.mxu0 %v4047
        %4319 = vmatpush1.bf16.msra.mxu0 %v4046
        %4320 = vmatprep.subr.bf16.mxu0 %v4045
        %4321 = vmatpush1.bf16.msra.mxu0 %v4044
        %4322 = vmatprep.subr.bf16.mxu0 %v4043
        %4323 = vmatpush1.bf16.msra.mxu0 %v4042
        %4324 = vmatprep.subr.bf16.mxu0 %v4041
        %4325 = vmatpush1.bf16.msra.mxu0 %v4040
        %4326 = vmatprep.subr.bf16.mxu0 %v4039
        %4327 = vmatpush1.bf16.msra.mxu0 %v4038
        %4328 = vmatprep.subr.bf16.mxu0 %v4069
        %4329 = vmatpush2.bf16.msra.mxu0 %v4068
        %4330 = vmatprep.subr.bf16.mxu0 %v4067
        %4331 = vmatpush2.bf16.msra.mxu0 %v4066
        %4332 = vmatprep.subr.bf16.mxu0 %v4065
        %4333 = vmatpush2.bf16.msra.mxu0 %v4064
        %4334 = vmatprep.subr.bf16.mxu0 %v4063
        %4335 = vmatpush2.bf16.msra.mxu0 %v4062
        %4336 = vmatprep.subr.bf16.mxu0 %v4061
        %4337 = vmatpush2.bf16.msra.mxu0 %v4060
        %4338 = vmatprep.subr.bf16.mxu0 %v4059
        %4339 = vmatpush2.bf16.msra.mxu0 %v4058
        %4340 = vmatprep.subr.bf16.mxu0 %v4057
        %4341 = vmatpush2.bf16.msra.mxu0 %v4056
        %4342 = vmatprep.subr.bf16.mxu0 %v4055
        %4343 = vmatpush2.bf16.msra.mxu0 %v4054
        %4344 = vmatprep.mubr.bf16.mxu0 %v3447
        %4345 = vmatmul.mubr.bf16.gmra.mxu0 %v3446
        %v4346 = vpop.f32.mrf.mxu0
        %v4347 = vadd.f32 %v4306, %v4346
        %v4348 = vpop.f32.mrf.mxu0
        %v4349 = vadd.f32 %v4308, %v4348
        %v4350 = vpop.f32.mrf.mxu0
        %v4351 = vpop.f32.mrf.mxu0
        %4352 = vdwg.mxu0
        %4353 = vmatprep.subr.bf16.mxu0 %v4085
        %4354 = vmatpush1.bf16.msra.mxu0 %v4084
        %4355 = vmatprep.subr.bf16.mxu0 %v4083
        %4356 = vmatpush1.bf16.msra.mxu0 %v4082
        %4357 = vmatprep.subr.bf16.mxu0 %v4081
        %4358 = vmatpush1.bf16.msra.mxu0 %v4080
        %4359 = vmatprep.subr.bf16.mxu0 %v4079
        %4360 = vmatpush1.bf16.msra.mxu0 %v4078
        %4361 = vmatprep.subr.bf16.mxu0 %v4077
        %4362 = vmatpush1.bf16.msra.mxu0 %v4076
        %4363 = vmatprep.subr.bf16.mxu0 %v4075
        %4364 = vmatpush1.bf16.msra.mxu0 %v4074
        %4365 = vmatprep.subr.bf16.mxu0 %v4073
        %4366 = vmatpush1.bf16.msra.mxu0 %v4072
        %4367 = vmatprep.subr.bf16.mxu0 %v4071
        %4368 = vmatpush1.bf16.msra.mxu0 %v4070
        %4369 = vmatprep.subr.bf16.mxu0 %v4101
        %4370 = vmatpush2.bf16.msra.mxu0 %v4100
        %4371 = vmatprep.subr.bf16.mxu0 %v4099
        %4372 = vmatpush2.bf16.msra.mxu0 %v4098
        %4373 = vmatprep.subr.bf16.mxu0 %v4097
        %4374 = vmatpush2.bf16.msra.mxu0 %v4096
        %4375 = vmatprep.subr.bf16.mxu0 %v4095
        %4376 = vmatpush2.bf16.msra.mxu0 %v4094
        %4377 = vmatprep.subr.bf16.mxu0 %v4093
        %4378 = vmatpush2.bf16.msra.mxu0 %v4092
        %4379 = vmatprep.subr.bf16.mxu0 %v4091
        %4380 = vmatpush2.bf16.msra.mxu0 %v4090
        %4381 = vmatprep.subr.bf16.mxu0 %v4089
        %4382 = vmatpush2.bf16.msra.mxu0 %v4088
        %4383 = vmatprep.subr.bf16.mxu0 %v4087
        %4384 = vmatpush2.bf16.msra.mxu0 %v4086
        %4385 = vmatprep.mubr.bf16.mxu0 %v3449
        %4386 = vmatmul.mubr.bf16.gmra.mxu0 %v3448
        %v4387 = vpop.f32.mrf.mxu0
        %v4388 = vadd.f32 %v4347, %v4387
        %v4389 = vpop.f32.mrf.mxu0
        %v4390 = vadd.f32 %v4349, %v4389
        %v4391 = vpop.f32.mrf.mxu0
        %v4392 = vpop.f32.mrf.mxu0
        %4393 = vdwg.mxu0
        %v4394 = vtanh.pop %v4388
        %v4395 = vtanh.pop %v4390
        %4396 = vst [vmem:[%s378] sm:$0xff] %v4394
        %4397 = vst [vmem:[%s378 + $0x8] sm:$0xff] %v4395
        %s4398 = sand.u32 %s187, 1
        %s4399 = scalar_lea.sflag [#allocation4], %s4398
        %s4400 = sand.u32 %s187, 1
        %s4401 = smul.addr %s4400, 16
        %s4402 = scalar_lea.vmem [#allocation14], %s4401
        // Predicated region
        $region77: #{tpu_custom_call.1} parent=47 // pred_check
          %p4403 = pneg %p197
        $region78: #{tpu_custom_call.1} parent=47 // pred_check_branch
          %4405 = sbr.rel (%p4403) target = $region80
        $region79: #{tpu_custom_call.1} parent=47 // pred_region
          %s4407 = ssub.s32 256, 256
          %4408 = vsyncadd %s4399, %s4407
          %s4409 = smul.addr %s27, 2
          %s4410 = smul.addr %s4409, 128
          %s4411 = scalar_lea.hbm %s7, %s4410
          %s4413 = sshll.u32 %s4402, 4
          %s4414 = int_to_ptr.vmem [resolvable:$true] %s4413
          %4416 = dma.vmem_to_hbm [thread:$0]  %s4414, 256, %s4411, %s4399
        $region80: #{tpu_custom_call.1} parent=47 // pred_fallthru
          _
      $region48: #{tpu_custom_call.1} parent=5 // pred_fallthru
        _
      %p4417 = scmp.le.s32.totalorder 2, %s22
      // Predicated region
      $region81: #{tpu_custom_call.1} parent=5 // pred_check
        %p4418 = pneg %p4417
      $region82: #{tpu_custom_call.1} parent=5 // pred_check_branch
        %4420 = sbr.rel (%p4418) target = $region84
      $region83: #{tpu_custom_call.1} parent=5 // pred_region
        %s4421 = ssub.s32 %s22, 2
        // Predicated region
        $region85: #{tpu_custom_call.1} parent=83 // pred_check
          %p4422 = pneg %p203
        $region86: #{tpu_custom_call.1} parent=83 // pred_check_branch
          %4424 = sbr.rel (%p4422) target = $region88
        $region87: #{tpu_custom_call.1} parent=83 // pred_region
          %s4425 = sand.u32 %s188, 1
          %s4426 = scalar_lea.sflag [#allocation4], %s4425
          %s4427 = sand.u32 %s188, 1
          %s4428 = smul.addr %s4427, 16
          %s4429 = scalar_lea.vmem [#allocation14], %s4428
          %4430 = dma.done %s4426, 256
        $region88: #{tpu_custom_call.1} parent=83 // pred_fallthru
          _
      $region84: #{tpu_custom_call.1} parent=5 // pred_fallthru
        _
    $region6: #{tpu_custom_call.1} parent=1 // loop_footer
      %s26 = sadd.s32 1, %s22
    $region7: #{tpu_custom_call.1} parent=1 // loop_footer_branch
      %21 = sbr.rel target = $region3
    $region8: #{tpu_custom_call.1} parent=1 // loop_exit
      _
    %4431 = vsyncpa [#allocation3], 1
    %s4432 = scalar_lea.sflag [#allocation3], 1
    %4433 = vsyncpa %s4432, 1
    %4434 = vsyncpa [#allocation6], 1
    %4435 = vsyncpa [#allocation9], 1
    %4436 = vsyncpa [#allocation12], 1
    %4437 = vsyncpa [#allocation4], 1
    %s4438 = scalar_lea.sflag [#allocation4], 1
    %4439 = vsyncpa %s4438, 1

</llo_original>
